<compile_context>
chip_gen: v5e
topology: v5e:2x2
jax: 0.10.0
libtpu: 0.0.40
codegen_flags: <defaults>
</compile_context>

<pallas_src>
import functools

import jax
import jax.numpy as jnp
from jax import lax
from jax.experimental import pallas as pl
from jax.experimental.pallas import tpu as pltpu


def _round_up(x, m):
    return -(-x // m) * m


def _vq_kernel(x_ref, ec_ref, er_ref, esqh_ref, q_ref, sse_ref, *,
               n_chunks, chunk_dense, lane_groups, pad_dense, dist_dtype):
    """One grid step: quantize one lane-packed tile of latent rows.

    x_ref   : (tile_dense, L)  packed latents (L = lane_groups * D)
    ec_ref  : (r, L, Kp)       per-lane-group codebook (distance), dist_dtype, resident
    er_ref  : (r, Kp, L)       per-lane-group codebook (gather), storage dtype, resident
    esqh_ref: (1, Kp)          0.5*||e||^2, pad codes = huge, f32, resident
    q_ref   : (tile_dense, L)  packed quantized latents
    sse_ref : (1, 1, L)        per-lane partial sum of squared error for this tile
    """
    esqh = esqh_ref[...]                                      # (1, Kp) f32
    kp = esqh.shape[1]

    def quantize(xd):
        # xd: (rows_d, L) storage dtype -> (q f32 (rows_d, L), sse (1, L) f32)
        rows_d, width = xd.shape
        xc = xd.astype(dist_dtype)
        iota_k = lax.broadcasted_iota(jnp.int32, (rows_d, kp), 1)
        q_acc = jnp.zeros((rows_d, width), jnp.float32)
        for s in range(lane_groups):                          # static, <= 4
            # Distance ranking (bf16 operands, f32 accumulation on the MXU).
            xe = lax.dot_general(xc, ec_ref[s], (((1,), (0,)), ((), ())),
                                 preferred_element_type=jnp.float32)     # (rows_d, Kp)
            dist = esqh - xe
            # First-minimum one-hot (== torch.argmin tie-breaking) built from two
            # cheap lane reductions; avoids relying on argmin lowering.
            min_d = jnp.min(dist, axis=1, keepdims=True)                  # (rows_d, 1)
            first = jnp.min(jnp.where(dist <= min_d, iota_k, kp),
                            axis=1, keepdims=True)                        # (rows_d, 1)
            one_hot = (iota_k == first).astype(er_ref.dtype)              # (rows_d, Kp)
            # one_hot @ codebook in storage dtype: exact codebook rows land in this
            # lane group's columns, exact zeros elsewhere -> disjoint accumulate.
            q_acc = q_acc + lax.dot_general(one_hot, er_ref[s],
                                            (((1,), (0,)), ((), ())),
                                            preferred_element_type=jnp.float32)
        diff = q_acc - xd.astype(jnp.float32)
        return q_acc, jnp.sum(diff * diff, axis=0, keepdims=True)          # (1, L)

    if n_chunks == 1:
        q_all, sse = quantize(x_ref[...])
        q_ref[...] = q_all.astype(q_ref.dtype)
    else:
        # Chunked sweep over the tile: keeps the (rows, Kp) slabs small (vreg
        # pressure bounded) while the HBM block stays large.
        def body(j, acc):
            off = pl.multiple_of(j * chunk_dense, chunk_dense)
            q_c, row = quantize(x_ref[pl.ds(off, chunk_dense), :])
            q_ref[pl.ds(off, chunk_dense), :] = q_c.astype(q_ref.dtype)
            return acc + row

        sse = lax.fori_loop(0, n_chunks, body,
                            jnp.zeros((1, x_ref.shape[1]), jnp.float32),
                            unroll=n_chunks <= 8)

    sse_ref[0] = sse

    if pad_dense > 0:
        # Only the final tile holds zero-padded rows.  Their x is exactly 0, so
        # their SSE contribution equals sum(q^2) over those rows; subtract it
        # here instead of masking every tile.
        @pl.when(pl.program_id(0) == pl.num_programs(0) - 1)
        def _():
            tile_dense = q_ref.shape[0]
            qp = q_ref[pl.ds(tile_dense - pad_dense, pad_dense), :].astype(jnp.float32)
            sse_ref[0] = sse - jnp.sum(qp * qp, axis=0, keepdims=True)


def vector_quantizer_forward(latents, embedding, beta=0.25, *,
                             tile_n=2048, chunk_n=256,
                             dist_dtype=jnp.bfloat16,
                             vmem_budget_bytes=48 * 1024 * 1024):
    """Forward pass of the VQ-VAE VectorQuantizer.

    latents  : (..., D) channels-last latents (the PyTorch module views the last
               dim as the embedding dim).
    embedding: (K, D) codebook.
    Returns (quantized, vq_loss) with quantized = latents + sg(q - latents) and
    vq_loss = mse(q, latents) * (1 + beta), forward-identical to
    commitment_loss * beta + embedding_loss.
    """
    orig_shape = latents.shape
    K, D = embedding.shape
    assert orig_shape[-1] == D, "latents must be channels-last with last dim == D"
    flat = latents.reshape(-1, D)
    N = flat.shape[0]
    itemsize = jnp.dtype(latents.dtype).itemsize
    if dist_dtype is None:
        dist_dtype = embedding.dtype

    # --- lane packing factor: r consecutive rows share one 128-lane row -------
    r = 128 // D if (D <= 128 and 128 % D == 0) else 1
    if r > 1 and N % r != 0:
        r = 1                                   # fall back to the unpacked layout
    L = r * D

    # --- codebook prep (hoisted: one-time wrapper work, resident in kernel) ---
    Kp = max(128, _round_up(K, 128))
    e_pad = jnp.zeros((Kp, D), embedding.dtype).at[:K].set(embedding)
    e_sq_half = 0.5 * jnp.sum(e_pad.astype(jnp.float32) ** 2, axis=1)
    e_sq_half = jnp.where(jnp.arange(Kp) < K, e_sq_half, jnp.float32(1e30))[None, :]
    er_blocks = []
    for s in range(r):
        er_blocks.append(
            jnp.zeros((Kp, L), embedding.dtype).at[:, s * D:(s + 1) * D].set(e_pad))
    elane_r = jnp.stack(er_blocks, axis=0)                              # (r, Kp, L)
    elane_c = jnp.transpose(elane_r, (0, 2, 1)).astype(dist_dtype)      # (r, L, Kp)
    # TODO(synk): for K >= ~2048 add a K-tile loop (running min/one-hot carry)
    # so the resident lane-group codebooks and (rows, Kp) slabs stay inside
    # v7x's 64 MiB VMEM instead of growing O(K).

    # --- tile selection: VMEM-budgeted, prefer a divisor of N (no pad copy) ---
    fixed_bytes = 2 * (elane_c.size * jnp.dtype(dist_dtype).itemsize
                       + elane_r.size * jnp.dtype(embedding.dtype).itemsize
                       + Kp * 4) + (2 << 20)
    per_row_bytes = 2 * 2 * D * itemsize                 # x + q, double-buffered
    max_rows = max(8 * r, int((vmem_budget_bytes - fixed_bytes) // per_row_bytes))
    tile_cap = min(tile_n, max_rows)

    G = 8 * r
    if N <= tile_cap:
        tile, n_pad = N, N                               # single full-extent tile
    else:
        cap = max(G, (tile_cap // G) * G)
        tile = None
        t = cap
        while t >= max(G, cap // 4):
            if N % t == 0:                               # dividing tile -> no pad copy
                tile = t
                break
            t -= G
        if tile is None:
            tile = cap
            n_pad = _round_up(N, tile)
        else:
            n_pad = N
    num_tiles = n_pad // tile
    pad = n_pad - N
    tile_dense = tile // r
    n_dense = N // r
    n_pad_dense = n_pad // r
    pad_dense = pad // r

    # --- in-tile chunking (bounds vreg pressure of the (rows, Kp) slabs) ------
    if tile <= chunk_n or tile % G != 0:
        chunk = tile
    else:
        chunk = G
        c = (chunk_n // G) * G
        while c >= G:
            if tile % c == 0:
                chunk = c
                break
            c -= G
    n_chunks = tile // chunk
    chunk_dense = chunk // r

    # --- lane-dense input presentation (free reshape of contiguous HBM) -------
    x_dense = flat.reshape(n_dense, L)
    if pad > 0:
        # Only taken when N has no suitable divisor; costs one extra HBM pass.
        x_in = jnp.zeros((n_pad_dense, L), flat.dtype).at[:n_dense].set(x_dense)
    else:
        x_in = x_dense

    est_bytes = (fixed_bytes
                 + 2 * 2 * tile_dense * L * itemsize          # x + q blocks, dbl-buffered
                 + 4 * chunk_dense * Kp * 4                    # dist/one-hot slabs (rough)
                 + 4 * chunk_dense * L * 4
                 + 2 * L * 4)
    vmem_limit = int(min(56 * 1024 * 1024, max(32 * 1024 * 1024, est_bytes)))

    kernel = functools.partial(
        _vq_kernel, n_chunks=n_chunks, chunk_dense=chunk_dense,
        lane_groups=r, pad_dense=pad_dense, dist_dtype=dist_dtype)

    q_dense, sse = pl.pallas_call(
        kernel,
        out_shape=(
            jax.ShapeDtypeStruct((n_pad_dense, L), latents.dtype),
            jax.ShapeDtypeStruct((num_tiles, 1, L), jnp.float32),
        ),
        grid_spec=pltpu.PrefetchScalarGridSpec(
            num_scalar_prefetch=0,
            grid=(num_tiles,),
            in_specs=[
                pl.BlockSpec((tile_dense, L), lambda i: (i, 0)),   # packed latents
                # Resident codebook blocks (constant index_map -> DMA'd once).
                # TODO(synk): pipeline_mode=pl.Buffered(1) would halve their VMEM
                # footprint; left default-buffered for lowering safety (negligible
                # at small K).
                pl.BlockSpec((r, L, Kp), lambda i: (0, 0, 0)),
                pl.BlockSpec((r, Kp, L), lambda i: (0, 0, 0)),
                pl.BlockSpec((1, Kp), lambda i: (0, 0)),
            ],
            out_specs=[
                pl.BlockSpec((tile_dense, L), lambda i: (i, 0)),   # packed quantized
                pl.BlockSpec((1, 1, L), lambda i: (i, 0, 0)),      # per-tile SSE row
            ],
        ),
        compiler_params=pltpu.CompilerParams(
            dimension_semantics=("parallel",),   # no cross-step state: megacore-shardable
            vmem_limit_bytes=vmem_limit,
        ),
    )(x_in, elane_c, elane_r, e_sq_half)

    q = q_dense[:n_dense].reshape(orig_shape)
    mse = jnp.sum(sse) / jnp.float32(N * D)
    # Forward-equivalent to commitment_loss * beta + embedding_loss.
    # TODO(synk): training use needs a custom_vjp (beta -> encoder, 1 -> codebook,
    # straight-through estimator); only the forward pass is implemented here.
    vq_loss = (mse * (1.0 + beta)).astype(jnp.float32)

    # Straight-through estimator: value equals q, gradient path stays on latents.
    quantized = latents + lax.stop_gradient(q.astype(latents.dtype) - latents)
    return quantized, vq_loss


if __name__ == "__main__":
    key = jax.random.PRNGKey(0)
    k_lat, k_emb = jax.random.split(key)

    # Small, spec-consistent shapes: channels-last latents (B, H, W, D), codebook (K, D).
    B, H, W, D = 2, 16, 16, 32
    K = 128
    beta = 0.25

    latents = jax.random.normal(k_lat, (B, H, W, D), dtype=jnp.float32)
    # Matches nn.Embedding.weight.data.uniform_(-1/K, 1/K).
    embedding = jax.random.uniform(k_emb, (K, D), dtype=jnp.float32,
                                   minval=-1.0 / K, maxval=1.0 / K)

    quantized, vq_loss = vector_quantizer_forward(latents, embedding, beta=beta)
    jax.block_until_ready((quantized, vq_loss))

    # --- validation against a pure-JAX reference (tolerant of near-tie argmin
    # flips introduced by the bf16 distance matmul) ---------------------------
    flat = latents.reshape(-1, D)
    q = quantized.reshape(-1, D)          # forward value of the STE output == q
    # (1) every output row is (numerically) a codebook row
    row_gap = jnp.min(
        jnp.max(jnp.abs(q[:, None, :] - embedding[None, :, :]), axis=-1), axis=-1)
    assert float(jnp.max(row_gap)) < 1e-3, "output rows are not codebook rows"
    # (2) each chosen row is a (near-)optimal nearest neighbour
    dist_full = (jnp.sum(flat ** 2, axis=1, keepdims=True)
                 + jnp.sum(embedding ** 2, axis=1)[None, :]
                 - 2.0 * flat @ embedding.T)
    best = jnp.min(dist_full, axis=1)
    chosen = jnp.sum((q - flat) ** 2, axis=1)
    assert float(jnp.max(chosen - best)) < 5e-3, "non-optimal codebook assignment"
    # (3) loss consistency (against the kernel's own selection and the reference)
    loss_self = jnp.mean((q - flat) ** 2) * (1.0 + beta)
    assert abs(float(vq_loss) - float(loss_self)) < 1e-4, "loss/SSE mismatch"
    inds_ref = jnp.argmin(dist_full, axis=1)
    loss_ref = jnp.mean((embedding[inds_ref] - flat) ** 2) * (1.0 + beta)
    assert abs(float(vq_loss) - float(loss_ref)) < 1e-3, "loss far from reference"

    # Exercise the multi-tile grid path as well (expects the same assignments).
    q2, loss2 = vector_quantizer_forward(latents, embedding, beta=beta,
                                         tile_n=128, chunk_n=64)
    jax.block_until_ready((q2, loss2))
    chosen2 = jnp.sum((q2.reshape(-1, D) - flat) ** 2, axis=1)
    assert float(jnp.max(chosen2 - best)) < 5e-3, "multi-tile path: bad assignment"
    assert abs(float(loss2) - float(vq_loss)) < 1e-3, "multi-tile loss mismatch"

    print("KERNEL_OK")
</pallas_src>

<mosaic_0001>
module attributes {stable_mosaic.version = 11 : i64} {
  func.func @_vq_kernel(%arg0: i32, %arg1: memref<128x128xf32, #tpu.memory_space<vmem>>, %arg2: memref<4x128x128xbf16, #tpu.memory_space<vmem>>, %arg3: memref<4x128x128xf32, #tpu.memory_space<vmem>>, %arg4: memref<1x128xf32, #tpu.memory_space<vmem>>, %arg5: memref<128x128xf32, #tpu.memory_space<vmem>>, %arg6: memref<1x1x128xf32, #tpu.memory_space<vmem>>) attributes {dimension_semantics = [#tpu.dimension_semantics<parallel>], iteration_bounds = array<i64: 1>, scalar_prefetch = 0 : i64, scratch_operands = 0 : i64, tpu.core_type = #tpu.core_type<tc>, window_params = [{transform_indices = @transform_0, window_bounds = array<i64: 128, 128>}, {pipeline_mode = #tpu.pipeline_mode<synchronous>, transform_indices = @transform_1, window_bounds = array<i64: 4, 128, 128>}, {pipeline_mode = #tpu.pipeline_mode<synchronous>, transform_indices = @transform_2, window_bounds = array<i64: 4, 128, 128>}, {pipeline_mode = #tpu.pipeline_mode<synchronous>, transform_indices = @transform_3, window_bounds = array<i64: 1, 128>}, {transform_indices = @transform_4, window_bounds = array<i64: 128, 128>}, {transform_indices = @transform_5, window_bounds = array<i64: 1, 1, 128>}]} {
    %c0 = arith.constant 0 : index
    %c0_0 = arith.constant 0 : index
    %0 = vector.load %arg4[%c0, %c0_0] : memref<1x128xf32, #tpu.memory_space<vmem>>, vector<1x128xf32>
    %cst = arith.constant 0.000000e+00 : f32
    %1 = vector.broadcast %cst : f32 to vector<1x128xf32>
    %c0_i32 = arith.constant 0 : i32
    %c64_i32 = arith.constant 64 : i32
    %2 = arith.muli %c0_i32, %c64_i32 : i32
    %3 = tpu.assume_multiple %2, 64 : i32
    %4 = arith.index_cast %3 : i32 to index
    %c0_1 = arith.constant 0 : index
    %5 = vector.load %arg1[%4, %c0_1] : memref<128x128xf32, #tpu.memory_space<vmem>>, vector<64x128xf32>
    %6 = arith.truncf %5 : vector<64x128xf32> to vector<64x128xbf16>
    %7 = tpu.iota {dimensions = array<i32: 1>} : vector<64x128xi32>
    %cst_2 = arith.constant 0.000000e+00 : f32
    %8 = vector.broadcast %cst_2 : f32 to vector<64x128xf32>
    %c0_3 = arith.constant 0 : index
    %c0_4 = arith.constant 0 : index
    %c0_5 = arith.constant 0 : index
    %9 = vector.load %arg2[%c0_3, %c0_4, %c0_5] : memref<4x128x128xbf16, #tpu.memory_space<vmem>>, vector<1x128x128xbf16>
    %10 = vector.shape_cast %9 : vector<1x128x128xbf16> to vector<128x128xbf16>
    %cst_6 = arith.constant dense<0.000000e+00> : vector<64x128xf32>
    %11 = tpu.matmul %6, %10, %cst_6 {dimension_numbers = #tpu.dot_dimension_numbers<[1], [0], [0], [1], [0, 0, 1, 1], [], []>} : vector<64x128xbf16>, vector<128x128xbf16>, vector<64x128xf32> -> vector<64x128xf32>
    %12 = vector.broadcast %0 : vector<1x128xf32> to vector<64x128xf32>
    %13 = arith.subf %12, %11 : vector<64x128xf32>
    %cst_7 = arith.constant dense<0x7F800000> : vector<64xf32>
    %14 = vector.multi_reduction <minimumf>, %13, %cst_7 [1] : vector<64x128xf32> to vector<64xf32>
    %15 = vector.shape_cast %14 : vector<64xf32> to vector<64x1xf32>
    %16 = vector.broadcast %15 : vector<64x1xf32> to vector<64x128xf32>
    %17 = arith.cmpf ole, %13, %16 : vector<64x128xf32>
    %c128_i32 = arith.constant 128 : i32
    %18 = vector.broadcast %c128_i32 : i32 to vector<64x128xi32>
    %19 = arith.select %17, %7, %18 : vector<64x128xi1>, vector<64x128xi32>
    %cst_8 = arith.constant dense<2147483647> : vector<64xi32>
    %20 = vector.multi_reduction <minsi>, %19, %cst_8 [1] : vector<64x128xi32> to vector<64xi32>
    %21 = vector.shape_cast %20 : vector<64xi32> to vector<64x1xi32>
    %22 = vector.broadcast %21 : vector<64x1xi32> to vector<64x128xi32>
    %23 = arith.cmpi eq, %7, %22 : vector<64x128xi32>
    %24 = arith.extui %23 : vector<64x128xi1> to vector<64x128xi32>
    %25 = arith.sitofp %24 : vector<64x128xi32> to vector<64x128xf32>
    %c0_9 = arith.constant 0 : index
    %c0_10 = arith.constant 0 : index
    %c0_11 = arith.constant 0 : index
    %26 = vector.load %arg3[%c0_9, %c0_10, %c0_11] : memref<4x128x128xf32, #tpu.memory_space<vmem>>, vector<1x128x128xf32>
    %27 = vector.shape_cast %26 : vector<1x128x128xf32> to vector<128x128xf32>
    %cst_12 = arith.constant dense<0.000000e+00> : vector<64x128xf32>
    %28 = tpu.matmul %25, %27, %cst_12 {dimension_numbers = #tpu.dot_dimension_numbers<[1], [0], [0], [1], [0, 0, 1, 1], [], []>} : vector<64x128xf32>, vector<128x128xf32>, vector<64x128xf32> -> vector<64x128xf32>
    %29 = arith.addf %8, %28 : vector<64x128xf32>
    %c1 = arith.constant 1 : index
    %c0_13 = arith.constant 0 : index
    %c0_14 = arith.constant 0 : index
    %30 = vector.load %arg2[%c1, %c0_13, %c0_14] : memref<4x128x128xbf16, #tpu.memory_space<vmem>>, vector<1x128x128xbf16>
    %31 = vector.shape_cast %30 : vector<1x128x128xbf16> to vector<128x128xbf16>
    %cst_15 = arith.constant dense<0.000000e+00> : vector<64x128xf32>
    %32 = tpu.matmul %6, %31, %cst_15 {dimension_numbers = #tpu.dot_dimension_numbers<[1], [0], [0], [1], [0, 0, 1, 1], [], []>} : vector<64x128xbf16>, vector<128x128xbf16>, vector<64x128xf32> -> vector<64x128xf32>
    %33 = vector.broadcast %0 : vector<1x128xf32> to vector<64x128xf32>
    %34 = arith.subf %33, %32 : vector<64x128xf32>
    %cst_16 = arith.constant dense<0x7F800000> : vector<64xf32>
    %35 = vector.multi_reduction <minimumf>, %34, %cst_16 [1] : vector<64x128xf32> to vector<64xf32>
    %36 = vector.shape_cast %35 : vector<64xf32> to vector<64x1xf32>
    %37 = vector.broadcast %36 : vector<64x1xf32> to vector<64x128xf32>
    %38 = arith.cmpf ole, %34, %37 : vector<64x128xf32>
    %c128_i32_17 = arith.constant 128 : i32
    %39 = vector.broadcast %c128_i32_17 : i32 to vector<64x128xi32>
    %40 = arith.select %38, %7, %39 : vector<64x128xi1>, vector<64x128xi32>
    %cst_18 = arith.constant dense<2147483647> : vector<64xi32>
    %41 = vector.multi_reduction <minsi>, %40, %cst_18 [1] : vector<64x128xi32> to vector<64xi32>
    %42 = vector.shape_cast %41 : vector<64xi32> to vector<64x1xi32>
    %43 = vector.broadcast %42 : vector<64x1xi32> to vector<64x128xi32>
    %44 = arith.cmpi eq, %7, %43 : vector<64x128xi32>
    %45 = arith.extui %44 : vector<64x128xi1> to vector<64x128xi32>
    %46 = arith.sitofp %45 : vector<64x128xi32> to vector<64x128xf32>
    %c1_19 = arith.constant 1 : index
    %c0_20 = arith.constant 0 : index
    %c0_21 = arith.constant 0 : index
    %47 = vector.load %arg3[%c1_19, %c0_20, %c0_21] : memref<4x128x128xf32, #tpu.memory_space<vmem>>, vector<1x128x128xf32>
    %48 = vector.shape_cast %47 : vector<1x128x128xf32> to vector<128x128xf32>
    %cst_22 = arith.constant dense<0.000000e+00> : vector<64x128xf32>
    %49 = tpu.matmul %46, %48, %cst_22 {dimension_numbers = #tpu.dot_dimension_numbers<[1], [0], [0], [1], [0, 0, 1, 1], [], []>} : vector<64x128xf32>, vector<128x128xf32>, vector<64x128xf32> -> vector<64x128xf32>
    %50 = arith.addf %29, %49 : vector<64x128xf32>
    %c2 = arith.constant 2 : index
    %c0_23 = arith.constant 0 : index
    %c0_24 = arith.constant 0 : index
    %51 = vector.load %arg2[%c2, %c0_23, %c0_24] : memref<4x128x128xbf16, #tpu.memory_space<vmem>>, vector<1x128x128xbf16>
    %52 = vector.shape_cast %51 : vector<1x128x128xbf16> to vector<128x128xbf16>
    %cst_25 = arith.constant dense<0.000000e+00> : vector<64x128xf32>
    %53 = tpu.matmul %6, %52, %cst_25 {dimension_numbers = #tpu.dot_dimension_numbers<[1], [0], [0], [1], [0, 0, 1, 1], [], []>} : vector<64x128xbf16>, vector<128x128xbf16>, vector<64x128xf32> -> vector<64x128xf32>
    %54 = vector.broadcast %0 : vector<1x128xf32> to vector<64x128xf32>
    %55 = arith.subf %54, %53 : vector<64x128xf32>
    %cst_26 = arith.constant dense<0x7F800000> : vector<64xf32>
    %56 = vector.multi_reduction <minimumf>, %55, %cst_26 [1] : vector<64x128xf32> to vector<64xf32>
    %57 = vector.shape_cast %56 : vector<64xf32> to vector<64x1xf32>
    %58 = vector.broadcast %57 : vector<64x1xf32> to vector<64x128xf32>
    %59 = arith.cmpf ole, %55, %58 : vector<64x128xf32>
    %c128_i32_27 = arith.constant 128 : i32
    %60 = vector.broadcast %c128_i32_27 : i32 to vector<64x128xi32>
    %61 = arith.select %59, %7, %60 : vector<64x128xi1>, vector<64x128xi32>
    %cst_28 = arith.constant dense<2147483647> : vector<64xi32>
    %62 = vector.multi_reduction <minsi>, %61, %cst_28 [1] : vector<64x128xi32> to vector<64xi32>
    %63 = vector.shape_cast %62 : vector<64xi32> to vector<64x1xi32>
    %64 = vector.broadcast %63 : vector<64x1xi32> to vector<64x128xi32>
    %65 = arith.cmpi eq, %7, %64 : vector<64x128xi32>
    %66 = arith.extui %65 : vector<64x128xi1> to vector<64x128xi32>
    %67 = arith.sitofp %66 : vector<64x128xi32> to vector<64x128xf32>
    %c2_29 = arith.constant 2 : index
    %c0_30 = arith.constant 0 : index
    %c0_31 = arith.constant 0 : index
    %68 = vector.load %arg3[%c2_29, %c0_30, %c0_31] : memref<4x128x128xf32, #tpu.memory_space<vmem>>, vector<1x128x128xf32>
    %69 = vector.shape_cast %68 : vector<1x128x128xf32> to vector<128x128xf32>
    %cst_32 = arith.constant dense<0.000000e+00> : vector<64x128xf32>
    %70 = tpu.matmul %67, %69, %cst_32 {dimension_numbers = #tpu.dot_dimension_numbers<[1], [0], [0], [1], [0, 0, 1, 1], [], []>} : vector<64x128xf32>, vector<128x128xf32>, vector<64x128xf32> -> vector<64x128xf32>
    %71 = arith.addf %50, %70 : vector<64x128xf32>
    %c3 = arith.constant 3 : index
    %c0_33 = arith.constant 0 : index
    %c0_34 = arith.constant 0 : index
    %72 = vector.load %arg2[%c3, %c0_33, %c0_34] : memref<4x128x128xbf16, #tpu.memory_space<vmem>>, vector<1x128x128xbf16>
    %73 = vector.shape_cast %72 : vector<1x128x128xbf16> to vector<128x128xbf16>
    %cst_35 = arith.constant dense<0.000000e+00> : vector<64x128xf32>
    %74 = tpu.matmul %6, %73, %cst_35 {dimension_numbers = #tpu.dot_dimension_numbers<[1], [0], [0], [1], [0, 0, 1, 1], [], []>} : vector<64x128xbf16>, vector<128x128xbf16>, vector<64x128xf32> -> vector<64x128xf32>
    %75 = vector.broadcast %0 : vector<1x128xf32> to vector<64x128xf32>
    %76 = arith.subf %75, %74 : vector<64x128xf32>
    %cst_36 = arith.constant dense<0x7F800000> : vector<64xf32>
    %77 = vector.multi_reduction <minimumf>, %76, %cst_36 [1] : vector<64x128xf32> to vector<64xf32>
    %78 = vector.shape_cast %77 : vector<64xf32> to vector<64x1xf32>
    %79 = vector.broadcast %78 : vector<64x1xf32> to vector<64x128xf32>
    %80 = arith.cmpf ole, %76, %79 : vector<64x128xf32>
    %c128_i32_37 = arith.constant 128 : i32
    %81 = vector.broadcast %c128_i32_37 : i32 to vector<64x128xi32>
    %82 = arith.select %80, %7, %81 : vector<64x128xi1>, vector<64x128xi32>
    %cst_38 = arith.constant dense<2147483647> : vector<64xi32>
    %83 = vector.multi_reduction <minsi>, %82, %cst_38 [1] : vector<64x128xi32> to vector<64xi32>
    %84 = vector.shape_cast %83 : vector<64xi32> to vector<64x1xi32>
    %85 = vector.broadcast %84 : vector<64x1xi32> to vector<64x128xi32>
    %86 = arith.cmpi eq, %7, %85 : vector<64x128xi32>
    %87 = arith.extui %86 : vector<64x128xi1> to vector<64x128xi32>
    %88 = arith.sitofp %87 : vector<64x128xi32> to vector<64x128xf32>
    %c3_39 = arith.constant 3 : index
    %c0_40 = arith.constant 0 : index
    %c0_41 = arith.constant 0 : index
    %89 = vector.load %arg3[%c3_39, %c0_40, %c0_41] : memref<4x128x128xf32, #tpu.memory_space<vmem>>, vector<1x128x128xf32>
    %90 = vector.shape_cast %89 : vector<1x128x128xf32> to vector<128x128xf32>
    %cst_42 = arith.constant dense<0.000000e+00> : vector<64x128xf32>
    %91 = tpu.matmul %88, %90, %cst_42 {dimension_numbers = #tpu.dot_dimension_numbers<[1], [0], [0], [1], [0, 0, 1, 1], [], []>} : vector<64x128xf32>, vector<128x128xf32>, vector<64x128xf32> -> vector<64x128xf32>
    %92 = arith.addf %71, %91 : vector<64x128xf32>
    %93 = arith.subf %92, %5 : vector<64x128xf32>
    %94 = arith.mulf %93, %93 : vector<64x128xf32>
    %cst_43 = arith.constant dense<0.000000e+00> : vector<128xf32>
    %95 = vector.multi_reduction <add>, %94, %cst_43 [0] : vector<64x128xf32> to vector<128xf32>
    %96 = vector.shape_cast %95 : vector<128xf32> to vector<1x128xf32>
    %97 = arith.index_cast %3 : i32 to index
    %c0_44 = arith.constant 0 : index
    %98 = vector.load %arg5[%97, %c0_44] : memref<128x128xf32, #tpu.memory_space<vmem>>, vector<64x128xf32>
    tpu.vector_store %arg5[%97, %c0_44], %92 {strides = array<i32>} : memref<128x128xf32, #tpu.memory_space<vmem>>, vector<64x128xf32>,
    %99 = arith.addf %1, %96 : vector<1x128xf32>
    %c1_i32 = arith.constant 1 : i32
    %c64_i32_45 = arith.constant 64 : i32
    %100 = arith.muli %c1_i32, %c64_i32_45 : i32
    %101 = tpu.assume_multiple %100, 64 : i32
    %102 = arith.index_cast %101 : i32 to index
    %c0_46 = arith.constant 0 : index
    %103 = vector.load %arg1[%102, %c0_46] : memref<128x128xf32, #tpu.memory_space<vmem>>, vector<64x128xf32>
    %104 = arith.truncf %103 : vector<64x128xf32> to vector<64x128xbf16>
    %105 = tpu.iota {dimensions = array<i32: 1>} : vector<64x128xi32>
    %cst_47 = arith.constant 0.000000e+00 : f32
    %106 = vector.broadcast %cst_47 : f32 to vector<64x128xf32>
    %c0_48 = arith.constant 0 : index
    %c0_49 = arith.constant 0 : index
    %c0_50 = arith.constant 0 : index
    %107 = vector.load %arg2[%c0_48, %c0_49, %c0_50] : memref<4x128x128xbf16, #tpu.memory_space<vmem>>, vector<1x128x128xbf16>
    %108 = vector.shape_cast %107 : vector<1x128x128xbf16> to vector<128x128xbf16>
    %cst_51 = arith.constant dense<0.000000e+00> : vector<64x128xf32>
    %109 = tpu.matmul %104, %108, %cst_51 {dimension_numbers = #tpu.dot_dimension_numbers<[1], [0], [0], [1], [0, 0, 1, 1], [], []>} : vector<64x128xbf16>, vector<128x128xbf16>, vector<64x128xf32> -> vector<64x128xf32>
    %110 = vector.broadcast %0 : vector<1x128xf32> to vector<64x128xf32>
    %111 = arith.subf %110, %109 : vector<64x128xf32>
    %cst_52 = arith.constant dense<0x7F800000> : vector<64xf32>
    %112 = vector.multi_reduction <minimumf>, %111, %cst_52 [1] : vector<64x128xf32> to vector<64xf32>
    %113 = vector.shape_cast %112 : vector<64xf32> to vector<64x1xf32>
    %114 = vector.broadcast %113 : vector<64x1xf32> to vector<64x128xf32>
    %115 = arith.cmpf ole, %111, %114 : vector<64x128xf32>
    %c128_i32_53 = arith.constant 128 : i32
    %116 = vector.broadcast %c128_i32_53 : i32 to vector<64x128xi32>
    %117 = arith.select %115, %105, %116 : vector<64x128xi1>, vector<64x128xi32>
    %cst_54 = arith.constant dense<2147483647> : vector<64xi32>
    %118 = vector.multi_reduction <minsi>, %117, %cst_54 [1] : vector<64x128xi32> to vector<64xi32>
    %119 = vector.shape_cast %118 : vector<64xi32> to vector<64x1xi32>
    %120 = vector.broadcast %119 : vector<64x1xi32> to vector<64x128xi32>
    %121 = arith.cmpi eq, %105, %120 : vector<64x128xi32>
    %122 = arith.extui %121 : vector<64x128xi1> to vector<64x128xi32>
    %123 = arith.sitofp %122 : vector<64x128xi32> to vector<64x128xf32>
    %c0_55 = arith.constant 0 : index
    %c0_56 = arith.constant 0 : index
    %c0_57 = arith.constant 0 : index
    %124 = vector.load %arg3[%c0_55, %c0_56, %c0_57] : memref<4x128x128xf32, #tpu.memory_space<vmem>>, vector<1x128x128xf32>
    %125 = vector.shape_cast %124 : vector<1x128x128xf32> to vector<128x128xf32>
    %cst_58 = arith.constant dense<0.000000e+00> : vector<64x128xf32>
    %126 = tpu.matmul %123, %125, %cst_58 {dimension_numbers = #tpu.dot_dimension_numbers<[1], [0], [0], [1], [0, 0, 1, 1], [], []>} : vector<64x128xf32>, vector<128x128xf32>, vector<64x128xf32> -> vector<64x128xf32>
    %127 = arith.addf %106, %126 : vector<64x128xf32>
    %c1_59 = arith.constant 1 : index
    %c0_60 = arith.constant 0 : index
    %c0_61 = arith.constant 0 : index
    %128 = vector.load %arg2[%c1_59, %c0_60, %c0_61] : memref<4x128x128xbf16, #tpu.memory_space<vmem>>, vector<1x128x128xbf16>
    %129 = vector.shape_cast %128 : vector<1x128x128xbf16> to vector<128x128xbf16>
    %cst_62 = arith.constant dense<0.000000e+00> : vector<64x128xf32>
    %130 = tpu.matmul %104, %129, %cst_62 {dimension_numbers = #tpu.dot_dimension_numbers<[1], [0], [0], [1], [0, 0, 1, 1], [], []>} : vector<64x128xbf16>, vector<128x128xbf16>, vector<64x128xf32> -> vector<64x128xf32>
    %131 = vector.broadcast %0 : vector<1x128xf32> to vector<64x128xf32>
    %132 = arith.subf %131, %130 : vector<64x128xf32>
    %cst_63 = arith.constant dense<0x7F800000> : vector<64xf32>
    %133 = vector.multi_reduction <minimumf>, %132, %cst_63 [1] : vector<64x128xf32> to vector<64xf32>
    %134 = vector.shape_cast %133 : vector<64xf32> to vector<64x1xf32>
    %135 = vector.broadcast %134 : vector<64x1xf32> to vector<64x128xf32>
    %136 = arith.cmpf ole, %132, %135 : vector<64x128xf32>
    %c128_i32_64 = arith.constant 128 : i32
    %137 = vector.broadcast %c128_i32_64 : i32 to vector<64x128xi32>
    %138 = arith.select %136, %105, %137 : vector<64x128xi1>, vector<64x128xi32>
    %cst_65 = arith.constant dense<2147483647> : vector<64xi32>
    %139 = vector.multi_reduction <minsi>, %138, %cst_65 [1] : vector<64x128xi32> to vector<64xi32>
    %140 = vector.shape_cast %139 : vector<64xi32> to vector<64x1xi32>
    %141 = vector.broadcast %140 : vector<64x1xi32> to vector<64x128xi32>
    %142 = arith.cmpi eq, %105, %141 : vector<64x128xi32>
    %143 = arith.extui %142 : vector<64x128xi1> to vector<64x128xi32>
    %144 = arith.sitofp %143 : vector<64x128xi32> to vector<64x128xf32>
    %c1_66 = arith.constant 1 : index
    %c0_67 = arith.constant 0 : index
    %c0_68 = arith.constant 0 : index
    %145 = vector.load %arg3[%c1_66, %c0_67, %c0_68] : memref<4x128x128xf32, #tpu.memory_space<vmem>>, vector<1x128x128xf32>
    %146 = vector.shape_cast %145 : vector<1x128x128xf32> to vector<128x128xf32>
    %cst_69 = arith.constant dense<0.000000e+00> : vector<64x128xf32>
    %147 = tpu.matmul %144, %146, %cst_69 {dimension_numbers = #tpu.dot_dimension_numbers<[1], [0], [0], [1], [0, 0, 1, 1], [], []>} : vector<64x128xf32>, vector<128x128xf32>, vector<64x128xf32> -> vector<64x128xf32>
    %148 = arith.addf %127, %147 : vector<64x128xf32>
    %c2_70 = arith.constant 2 : index
    %c0_71 = arith.constant 0 : index
    %c0_72 = arith.constant 0 : index
    %149 = vector.load %arg2[%c2_70, %c0_71, %c0_72] : memref<4x128x128xbf16, #tpu.memory_space<vmem>>, vector<1x128x128xbf16>
    %150 = vector.shape_cast %149 : vector<1x128x128xbf16> to vector<128x128xbf16>
    %cst_73 = arith.constant dense<0.000000e+00> : vector<64x128xf32>
    %151 = tpu.matmul %104, %150, %cst_73 {dimension_numbers = #tpu.dot_dimension_numbers<[1], [0], [0], [1], [0, 0, 1, 1], [], []>} : vector<64x128xbf16>, vector<128x128xbf16>, vector<64x128xf32> -> vector<64x128xf32>
    %152 = vector.broadcast %0 : vector<1x128xf32> to vector<64x128xf32>
    %153 = arith.subf %152, %151 : vector<64x128xf32>
    %cst_74 = arith.constant dense<0x7F800000> : vector<64xf32>
    %154 = vector.multi_reduction <minimumf>, %153, %cst_74 [1] : vector<64x128xf32> to vector<64xf32>
    %155 = vector.shape_cast %154 : vector<64xf32> to vector<64x1xf32>
    %156 = vector.broadcast %155 : vector<64x1xf32> to vector<64x128xf32>
    %157 = arith.cmpf ole, %153, %156 : vector<64x128xf32>
    %c128_i32_75 = arith.constant 128 : i32
    %158 = vector.broadcast %c128_i32_75 : i32 to vector<64x128xi32>
    %159 = arith.select %157, %105, %158 : vector<64x128xi1>, vector<64x128xi32>
    %cst_76 = arith.constant dense<2147483647> : vector<64xi32>
    %160 = vector.multi_reduction <minsi>, %159, %cst_76 [1] : vector<64x128xi32> to vector<64xi32>
    %161 = vector.shape_cast %160 : vector<64xi32> to vector<64x1xi32>
    %162 = vector.broadcast %161 : vector<64x1xi32> to vector<64x128xi32>
    %163 = arith.cmpi eq, %105, %162 : vector<64x128xi32>
    %164 = arith.extui %163 : vector<64x128xi1> to vector<64x128xi32>
    %165 = arith.sitofp %164 : vector<64x128xi32> to vector<64x128xf32>
    %c2_77 = arith.constant 2 : index
    %c0_78 = arith.constant 0 : index
    %c0_79 = arith.constant 0 : index
    %166 = vector.load %arg3[%c2_77, %c0_78, %c0_79] : memref<4x128x128xf32, #tpu.memory_space<vmem>>, vector<1x128x128xf32>
    %167 = vector.shape_cast %166 : vector<1x128x128xf32> to vector<128x128xf32>
    %cst_80 = arith.constant dense<0.000000e+00> : vector<64x128xf32>
    %168 = tpu.matmul %165, %167, %cst_80 {dimension_numbers = #tpu.dot_dimension_numbers<[1], [0], [0], [1], [0, 0, 1, 1], [], []>} : vector<64x128xf32>, vector<128x128xf32>, vector<64x128xf32> -> vector<64x128xf32>
    %169 = arith.addf %148, %168 : vector<64x128xf32>
    %c3_81 = arith.constant 3 : index
    %c0_82 = arith.constant 0 : index
    %c0_83 = arith.constant 0 : index
    %170 = vector.load %arg2[%c3_81, %c0_82, %c0_83] : memref<4x128x128xbf16, #tpu.memory_space<vmem>>, vector<1x128x128xbf16>
    %171 = vector.shape_cast %170 : vector<1x128x128xbf16> to vector<128x128xbf16>
    %cst_84 = arith.constant dense<0.000000e+00> : vector<64x128xf32>
    %172 = tpu.matmul %104, %171, %cst_84 {dimension_numbers = #tpu.dot_dimension_numbers<[1], [0], [0], [1], [0, 0, 1, 1], [], []>} : vector<64x128xbf16>, vector<128x128xbf16>, vector<64x128xf32> -> vector<64x128xf32>
    %173 = vector.broadcast %0 : vector<1x128xf32> to vector<64x128xf32>
    %174 = arith.subf %173, %172 : vector<64x128xf32>
    %cst_85 = arith.constant dense<0x7F800000> : vector<64xf32>
    %175 = vector.multi_reduction <minimumf>, %174, %cst_85 [1] : vector<64x128xf32> to vector<64xf32>
    %176 = vector.shape_cast %175 : vector<64xf32> to vector<64x1xf32>
    %177 = vector.broadcast %176 : vector<64x1xf32> to vector<64x128xf32>
    %178 = arith.cmpf ole, %174, %177 : vector<64x128xf32>
    %c128_i32_86 = arith.constant 128 : i32
    %179 = vector.broadcast %c128_i32_86 : i32 to vector<64x128xi32>
    %180 = arith.select %178, %105, %179 : vector<64x128xi1>, vector<64x128xi32>
    %cst_87 = arith.constant dense<2147483647> : vector<64xi32>
    %181 = vector.multi_reduction <minsi>, %180, %cst_87 [1] : vector<64x128xi32> to vector<64xi32>
    %182 = vector.shape_cast %181 : vector<64xi32> to vector<64x1xi32>
    %183 = vector.broadcast %182 : vector<64x1xi32> to vector<64x128xi32>
    %184 = arith.cmpi eq, %105, %183 : vector<64x128xi32>
    %185 = arith.extui %184 : vector<64x128xi1> to vector<64x128xi32>
    %186 = arith.sitofp %185 : vector<64x128xi32> to vector<64x128xf32>
    %c3_88 = arith.constant 3 : index
    %c0_89 = arith.constant 0 : index
    %c0_90 = arith.constant 0 : index
    %187 = vector.load %arg3[%c3_88, %c0_89, %c0_90] : memref<4x128x128xf32, #tpu.memory_space<vmem>>, vector<1x128x128xf32>
    %188 = vector.shape_cast %187 : vector<1x128x128xf32> to vector<128x128xf32>
    %cst_91 = arith.constant dense<0.000000e+00> : vector<64x128xf32>
    %189 = tpu.matmul %186, %188, %cst_91 {dimension_numbers = #tpu.dot_dimension_numbers<[1], [0], [0], [1], [0, 0, 1, 1], [], []>} : vector<64x128xf32>, vector<128x128xf32>, vector<64x128xf32> -> vector<64x128xf32>
    %190 = arith.addf %169, %189 : vector<64x128xf32>
    %191 = arith.subf %190, %103 : vector<64x128xf32>
    %192 = arith.mulf %191, %191 : vector<64x128xf32>
    %cst_92 = arith.constant dense<0.000000e+00> : vector<128xf32>
    %193 = vector.multi_reduction <add>, %192, %cst_92 [0] : vector<64x128xf32> to vector<128xf32>
    %194 = vector.shape_cast %193 : vector<128xf32> to vector<1x128xf32>
    %195 = arith.index_cast %101 : i32 to index
    %c0_93 = arith.constant 0 : index
    %196 = vector.load %arg5[%195, %c0_93] : memref<128x128xf32, #tpu.memory_space<vmem>>, vector<64x128xf32>
    tpu.vector_store %arg5[%195, %c0_93], %190 {strides = array<i32>} : memref<128x128xf32, #tpu.memory_space<vmem>>, vector<64x128xf32>,
    %197 = arith.addf %99, %194 : vector<1x128xf32>
    %c2_i32 = arith.constant 2 : i32
    %c0_94 = arith.constant 0 : index
    %c0_95 = arith.constant 0 : index
    %c0_96 = arith.constant 0 : index
    %198 = vector.load %arg6[%c0_94, %c0_95, %c0_96] : memref<1x1x128xf32, #tpu.memory_space<vmem>>, vector<1x1x128xf32>
    %199 = vector.shape_cast %198 : vector<1x1x128xf32> to vector<1x128xf32>
    %200 = vector.shape_cast %197 : vector<1x128xf32> to vector<1x1x128xf32>
    tpu.vector_store %arg6[%c0_94, %c0_95, %c0_96], %200 {strides = array<i32>} : memref<1x1x128xf32, #tpu.memory_space<vmem>>, vector<1x1x128xf32>,
    return
  }
  func.func @transform_0(%arg0: i32) -> (i32, i32) {
    %c0_i32 = arith.constant 0 : i32
    %c0_i32_0 = arith.constant 0 : i32
    return %arg0, %c0_i32 : i32, i32
  }
  func.func @transform_1(%arg0: i32) -> (i32, i32, i32) {
    %c0_i32 = arith.constant 0 : i32
    %c0_i32_0 = arith.constant 0 : i32
    %c0_i32_1 = arith.constant 0 : i32
    %c0_i32_2 = arith.constant 0 : i32
    return %c0_i32, %c0_i32_0, %c0_i32_1 : i32, i32, i32
  }
  func.func @transform_2(%arg0: i32) -> (i32, i32, i32) {
    %c0_i32 = arith.constant 0 : i32
    %c0_i32_0 = arith.constant 0 : i32
    %c0_i32_1 = arith.constant 0 : i32
    %c0_i32_2 = arith.constant 0 : i32
    return %c0_i32, %c0_i32_0, %c0_i32_1 : i32, i32, i32
  }
  func.func @transform_3(%arg0: i32) -> (i32, i32) {
    %c0_i32 = arith.constant 0 : i32
    %c0_i32_0 = arith.constant 0 : i32
    %c0_i32_1 = arith.constant 0 : i32
    return %c0_i32, %c0_i32_0 : i32, i32
  }
  func.func @transform_4(%arg0: i32) -> (i32, i32) {
    %c0_i32 = arith.constant 0 : i32
    %c0_i32_0 = arith.constant 0 : i32
    return %arg0, %c0_i32 : i32, i32
  }
  func.func @transform_5(%arg0: i32) -> (i32, i32, i32) {
    %c0_i32 = arith.constant 0 : i32
    %c0_i32_0 = arith.constant 0 : i32
    %c0_i32_1 = arith.constant 0 : i32
    return %arg0, %c0_i32, %c0_i32_0 : i32, i32, i32
  }
}

</mosaic_0001>

<llo_original>
// kernel: tpu_custom_call.1
$region0: #{tpu_custom_call.1}
  #allocation0 [shape = 'u32[]', space=smem, size = 0x4, offset = 0x4, fixed_abs, tag = 'smem constant byte address 0x4 - core index']
  #allocation1 [shape = 'u32[72,128]{1,0:T(1,128)}', space=vmem, size = 0x9000, scoped, tag = 'internal scratch']
  %s0 = inlined_call_operand.hbm [shape: f32[128,128], index: 0, kind: input, shape index: {}]
  %s1 = inlined_call_operand.hbm [shape: bf16[4,128,128], index: 1, kind: input, shape index: {}]
  %s2 = inlined_call_operand.hbm [shape: f32[4,128,128], index: 2, kind: input, shape index: {}]
  %s3 = inlined_call_operand.vmem [shape: f32[1,128], index: 3, kind: input, shape index: {}]
  %s4 = inlined_call_operand.hbm [shape: f32[128,128], index: 4, kind: output, shape index: {0}]
  %s5 = inlined_call_operand.hbm [shape: f32[1,1,128], index: 5, kind: output, shape index: {1}]
  %6 = xla_tuple %s4, %s5
  %s7 = sld [smem:[#allocation0]]
  $region46: #{tpu_custom_call.1} parent=0
    _
  %s9 = ssub.s32 1, %s7
  %s10 = scalar_select 0, %s9, %s7
  $region1: #{tpu_custom_call.1} parent=0
    #allocation2 [shape = 'u8[65536]{0}', space=vmem, size = 0x10000, scoped, tag = 'input window, operand 0, single buffered']
    #allocation3 [shape = 's32[1]{0}', space=sflag, size = 0x4, scoped, tag = 'scoped memory for tpu_custom_call.1']
    #allocation4 [shape = 's32[1]{0}', space=sflag, size = 0x4, scoped, tag = 'scoped memory for tpu_custom_call.1']
    #allocation5 [shape = 'u8[131072]{0}', space=vmem, size = 0x20000, scoped, tag = 'input window, operand 1, single buffered']
    #allocation6 [shape = 's32[1]{0}', space=sflag, size = 0x4, scoped, tag = 'scoped memory for tpu_custom_call.1']
    #allocation7 [shape = 'u8[262144]{0}', space=vmem, size = 0x40000, scoped, tag = 'input window, operand 2, single buffered']
    #allocation8 [shape = 'u8[65536]{0}', space=vmem, size = 0x10000, scoped, tag = 'output window, operand 0, single buffered']
    #allocation9 [shape = 'u8[512]{0}', space=vmem, size = 0x400, scoped, tag = 'output window, operand 1, single buffered']
    #allocation10 [shape = 's32[1]{0}', space=sflag, size = 0x4, scoped, tag = 'scoped memory for tpu_custom_call.1']
    %11 = vsyncpa [#allocation3], 0
    %12 = vsyncpa [#allocation6], 0
    %13 = vsyncpa [#allocation4], 0
    %14 = vsyncpa [#allocation10], 0
    // Predicated region
    $region2: #{tpu_custom_call.1} parent=1 // pred_check
      _
    $region3: #{tpu_custom_call.1} parent=1 // pred_check_branch
      %16 = sbr.rel (0) target = $region5
    $region4: #{tpu_custom_call.1} parent=1 // pred_region
      %18 = vsyncadd [#allocation3], 0
      %s19 = sshll.u32 %s0, 4
      %s20 = int_to_ptr.hbm [resolvable:$true] %s19
      %s21 = sshll.u32 [#allocation2], 4
      %s22 = int_to_ptr.vmem [resolvable:$true] %s21
      %27 = dma.hbm_to_vmem [thread:$0]  %s20, 2048, %s22, [#allocation3], 128, 128, 8
    $region5: #{tpu_custom_call.1} parent=1 // pred_fallthru
      _
    // Predicated region
    $region6: #{tpu_custom_call.1} parent=1 // pred_check
      _
    $region7: #{tpu_custom_call.1} parent=1 // pred_check_branch
      %29 = sbr.rel (0) target = $region9
    $region8: #{tpu_custom_call.1} parent=1 // pred_region
      %31 = vsyncadd [#allocation6], 0
      %s32 = sshll.u32 %s1, 4
      %s33 = int_to_ptr.hbm [resolvable:$true] %s32
      %s34 = sshll.u32 [#allocation5], 4
      %s35 = int_to_ptr.vmem [resolvable:$true] %s34
      %40 = dma.hbm_to_vmem [thread:$0]  %s33, 4096, %s35, [#allocation6], 64, 64, 4
    $region9: #{tpu_custom_call.1} parent=1 // pred_fallthru
      _
    // Predicated region
    $region10: #{tpu_custom_call.1} parent=1 // pred_check
      _
    $region11: #{tpu_custom_call.1} parent=1 // pred_check_branch
      %42 = sbr.rel (0) target = $region13
    $region12: #{tpu_custom_call.1} parent=1 // pred_region
      %44 = vsyncadd [#allocation6], 0
      %s45 = sshll.u32 %s2, 4
      %s46 = int_to_ptr.hbm [resolvable:$true] %s45
      %s47 = sshll.u32 [#allocation7], 4
      %s48 = int_to_ptr.vmem [resolvable:$true] %s47
      %53 = dma.hbm_to_vmem [thread:$0]  %s46, 8192, %s48, [#allocation6], 128, 128, 8
    $region13: #{tpu_custom_call.1} parent=1 // pred_fallthru
      _
    // Predicated region
    $region14: #{tpu_custom_call.1} parent=1 // pred_check
      _
    $region15: #{tpu_custom_call.1} parent=1 // pred_check_branch
      %55 = sbr.rel (0) target = $region17
    $region16: #{tpu_custom_call.1} parent=1 // pred_region
      _
    $region17: #{tpu_custom_call.1} parent=1 // pred_fallthru
      _
    // Predicated region
    $region18: #{tpu_custom_call.1} parent=1 // pred_check
      _
    $region19: #{tpu_custom_call.1} parent=1 // pred_check_branch
      %57 = sbr.rel (0) target = $region21
    $region20: #{tpu_custom_call.1} parent=1 // pred_region
      %59 = dma.done [#allocation3], 2048
    $region21: #{tpu_custom_call.1} parent=1 // pred_fallthru
      _
    // Predicated region
    $region22: #{tpu_custom_call.1} parent=1 // pred_check
      _
    $region23: #{tpu_custom_call.1} parent=1 // pred_check_branch
      %61 = sbr.rel (0) target = $region25
    $region24: #{tpu_custom_call.1} parent=1 // pred_region
      %63 = dma.done [#allocation6], 4096
    $region25: #{tpu_custom_call.1} parent=1 // pred_fallthru
      _
    // Predicated region
    $region26: #{tpu_custom_call.1} parent=1 // pred_check
      _
    $region27: #{tpu_custom_call.1} parent=1 // pred_check_branch
      %65 = sbr.rel (0) target = $region29
    $region28: #{tpu_custom_call.1} parent=1 // pred_region
      %67 = dma.done [#allocation6], 8192
    $region29: #{tpu_custom_call.1} parent=1 // pred_fallthru
      _
    %v68 = vld [vmem:[%s3] sm:$0x1]
    %v69 = vld [vmem:[#allocation2] sm:$0xff]
    %v70 = vld [vmem:[#allocation2 + $0x8] sm:$0xff]
    %v71 = vld [vmem:[#allocation2 + $0x10] sm:$0xff]
    %v72 = vld [vmem:[#allocation2 + $0x18] sm:$0xff]
    %v73 = vld [vmem:[#allocation2 + $0x20] sm:$0xff]
    %v74 = vld [vmem:[#allocation2 + $0x28] sm:$0xff]
    %v75 = vld [vmem:[#allocation2 + $0x30] sm:$0xff]
    %v76 = vld [vmem:[#allocation2 + $0x38] sm:$0xff]
    %v77 = vpack.c.bf16 %v70, %v69
    %v78 = vpack.c.bf16 %v72, %v71
    %v79 = vpack.c.bf16 %v74, %v73
    %v80 = vpack.c.bf16 %v76, %v75
    %v81 = vlaneseq
    %v82 = vand.u32 %v81, 127
    %v83 = vld [vmem:[#allocation5] sm:$0xf]
    %v84 = vld [vmem:[#allocation5 + $0x4] sm:$0xf]
    %v85 = vld [vmem:[#allocation5 + $0x8] sm:$0xf]
    %v86 = vld [vmem:[#allocation5 + $0xc] sm:$0xf]
    %v87 = vld [vmem:[#allocation5 + $0x10] sm:$0xf]
    %v88 = vld [vmem:[#allocation5 + $0x14] sm:$0xf]
    %v89 = vld [vmem:[#allocation5 + $0x18] sm:$0xf]
    %v90 = vld [vmem:[#allocation5 + $0x1c] sm:$0xf]
    %v91 = vld [vmem:[#allocation5 + $0x20] sm:$0xf]
    %v92 = vld [vmem:[#allocation5 + $0x24] sm:$0xf]
    %v93 = vld [vmem:[#allocation5 + $0x28] sm:$0xf]
    %v94 = vld [vmem:[#allocation5 + $0x2c] sm:$0xf]
    %v95 = vld [vmem:[#allocation5 + $0x30] sm:$0xf]
    %v96 = vld [vmem:[#allocation5 + $0x34] sm:$0xf]
    %v97 = vld [vmem:[#allocation5 + $0x38] sm:$0xf]
    %v98 = vld [vmem:[#allocation5 + $0x3c] sm:$0xf]
    %v115 = vunpack.c.l.b16 %v83
    %v116 = vunpack.c.l.b16 %v84
    %v117 = vunpack.c.l.b16 %v85
    %v118 = vunpack.c.l.b16 %v86
    %v119 = vunpack.c.l.b16 %v87
    %v120 = vunpack.c.l.b16 %v88
    %v121 = vunpack.c.l.b16 %v89
    %v122 = vunpack.c.l.b16 %v90
    %v123 = vunpack.c.l.b16 %v91
    %v124 = vunpack.c.l.b16 %v92
    %v125 = vunpack.c.l.b16 %v93
    %v126 = vunpack.c.l.b16 %v94
    %v127 = vunpack.c.l.b16 %v95
    %v128 = vunpack.c.l.b16 %v96
    %v129 = vunpack.c.l.b16 %v97
    %v130 = vunpack.c.l.b16 %v98
    %v131 = vpack.c.b16 %v116, %v115
    %v132 = vpack.c.b16 %v118, %v117
    %v133 = vpack.c.b16 %v120, %v119
    %v134 = vpack.c.b16 %v122, %v121
    %v135 = vpack.c.b16 %v124, %v123
    %v136 = vpack.c.b16 %v126, %v125
    %v137 = vpack.c.b16 %v128, %v127
    %v138 = vpack.c.b16 %v130, %v129
    %147 = vmatpush.bf16.msra.mxu0 %v138
    %148 = vmatpush.bf16.msra.mxu0 %v137
    %149 = vmatpush.bf16.msra.mxu0 %v136
    %150 = vmatpush.bf16.msra.mxu0 %v135
    %151 = vmatpush.bf16.msra.mxu0 %v134
    %152 = vmatpush.bf16.msra.mxu0 %v133
    %153 = vmatpush.bf16.msra.mxu0 %v132
    %154 = vmatpush.bf16.msra.mxu0 %v131
    %155 = vmatmul.bf16.gmra.mxu0 %v77
    %v156 = vpop.f32.mrf.mxu0
    %v157 = vadd.f32 0.0, %v156
    %v158 = vpop.f32.mrf.mxu0
    %v159 = vadd.f32 0.0, %v158
    %160 = vmatmul.bf16.gmra.mxu0 %v78
    %v161 = vpop.f32.mrf.mxu0
    %v162 = vadd.f32 0.0, %v161
    %v163 = vpop.f32.mrf.mxu0
    %v164 = vadd.f32 0.0, %v163
    %165 = vmatmul.bf16.gmra.mxu0 %v79
    %v166 = vpop.f32.mrf.mxu0
    %v167 = vadd.f32 0.0, %v166
    %v168 = vpop.f32.mrf.mxu0
    %v169 = vadd.f32 0.0, %v168
    %170 = vmatmul.bf16.gmra.mxu0 %v80
    %v171 = vpop.f32.mrf.mxu0
    %v172 = vadd.f32 0.0, %v171
    %v173 = vpop.f32.mrf.mxu0
    %v174 = vadd.f32 0.0, %v173
    %175 = vdwg.mxu0
    %v177 = vperm.slane %v68, 0
    %v179 = vsub.f32 %v177, %v157
    %v180 = vsub.f32 %v177, %v159
    %v181 = vsub.f32 %v177, %v162
    %v182 = vsub.f32 %v177, %v164
    %v183 = vsub.f32 %v177, %v167
    %v184 = vsub.f32 %v177, %v169
    %v185 = vsub.f32 %v177, %v172
    %v186 = vsub.f32 %v177, %v174
    %187 = vmin.xlane.f32.xlu0 %v179
    %v188 = vpop.xlane.xlu0 %187
    %189 = vmin.xlane.f32.xlu0 %v180
    %v190 = vpop.xlane.xlu0 %189
    %191 = vmin.xlane.f32.xlu0 %v181
    %v192 = vpop.xlane.xlu0 %191
    %193 = vmin.xlane.f32.xlu0 %v182
    %v194 = vpop.xlane.xlu0 %193
    %195 = vmin.xlane.f32.xlu0 %v183
    %v196 = vpop.xlane.xlu0 %195
    %197 = vmin.xlane.f32.xlu0 %v184
    %v198 = vpop.xlane.xlu0 %197
    %199 = vmin.xlane.f32.xlu0 %v185
    %v200 = vpop.xlane.xlu0 %199
    %201 = vmin.xlane.f32.xlu0 %v186
    %v202 = vpop.xlane.xlu0 %201
    %vm203 = vcmp.le.f32.partialorder %v179, %v188
    %vm204 = vcmp.le.f32.partialorder %v180, %v190
    %vm205 = vcmp.le.f32.partialorder %v181, %v192
    %vm206 = vcmp.le.f32.partialorder %v182, %v194
    %vm207 = vcmp.le.f32.partialorder %v183, %v196
    %vm208 = vcmp.le.f32.partialorder %v184, %v198
    %vm209 = vcmp.le.f32.partialorder %v185, %v200
    %vm210 = vcmp.le.f32.partialorder %v186, %v202
    %v211 = vsel %vm203, %v82, 128
    %v212 = vsel %vm204, %v82, 128
    %v213 = vsel %vm205, %v82, 128
    %v214 = vsel %vm206, %v82, 128
    %v215 = vsel %vm207, %v82, 128
    %v216 = vsel %vm208, %v82, 128
    %v217 = vsel %vm209, %v82, 128
    %v218 = vsel %vm210, %v82, 128
    %v219 = vand.u32 %v211, 65535
    %v220 = vshra.s32 %v211, 16
    %v221 = vcvt.s32.f32 %v219
    %v222 = vcvt.s32.f32 %v220
    %223 = vmin.xlane.f32.xlu0 %v222
    %v224 = vpop.xlane.xlu0 %223
    %vm225 = vcmp.eq.f32.partialorder %v222, %v224
    %v226 = vsel %vm225, %v221, inf
    %227 = vmin.xlane.f32.xlu0 %v226
    %v228 = vpop.xlane.xlu0 %227
    %v229 = vcvt.f32.s32 %v228
    %v230 = vcvt.f32.s32 %v224
    %v231 = vshll.u32 %v230, 16
    %v232 = vadd.s32 %v231, %v229
    %v233 = vand.u32 %v212, 65535
    %v234 = vshra.s32 %v212, 16
    %v235 = vcvt.s32.f32 %v233
    %v236 = vcvt.s32.f32 %v234
    %237 = vmin.xlane.f32.xlu0 %v236
    %v238 = vpop.xlane.xlu0 %237
    %vm239 = vcmp.eq.f32.partialorder %v236, %v238
    %v240 = vsel %vm239, %v235, inf
    %241 = vmin.xlane.f32.xlu0 %v240
    %v242 = vpop.xlane.xlu0 %241
    %v243 = vcvt.f32.s32 %v242
    %v244 = vcvt.f32.s32 %v238
    %v245 = vshll.u32 %v244, 16
    %v246 = vadd.s32 %v245, %v243
    %v247 = vand.u32 %v213, 65535
    %v248 = vshra.s32 %v213, 16
    %v249 = vcvt.s32.f32 %v247
    %v250 = vcvt.s32.f32 %v248
    %251 = vmin.xlane.f32.xlu0 %v250
    %v252 = vpop.xlane.xlu0 %251
    %vm253 = vcmp.eq.f32.partialorder %v250, %v252
    %v254 = vsel %vm253, %v249, inf
    %255 = vmin.xlane.f32.xlu0 %v254
    %v256 = vpop.xlane.xlu0 %255
    %v257 = vcvt.f32.s32 %v256
    %v258 = vcvt.f32.s32 %v252
    %v259 = vshll.u32 %v258, 16
    %v260 = vadd.s32 %v259, %v257
    %v261 = vand.u32 %v214, 65535
    %v262 = vshra.s32 %v214, 16
    %v263 = vcvt.s32.f32 %v261
    %v264 = vcvt.s32.f32 %v262
    %265 = vmin.xlane.f32.xlu0 %v264
    %v266 = vpop.xlane.xlu0 %265
    %vm267 = vcmp.eq.f32.partialorder %v264, %v266
    %v268 = vsel %vm267, %v263, inf
    %269 = vmin.xlane.f32.xlu0 %v268
    %v270 = vpop.xlane.xlu0 %269
    %v271 = vcvt.f32.s32 %v270
    %v272 = vcvt.f32.s32 %v266
    %v273 = vshll.u32 %v272, 16
    %v274 = vadd.s32 %v273, %v271
    %v275 = vand.u32 %v215, 65535
    %v276 = vshra.s32 %v215, 16
    %v277 = vcvt.s32.f32 %v275
    %v278 = vcvt.s32.f32 %v276
    %279 = vmin.xlane.f32.xlu0 %v278
    %v280 = vpop.xlane.xlu0 %279
    %vm281 = vcmp.eq.f32.partialorder %v278, %v280
    %v282 = vsel %vm281, %v277, inf
    %283 = vmin.xlane.f32.xlu0 %v282
    %v284 = vpop.xlane.xlu0 %283
    %v285 = vcvt.f32.s32 %v284
    %v286 = vcvt.f32.s32 %v280
    %v287 = vshll.u32 %v286, 16
    %v288 = vadd.s32 %v287, %v285
    %v289 = vand.u32 %v216, 65535
    %v290 = vshra.s32 %v216, 16
    %v291 = vcvt.s32.f32 %v289
    %v292 = vcvt.s32.f32 %v290
    %293 = vmin.xlane.f32.xlu0 %v292
    %v294 = vpop.xlane.xlu0 %293
    %vm295 = vcmp.eq.f32.partialorder %v292, %v294
    %v296 = vsel %vm295, %v291, inf
    %297 = vmin.xlane.f32.xlu0 %v296
    %v298 = vpop.xlane.xlu0 %297
    %v299 = vcvt.f32.s32 %v298
    %v300 = vcvt.f32.s32 %v294
    %v301 = vshll.u32 %v300, 16
    %v302 = vadd.s32 %v301, %v299
    %v303 = vand.u32 %v217, 65535
    %v304 = vshra.s32 %v217, 16
    %v305 = vcvt.s32.f32 %v303
    %v306 = vcvt.s32.f32 %v304
    %307 = vmin.xlane.f32.xlu0 %v306
    %v308 = vpop.xlane.xlu0 %307
    %vm309 = vcmp.eq.f32.partialorder %v306, %v308
    %v310 = vsel %vm309, %v305, inf
    %311 = vmin.xlane.f32.xlu0 %v310
    %v312 = vpop.xlane.xlu0 %311
    %v313 = vcvt.f32.s32 %v312
    %v314 = vcvt.f32.s32 %v308
    %v315 = vshll.u32 %v314, 16
    %v316 = vadd.s32 %v315, %v313
    %v317 = vand.u32 %v218, 65535
    %v318 = vshra.s32 %v218, 16
    %v319 = vcvt.s32.f32 %v317
    %v320 = vcvt.s32.f32 %v318
    %321 = vmin.xlane.f32.xlu0 %v320
    %v322 = vpop.xlane.xlu0 %321
    %vm323 = vcmp.eq.f32.partialorder %v320, %v322
    %v324 = vsel %vm323, %v319, inf
    %325 = vmin.xlane.f32.xlu0 %v324
    %v326 = vpop.xlane.xlu0 %325
    %v327 = vcvt.f32.s32 %v326
    %v328 = vcvt.f32.s32 %v322
    %v329 = vshll.u32 %v328, 16
    %v330 = vadd.s32 %v329, %v327
    %vm331 = vcmp.eq.s32.totalorder %v82, %v232
    %vm332 = vcmp.eq.s32.totalorder %v82, %v246
    %vm333 = vcmp.eq.s32.totalorder %v82, %v260
    %vm334 = vcmp.eq.s32.totalorder %v82, %v274
    %vm335 = vcmp.eq.s32.totalorder %v82, %v288
    %vm336 = vcmp.eq.s32.totalorder %v82, %v302
    %vm337 = vcmp.eq.s32.totalorder %v82, %v316
    %vm338 = vcmp.eq.s32.totalorder %v82, %v330
    %v339 = vsel %vm331, 1, 0
    %v340 = vsel %vm332, 1, 0
    %v341 = vsel %vm333, 1, 0
    %v342 = vsel %vm334, 1, 0
    %v343 = vsel %vm335, 1, 0
    %v344 = vsel %vm336, 1, 0
    %v345 = vsel %vm337, 1, 0
    %v346 = vsel %vm338, 1, 0
    %v347 = vcvt.s32.f32 %v339
    %v348 = vcvt.s32.f32 %v340
    %v349 = vcvt.s32.f32 %v341
    %v350 = vcvt.s32.f32 %v342
    %v351 = vcvt.s32.f32 %v343
    %v352 = vcvt.s32.f32 %v344
    %v353 = vcvt.s32.f32 %v345
    %v354 = vcvt.s32.f32 %v346
    %v355 = vld [vmem:[#allocation7] sm:$0xff]
    %v356 = vld [vmem:[#allocation7 + $0x8] sm:$0xff]
    %v357 = vld [vmem:[#allocation7 + $0x10] sm:$0xff]
    %v358 = vld [vmem:[#allocation7 + $0x18] sm:$0xff]
    %v359 = vld [vmem:[#allocation7 + $0x20] sm:$0xff]
    %v360 = vld [vmem:[#allocation7 + $0x28] sm:$0xff]
    %v361 = vld [vmem:[#allocation7 + $0x30] sm:$0xff]
    %v362 = vld [vmem:[#allocation7 + $0x38] sm:$0xff]
    %v363 = vld [vmem:[#allocation7 + $0x40] sm:$0xff]
    %v364 = vld [vmem:[#allocation7 + $0x48] sm:$0xff]
    %v365 = vld [vmem:[#allocation7 + $0x50] sm:$0xff]
    %v366 = vld [vmem:[#allocation7 + $0x58] sm:$0xff]
    %v367 = vld [vmem:[#allocation7 + $0x60] sm:$0xff]
    %v368 = vld [vmem:[#allocation7 + $0x68] sm:$0xff]
    %v369 = vld [vmem:[#allocation7 + $0x70] sm:$0xff]
    %v370 = vld [vmem:[#allocation7 + $0x78] sm:$0xff]
    %s371 = scalar_lea.vmem [#allocation5], 64
    %v372 = vld [vmem:[%s371] sm:$0xf]
    %v373 = vld [vmem:[%s371 + $0x4] sm:$0xf]
    %v374 = vld [vmem:[%s371 + $0x8] sm:$0xf]
    %v375 = vld [vmem:[%s371 + $0xc] sm:$0xf]
    %v376 = vld [vmem:[%s371 + $0x10] sm:$0xf]
    %v377 = vld [vmem:[%s371 + $0x14] sm:$0xf]
    %v378 = vld [vmem:[%s371 + $0x18] sm:$0xf]
    %v379 = vld [vmem:[%s371 + $0x1c] sm:$0xf]
    %v380 = vld [vmem:[%s371 + $0x20] sm:$0xf]
    %v381 = vld [vmem:[%s371 + $0x24] sm:$0xf]
    %v382 = vld [vmem:[%s371 + $0x28] sm:$0xf]
    %v383 = vld [vmem:[%s371 + $0x2c] sm:$0xf]
    %v384 = vld [vmem:[%s371 + $0x30] sm:$0xf]
    %v385 = vld [vmem:[%s371 + $0x34] sm:$0xf]
    %v386 = vld [vmem:[%s371 + $0x38] sm:$0xf]
    %v387 = vld [vmem:[%s371 + $0x3c] sm:$0xf]
    %v404 = vunpack.c.l.b16 %v372
    %v405 = vunpack.c.l.b16 %v373
    %v406 = vunpack.c.l.b16 %v374
    %v407 = vunpack.c.l.b16 %v375
    %v408 = vunpack.c.l.b16 %v376
    %v409 = vunpack.c.l.b16 %v377
    %v410 = vunpack.c.l.b16 %v378
    %v411 = vunpack.c.l.b16 %v379
    %v412 = vunpack.c.l.b16 %v380
    %v413 = vunpack.c.l.b16 %v381
    %v414 = vunpack.c.l.b16 %v382
    %v415 = vunpack.c.l.b16 %v383
    %v416 = vunpack.c.l.b16 %v384
    %v417 = vunpack.c.l.b16 %v385
    %v418 = vunpack.c.l.b16 %v386
    %v419 = vunpack.c.l.b16 %v387
    %v420 = vpack.c.b16 %v405, %v404
    %v421 = vpack.c.b16 %v407, %v406
    %v422 = vpack.c.b16 %v409, %v408
    %v423 = vpack.c.b16 %v411, %v410
    %v424 = vpack.c.b16 %v413, %v412
    %v425 = vpack.c.b16 %v415, %v414
    %v426 = vpack.c.b16 %v417, %v416
    %v427 = vpack.c.b16 %v419, %v418
    %436 = vmatpush.bf16.msra.mxu0 %v427
    %437 = vmatpush.bf16.msra.mxu0 %v426
    %438 = vmatpush.bf16.msra.mxu0 %v425
    %439 = vmatpush.bf16.msra.mxu0 %v424
    %440 = vmatpush.bf16.msra.mxu0 %v423
    %441 = vmatpush.bf16.msra.mxu0 %v422
    %442 = vmatpush.bf16.msra.mxu0 %v421
    %443 = vmatpush.bf16.msra.mxu0 %v420
    %444 = vmatmul.bf16.gmra.mxu0 %v77
    %v445 = vpop.f32.mrf.mxu0
    %v446 = vadd.f32 0.0, %v445
    %v447 = vpop.f32.mrf.mxu0
    %v448 = vadd.f32 0.0, %v447
    %449 = vmatmul.bf16.gmra.mxu0 %v78
    %v450 = vpop.f32.mrf.mxu0
    %v451 = vadd.f32 0.0, %v450
    %v452 = vpop.f32.mrf.mxu0
    %v453 = vadd.f32 0.0, %v452
    %454 = vmatmul.bf16.gmra.mxu0 %v79
    %v455 = vpop.f32.mrf.mxu0
    %v456 = vadd.f32 0.0, %v455
    %v457 = vpop.f32.mrf.mxu0
    %v458 = vadd.f32 0.0, %v457
    %459 = vmatmul.bf16.gmra.mxu0 %v80
    %v460 = vpop.f32.mrf.mxu0
    %v461 = vadd.f32 0.0, %v460
    %v462 = vpop.f32.mrf.mxu0
    %v463 = vadd.f32 0.0, %v462
    %464 = vdwg.mxu0
    %v465 = vsub.f32 %v177, %v446
    %v466 = vsub.f32 %v177, %v448
    %v467 = vsub.f32 %v177, %v451
    %v468 = vsub.f32 %v177, %v453
    %v469 = vsub.f32 %v177, %v456
    %v470 = vsub.f32 %v177, %v458
    %v471 = vsub.f32 %v177, %v461
    %v472 = vsub.f32 %v177, %v463
    %473 = vmin.xlane.f32.xlu0 %v465
    %v474 = vpop.xlane.xlu0 %473
    %475 = vmin.xlane.f32.xlu0 %v466
    %v476 = vpop.xlane.xlu0 %475
    %477 = vmin.xlane.f32.xlu0 %v467
    %v478 = vpop.xlane.xlu0 %477
    %479 = vmin.xlane.f32.xlu0 %v468
    %v480 = vpop.xlane.xlu0 %479
    %481 = vmin.xlane.f32.xlu0 %v469
    %v482 = vpop.xlane.xlu0 %481
    %483 = vmin.xlane.f32.xlu0 %v470
    %v484 = vpop.xlane.xlu0 %483
    %485 = vmin.xlane.f32.xlu0 %v471
    %v486 = vpop.xlane.xlu0 %485
    %487 = vmin.xlane.f32.xlu0 %v472
    %v488 = vpop.xlane.xlu0 %487
    %vm489 = vcmp.le.f32.partialorder %v465, %v474
    %vm490 = vcmp.le.f32.partialorder %v466, %v476
    %vm491 = vcmp.le.f32.partialorder %v467, %v478
    %vm492 = vcmp.le.f32.partialorder %v468, %v480
    %vm493 = vcmp.le.f32.partialorder %v469, %v482
    %vm494 = vcmp.le.f32.partialorder %v470, %v484
    %vm495 = vcmp.le.f32.partialorder %v471, %v486
    %vm496 = vcmp.le.f32.partialorder %v472, %v488
    %v497 = vsel %vm489, %v82, 128
    %v498 = vsel %vm490, %v82, 128
    %v499 = vsel %vm491, %v82, 128
    %v500 = vsel %vm492, %v82, 128
    %v501 = vsel %vm493, %v82, 128
    %v502 = vsel %vm494, %v82, 128
    %v503 = vsel %vm495, %v82, 128
    %v504 = vsel %vm496, %v82, 128
    %v505 = vand.u32 %v497, 65535
    %v506 = vshra.s32 %v497, 16
    %v507 = vcvt.s32.f32 %v505
    %v508 = vcvt.s32.f32 %v506
    %509 = vmin.xlane.f32.xlu0 %v508
    %v510 = vpop.xlane.xlu0 %509
    %vm511 = vcmp.eq.f32.partialorder %v508, %v510
    %v512 = vsel %vm511, %v507, inf
    %513 = vmin.xlane.f32.xlu0 %v512
    %v514 = vpop.xlane.xlu0 %513
    %v515 = vcvt.f32.s32 %v514
    %v516 = vcvt.f32.s32 %v510
    %v517 = vshll.u32 %v516, 16
    %v518 = vadd.s32 %v517, %v515
    %v519 = vand.u32 %v498, 65535
    %v520 = vshra.s32 %v498, 16
    %v521 = vcvt.s32.f32 %v519
    %v522 = vcvt.s32.f32 %v520
    %523 = vmin.xlane.f32.xlu0 %v522
    %v524 = vpop.xlane.xlu0 %523
    %vm525 = vcmp.eq.f32.partialorder %v522, %v524
    %v526 = vsel %vm525, %v521, inf
    %527 = vmin.xlane.f32.xlu0 %v526
    %v528 = vpop.xlane.xlu0 %527
    %v529 = vcvt.f32.s32 %v528
    %v530 = vcvt.f32.s32 %v524
    %v531 = vshll.u32 %v530, 16
    %v532 = vadd.s32 %v531, %v529
    %v533 = vand.u32 %v499, 65535
    %v534 = vshra.s32 %v499, 16
    %v535 = vcvt.s32.f32 %v533
    %v536 = vcvt.s32.f32 %v534
    %537 = vmin.xlane.f32.xlu0 %v536
    %v538 = vpop.xlane.xlu0 %537
    %vm539 = vcmp.eq.f32.partialorder %v536, %v538
    %v540 = vsel %vm539, %v535, inf
    %541 = vmin.xlane.f32.xlu0 %v540
    %v542 = vpop.xlane.xlu0 %541
    %v543 = vcvt.f32.s32 %v542
    %v544 = vcvt.f32.s32 %v538
    %v545 = vshll.u32 %v544, 16
    %v546 = vadd.s32 %v545, %v543
    %v547 = vand.u32 %v500, 65535
    %v548 = vshra.s32 %v500, 16
    %v549 = vcvt.s32.f32 %v547
    %v550 = vcvt.s32.f32 %v548
    %551 = vmin.xlane.f32.xlu0 %v550
    %v552 = vpop.xlane.xlu0 %551
    %vm553 = vcmp.eq.f32.partialorder %v550, %v552
    %v554 = vsel %vm553, %v549, inf
    %555 = vmin.xlane.f32.xlu0 %v554
    %v556 = vpop.xlane.xlu0 %555
    %v557 = vcvt.f32.s32 %v556
    %v558 = vcvt.f32.s32 %v552
    %v559 = vshll.u32 %v558, 16
    %v560 = vadd.s32 %v559, %v557
    %v561 = vand.u32 %v501, 65535
    %v562 = vshra.s32 %v501, 16
    %v563 = vcvt.s32.f32 %v561
    %v564 = vcvt.s32.f32 %v562
    %565 = vmin.xlane.f32.xlu0 %v564
    %v566 = vpop.xlane.xlu0 %565
    %vm567 = vcmp.eq.f32.partialorder %v564, %v566
    %v568 = vsel %vm567, %v563, inf
    %569 = vmin.xlane.f32.xlu0 %v568
    %v570 = vpop.xlane.xlu0 %569
    %v571 = vcvt.f32.s32 %v570
    %v572 = vcvt.f32.s32 %v566
    %v573 = vshll.u32 %v572, 16
    %v574 = vadd.s32 %v573, %v571
    %v575 = vand.u32 %v502, 65535
    %v576 = vshra.s32 %v502, 16
    %v577 = vcvt.s32.f32 %v575
    %v578 = vcvt.s32.f32 %v576
    %579 = vmin.xlane.f32.xlu0 %v578
    %v580 = vpop.xlane.xlu0 %579
    %vm581 = vcmp.eq.f32.partialorder %v578, %v580
    %v582 = vsel %vm581, %v577, inf
    %583 = vmin.xlane.f32.xlu0 %v582
    %v584 = vpop.xlane.xlu0 %583
    %v585 = vcvt.f32.s32 %v584
    %v586 = vcvt.f32.s32 %v580
    %v587 = vshll.u32 %v586, 16
    %v588 = vadd.s32 %v587, %v585
    %v589 = vand.u32 %v503, 65535
    %v590 = vshra.s32 %v503, 16
    %v591 = vcvt.s32.f32 %v589
    %v592 = vcvt.s32.f32 %v590
    %593 = vmin.xlane.f32.xlu0 %v592
    %v594 = vpop.xlane.xlu0 %593
    %vm595 = vcmp.eq.f32.partialorder %v592, %v594
    %v596 = vsel %vm595, %v591, inf
    %597 = vmin.xlane.f32.xlu0 %v596
    %v598 = vpop.xlane.xlu0 %597
    %v599 = vcvt.f32.s32 %v598
    %v600 = vcvt.f32.s32 %v594
    %v601 = vshll.u32 %v600, 16
    %v602 = vadd.s32 %v601, %v599
    %v603 = vand.u32 %v504, 65535
    %v604 = vshra.s32 %v504, 16
    %v605 = vcvt.s32.f32 %v603
    %v606 = vcvt.s32.f32 %v604
    %607 = vmin.xlane.f32.xlu0 %v606
    %v608 = vpop.xlane.xlu0 %607
    %vm609 = vcmp.eq.f32.partialorder %v606, %v608
    %v610 = vsel %vm609, %v605, inf
    %611 = vmin.xlane.f32.xlu0 %v610
    %v612 = vpop.xlane.xlu0 %611
    %v613 = vcvt.f32.s32 %v612
    %v614 = vcvt.f32.s32 %v608
    %v615 = vshll.u32 %v614, 16
    %v616 = vadd.s32 %v615, %v613
    %vm617 = vcmp.eq.s32.totalorder %v82, %v518
    %vm618 = vcmp.eq.s32.totalorder %v82, %v532
    %vm619 = vcmp.eq.s32.totalorder %v82, %v546
    %vm620 = vcmp.eq.s32.totalorder %v82, %v560
    %vm621 = vcmp.eq.s32.totalorder %v82, %v574
    %vm622 = vcmp.eq.s32.totalorder %v82, %v588
    %vm623 = vcmp.eq.s32.totalorder %v82, %v602
    %vm624 = vcmp.eq.s32.totalorder %v82, %v616
    %v625 = vsel %vm617, 1, 0
    %v626 = vsel %vm618, 1, 0
    %v627 = vsel %vm619, 1, 0
    %v628 = vsel %vm620, 1, 0
    %v629 = vsel %vm621, 1, 0
    %v630 = vsel %vm622, 1, 0
    %v631 = vsel %vm623, 1, 0
    %v632 = vsel %vm624, 1, 0
    %v633 = vcvt.s32.f32 %v625
    %v634 = vcvt.s32.f32 %v626
    %v635 = vcvt.s32.f32 %v627
    %v636 = vcvt.s32.f32 %v628
    %v637 = vcvt.s32.f32 %v629
    %v638 = vcvt.s32.f32 %v630
    %v639 = vcvt.s32.f32 %v631
    %v640 = vcvt.s32.f32 %v632
    %s641 = scalar_lea.vmem [#allocation7], 128
    %v642 = vld [vmem:[%s641] sm:$0xff]
    %v643 = vld [vmem:[%s641 + $0x8] sm:$0xff]
    %v644 = vld [vmem:[%s641 + $0x10] sm:$0xff]
    %v645 = vld [vmem:[%s641 + $0x18] sm:$0xff]
    %v646 = vld [vmem:[%s641 + $0x20] sm:$0xff]
    %v647 = vld [vmem:[%s641 + $0x28] sm:$0xff]
    %v648 = vld [vmem:[%s641 + $0x30] sm:$0xff]
    %v649 = vld [vmem:[%s641 + $0x38] sm:$0xff]
    %v650 = vld [vmem:[%s641 + $0x40] sm:$0xff]
    %v651 = vld [vmem:[%s641 + $0x48] sm:$0xff]
    %v652 = vld [vmem:[%s641 + $0x50] sm:$0xff]
    %v653 = vld [vmem:[%s641 + $0x58] sm:$0xff]
    %v654 = vld [vmem:[%s641 + $0x60] sm:$0xff]
    %v655 = vld [vmem:[%s641 + $0x68] sm:$0xff]
    %v656 = vld [vmem:[%s641 + $0x70] sm:$0xff]
    %v657 = vld [vmem:[%s641 + $0x78] sm:$0xff]
    %658 = vmatpush.msra.mxu0 %v657
    %659 = vmatpush.msra.mxu0 %v656
    %660 = vmatpush.msra.mxu0 %v655
    %661 = vmatpush.msra.mxu0 %v654
    %662 = vmatpush.msra.mxu0 %v653
    %663 = vmatpush.msra.mxu0 %v652
    %664 = vmatpush.msra.mxu0 %v651
    %665 = vmatpush.msra.mxu0 %v650
    %666 = vmatpush.msra.mxu0 %v649
    %667 = vmatpush.msra.mxu0 %v648
    %668 = vmatpush.msra.mxu0 %v647
    %669 = vmatpush.msra.mxu0 %v646
    %670 = vmatpush.msra.mxu0 %v645
    %671 = vmatpush.msra.mxu0 %v644
    %672 = vmatpush.msra.mxu0 %v643
    %673 = vmatpush.msra.mxu0 %v642
    %674 = vmatmul.f32.gmra.mxu0 %v633
    %v675 = vpop.f32.mrf.mxu0
    %v676 = vadd.f32 0.0, %v675
    %677 = vmatmul.f32.gmra.mxu0 %v634
    %v678 = vpop.f32.mrf.mxu0
    %v679 = vadd.f32 0.0, %v678
    %680 = vmatmul.f32.gmra.mxu0 %v635
    %v681 = vpop.f32.mrf.mxu0
    %v682 = vadd.f32 0.0, %v681
    %683 = vmatmul.f32.gmra.mxu0 %v636
    %v684 = vpop.f32.mrf.mxu0
    %v685 = vadd.f32 0.0, %v684
    %686 = vmatmul.f32.gmra.mxu0 %v637
    %v687 = vpop.f32.mrf.mxu0
    %v688 = vadd.f32 0.0, %v687
    %689 = vmatmul.f32.gmra.mxu0 %v638
    %v690 = vpop.f32.mrf.mxu0
    %v691 = vadd.f32 0.0, %v690
    %692 = vmatmul.f32.gmra.mxu0 %v639
    %v693 = vpop.f32.mrf.mxu0
    %v694 = vadd.f32 0.0, %v693
    %695 = vmatmul.f32.gmra.mxu0 %v640
    %v696 = vpop.f32.mrf.mxu0
    %v697 = vadd.f32 0.0, %v696
    %698 = vdwg.mxu0
    %699 = vmatpush.msra.mxu0 %v370
    %700 = vmatpush.msra.mxu0 %v369
    %701 = vmatpush.msra.mxu0 %v368
    %702 = vmatpush.msra.mxu0 %v367
    %703 = vmatpush.msra.mxu0 %v366
    %704 = vmatpush.msra.mxu0 %v365
    %705 = vmatpush.msra.mxu0 %v364
    %706 = vmatpush.msra.mxu0 %v363
    %707 = vmatpush.msra.mxu0 %v362
    %708 = vmatpush.msra.mxu0 %v361
    %709 = vmatpush.msra.mxu0 %v360
    %710 = vmatpush.msra.mxu0 %v359
    %711 = vmatpush.msra.mxu0 %v358
    %712 = vmatpush.msra.mxu0 %v357
    %713 = vmatpush.msra.mxu0 %v356
    %714 = vmatpush.msra.mxu0 %v355
    %715 = vmatmul.f32.gmra.mxu0 %v347
    %v716 = vpop.f32.mrf.mxu0
    %v717 = vadd.f32 %v676, %v716
    %718 = vmatmul.f32.gmra.mxu0 %v348
    %v719 = vpop.f32.mrf.mxu0
    %v720 = vadd.f32 %v679, %v719
    %721 = vmatmul.f32.gmra.mxu0 %v349
    %v722 = vpop.f32.mrf.mxu0
    %v723 = vadd.f32 %v682, %v722
    %724 = vmatmul.f32.gmra.mxu0 %v350
    %v725 = vpop.f32.mrf.mxu0
    %v726 = vadd.f32 %v685, %v725
    %727 = vmatmul.f32.gmra.mxu0 %v351
    %v728 = vpop.f32.mrf.mxu0
    %v729 = vadd.f32 %v688, %v728
    %730 = vmatmul.f32.gmra.mxu0 %v352
    %v731 = vpop.f32.mrf.mxu0
    %v732 = vadd.f32 %v691, %v731
    %733 = vmatmul.f32.gmra.mxu0 %v353
    %v734 = vpop.f32.mrf.mxu0
    %v735 = vadd.f32 %v694, %v734
    %736 = vmatmul.f32.gmra.mxu0 %v354
    %v737 = vpop.f32.mrf.mxu0
    %v738 = vadd.f32 %v697, %v737
    %739 = vdwg.mxu0
    %s740 = scalar_lea.vmem [#allocation5], 128
    %v741 = vld [vmem:[%s740] sm:$0xf]
    %v742 = vld [vmem:[%s740 + $0x4] sm:$0xf]
    %v743 = vld [vmem:[%s740 + $0x8] sm:$0xf]
    %v744 = vld [vmem:[%s740 + $0xc] sm:$0xf]
    %v745 = vld [vmem:[%s740 + $0x10] sm:$0xf]
    %v746 = vld [vmem:[%s740 + $0x14] sm:$0xf]
    %v747 = vld [vmem:[%s740 + $0x18] sm:$0xf]
    %v748 = vld [vmem:[%s740 + $0x1c] sm:$0xf]
    %v749 = vld [vmem:[%s740 + $0x20] sm:$0xf]
    %v750 = vld [vmem:[%s740 + $0x24] sm:$0xf]
    %v751 = vld [vmem:[%s740 + $0x28] sm:$0xf]
    %v752 = vld [vmem:[%s740 + $0x2c] sm:$0xf]
    %v753 = vld [vmem:[%s740 + $0x30] sm:$0xf]
    %v754 = vld [vmem:[%s740 + $0x34] sm:$0xf]
    %v755 = vld [vmem:[%s740 + $0x38] sm:$0xf]
    %v756 = vld [vmem:[%s740 + $0x3c] sm:$0xf]
    %v773 = vunpack.c.l.b16 %v741
    %v774 = vunpack.c.l.b16 %v742
    %v775 = vunpack.c.l.b16 %v743
    %v776 = vunpack.c.l.b16 %v744
    %v777 = vunpack.c.l.b16 %v745
    %v778 = vunpack.c.l.b16 %v746
    %v779 = vunpack.c.l.b16 %v747
    %v780 = vunpack.c.l.b16 %v748
    %v781 = vunpack.c.l.b16 %v749
    %v782 = vunpack.c.l.b16 %v750
    %v783 = vunpack.c.l.b16 %v751
    %v784 = vunpack.c.l.b16 %v752
    %v785 = vunpack.c.l.b16 %v753
    %v786 = vunpack.c.l.b16 %v754
    %v787 = vunpack.c.l.b16 %v755
    %v788 = vunpack.c.l.b16 %v756
    %v789 = vpack.c.b16 %v774, %v773
    %v790 = vpack.c.b16 %v776, %v775
    %v791 = vpack.c.b16 %v778, %v777
    %v792 = vpack.c.b16 %v780, %v779
    %v793 = vpack.c.b16 %v782, %v781
    %v794 = vpack.c.b16 %v784, %v783
    %v795 = vpack.c.b16 %v786, %v785
    %v796 = vpack.c.b16 %v788, %v787
    %805 = vmatpush.bf16.msra.mxu0 %v796
    %806 = vmatpush.bf16.msra.mxu0 %v795
    %807 = vmatpush.bf16.msra.mxu0 %v794
    %808 = vmatpush.bf16.msra.mxu0 %v793
    %809 = vmatpush.bf16.msra.mxu0 %v792
    %810 = vmatpush.bf16.msra.mxu0 %v791
    %811 = vmatpush.bf16.msra.mxu0 %v790
    %812 = vmatpush.bf16.msra.mxu0 %v789
    %813 = vmatmul.bf16.gmra.mxu0 %v77
    %v814 = vpop.f32.mrf.mxu0
    %v815 = vadd.f32 0.0, %v814
    %v816 = vpop.f32.mrf.mxu0
    %v817 = vadd.f32 0.0, %v816
    %818 = vmatmul.bf16.gmra.mxu0 %v78
    %v819 = vpop.f32.mrf.mxu0
    %v820 = vadd.f32 0.0, %v819
    %v821 = vpop.f32.mrf.mxu0
    %v822 = vadd.f32 0.0, %v821
    %823 = vmatmul.bf16.gmra.mxu0 %v79
    %v824 = vpop.f32.mrf.mxu0
    %v825 = vadd.f32 0.0, %v824
    %v826 = vpop.f32.mrf.mxu0
    %v827 = vadd.f32 0.0, %v826
    %828 = vmatmul.bf16.gmra.mxu0 %v80
    %v829 = vpop.f32.mrf.mxu0
    %v830 = vadd.f32 0.0, %v829
    %v831 = vpop.f32.mrf.mxu0
    %v832 = vadd.f32 0.0, %v831
    %833 = vdwg.mxu0
    %v834 = vsub.f32 %v177, %v815
    %v835 = vsub.f32 %v177, %v817
    %v836 = vsub.f32 %v177, %v820
    %v837 = vsub.f32 %v177, %v822
    %v838 = vsub.f32 %v177, %v825
    %v839 = vsub.f32 %v177, %v827
    %v840 = vsub.f32 %v177, %v830
    %v841 = vsub.f32 %v177, %v832
    %842 = vmin.xlane.f32.xlu0 %v834
    %v843 = vpop.xlane.xlu0 %842
    %844 = vmin.xlane.f32.xlu0 %v835
    %v845 = vpop.xlane.xlu0 %844
    %846 = vmin.xlane.f32.xlu0 %v836
    %v847 = vpop.xlane.xlu0 %846
    %848 = vmin.xlane.f32.xlu0 %v837
    %v849 = vpop.xlane.xlu0 %848
    %850 = vmin.xlane.f32.xlu0 %v838
    %v851 = vpop.xlane.xlu0 %850
    %852 = vmin.xlane.f32.xlu0 %v839
    %v853 = vpop.xlane.xlu0 %852
    %854 = vmin.xlane.f32.xlu0 %v840
    %v855 = vpop.xlane.xlu0 %854
    %856 = vmin.xlane.f32.xlu0 %v841
    %v857 = vpop.xlane.xlu0 %856
    %vm858 = vcmp.le.f32.partialorder %v834, %v843
    %vm859 = vcmp.le.f32.partialorder %v835, %v845
    %vm860 = vcmp.le.f32.partialorder %v836, %v847
    %vm861 = vcmp.le.f32.partialorder %v837, %v849
    %vm862 = vcmp.le.f32.partialorder %v838, %v851
    %vm863 = vcmp.le.f32.partialorder %v839, %v853
    %vm864 = vcmp.le.f32.partialorder %v840, %v855
    %vm865 = vcmp.le.f32.partialorder %v841, %v857
    %v866 = vsel %vm858, %v82, 128
    %v867 = vsel %vm859, %v82, 128
    %v868 = vsel %vm860, %v82, 128
    %v869 = vsel %vm861, %v82, 128
    %v870 = vsel %vm862, %v82, 128
    %v871 = vsel %vm863, %v82, 128
    %v872 = vsel %vm864, %v82, 128
    %v873 = vsel %vm865, %v82, 128
    %v874 = vand.u32 %v866, 65535
    %v875 = vshra.s32 %v866, 16
    %v876 = vcvt.s32.f32 %v874
    %v877 = vcvt.s32.f32 %v875
    %878 = vmin.xlane.f32.xlu0 %v877
    %v879 = vpop.xlane.xlu0 %878
    %vm880 = vcmp.eq.f32.partialorder %v877, %v879
    %v881 = vsel %vm880, %v876, inf
    %882 = vmin.xlane.f32.xlu0 %v881
    %v883 = vpop.xlane.xlu0 %882
    %v884 = vcvt.f32.s32 %v883
    %v885 = vcvt.f32.s32 %v879
    %v886 = vshll.u32 %v885, 16
    %v887 = vadd.s32 %v886, %v884
    %v888 = vand.u32 %v867, 65535
    %v889 = vshra.s32 %v867, 16
    %v890 = vcvt.s32.f32 %v888
    %v891 = vcvt.s32.f32 %v889
    %892 = vmin.xlane.f32.xlu0 %v891
    %v893 = vpop.xlane.xlu0 %892
    %vm894 = vcmp.eq.f32.partialorder %v891, %v893
    %v895 = vsel %vm894, %v890, inf
    %896 = vmin.xlane.f32.xlu0 %v895
    %v897 = vpop.xlane.xlu0 %896
    %v898 = vcvt.f32.s32 %v897
    %v899 = vcvt.f32.s32 %v893
    %v900 = vshll.u32 %v899, 16
    %v901 = vadd.s32 %v900, %v898
    %v902 = vand.u32 %v868, 65535
    %v903 = vshra.s32 %v868, 16
    %v904 = vcvt.s32.f32 %v902
    %v905 = vcvt.s32.f32 %v903
    %906 = vmin.xlane.f32.xlu0 %v905
    %v907 = vpop.xlane.xlu0 %906
    %vm908 = vcmp.eq.f32.partialorder %v905, %v907
    %v909 = vsel %vm908, %v904, inf
    %910 = vmin.xlane.f32.xlu0 %v909
    %v911 = vpop.xlane.xlu0 %910
    %v912 = vcvt.f32.s32 %v911
    %v913 = vcvt.f32.s32 %v907
    %v914 = vshll.u32 %v913, 16
    %v915 = vadd.s32 %v914, %v912
    %v916 = vand.u32 %v869, 65535
    %v917 = vshra.s32 %v869, 16
    %v918 = vcvt.s32.f32 %v916
    %v919 = vcvt.s32.f32 %v917
    %920 = vmin.xlane.f32.xlu0 %v919
    %v921 = vpop.xlane.xlu0 %920
    %vm922 = vcmp.eq.f32.partialorder %v919, %v921
    %v923 = vsel %vm922, %v918, inf
    %924 = vmin.xlane.f32.xlu0 %v923
    %v925 = vpop.xlane.xlu0 %924
    %v926 = vcvt.f32.s32 %v925
    %v927 = vcvt.f32.s32 %v921
    %v928 = vshll.u32 %v927, 16
    %v929 = vadd.s32 %v928, %v926
    %v930 = vand.u32 %v870, 65535
    %v931 = vshra.s32 %v870, 16
    %v932 = vcvt.s32.f32 %v930
    %v933 = vcvt.s32.f32 %v931
    %934 = vmin.xlane.f32.xlu0 %v933
    %v935 = vpop.xlane.xlu0 %934
    %vm936 = vcmp.eq.f32.partialorder %v933, %v935
    %v937 = vsel %vm936, %v932, inf
    %938 = vmin.xlane.f32.xlu0 %v937
    %v939 = vpop.xlane.xlu0 %938
    %v940 = vcvt.f32.s32 %v939
    %v941 = vcvt.f32.s32 %v935
    %v942 = vshll.u32 %v941, 16
    %v943 = vadd.s32 %v942, %v940
    %v944 = vand.u32 %v871, 65535
    %v945 = vshra.s32 %v871, 16
    %v946 = vcvt.s32.f32 %v944
    %v947 = vcvt.s32.f32 %v945
    %948 = vmin.xlane.f32.xlu0 %v947
    %v949 = vpop.xlane.xlu0 %948
    %vm950 = vcmp.eq.f32.partialorder %v947, %v949
    %v951 = vsel %vm950, %v946, inf
    %952 = vmin.xlane.f32.xlu0 %v951
    %v953 = vpop.xlane.xlu0 %952
    %v954 = vcvt.f32.s32 %v953
    %v955 = vcvt.f32.s32 %v949
    %v956 = vshll.u32 %v955, 16
    %v957 = vadd.s32 %v956, %v954
    %v958 = vand.u32 %v872, 65535
    %v959 = vshra.s32 %v872, 16
    %v960 = vcvt.s32.f32 %v958
    %v961 = vcvt.s32.f32 %v959
    %962 = vmin.xlane.f32.xlu0 %v961
    %v963 = vpop.xlane.xlu0 %962
    %vm964 = vcmp.eq.f32.partialorder %v961, %v963
    %v965 = vsel %vm964, %v960, inf
    %966 = vmin.xlane.f32.xlu0 %v965
    %v967 = vpop.xlane.xlu0 %966
    %v968 = vcvt.f32.s32 %v967
    %v969 = vcvt.f32.s32 %v963
    %v970 = vshll.u32 %v969, 16
    %v971 = vadd.s32 %v970, %v968
    %v972 = vand.u32 %v873, 65535
    %v973 = vshra.s32 %v873, 16
    %v974 = vcvt.s32.f32 %v972
    %v975 = vcvt.s32.f32 %v973
    %976 = vmin.xlane.f32.xlu0 %v975
    %v977 = vpop.xlane.xlu0 %976
    %vm978 = vcmp.eq.f32.partialorder %v975, %v977
    %v979 = vsel %vm978, %v974, inf
    %980 = vmin.xlane.f32.xlu0 %v979
    %v981 = vpop.xlane.xlu0 %980
    %v982 = vcvt.f32.s32 %v981
    %v983 = vcvt.f32.s32 %v977
    %v984 = vshll.u32 %v983, 16
    %v985 = vadd.s32 %v984, %v982
    %vm986 = vcmp.eq.s32.totalorder %v82, %v887
    %vm987 = vcmp.eq.s32.totalorder %v82, %v901
    %vm988 = vcmp.eq.s32.totalorder %v82, %v915
    %vm989 = vcmp.eq.s32.totalorder %v82, %v929
    %vm990 = vcmp.eq.s32.totalorder %v82, %v943
    %vm991 = vcmp.eq.s32.totalorder %v82, %v957
    %vm992 = vcmp.eq.s32.totalorder %v82, %v971
    %vm993 = vcmp.eq.s32.totalorder %v82, %v985
    %v994 = vsel %vm986, 1, 0
    %v995 = vsel %vm987, 1, 0
    %v996 = vsel %vm988, 1, 0
    %v997 = vsel %vm989, 1, 0
    %v998 = vsel %vm990, 1, 0
    %v999 = vsel %vm991, 1, 0
    %v1000 = vsel %vm992, 1, 0
    %v1001 = vsel %vm993, 1, 0
    %v1002 = vcvt.s32.f32 %v994
    %v1003 = vcvt.s32.f32 %v995
    %v1004 = vcvt.s32.f32 %v996
    %v1005 = vcvt.s32.f32 %v997
    %v1006 = vcvt.s32.f32 %v998
    %v1007 = vcvt.s32.f32 %v999
    %v1008 = vcvt.s32.f32 %v1000
    %v1009 = vcvt.s32.f32 %v1001
    %s1010 = scalar_lea.vmem [#allocation7], 256
    %v1011 = vld [vmem:[%s1010] sm:$0xff]
    %v1012 = vld [vmem:[%s1010 + $0x8] sm:$0xff]
    %v1013 = vld [vmem:[%s1010 + $0x10] sm:$0xff]
    %v1014 = vld [vmem:[%s1010 + $0x18] sm:$0xff]
    %v1015 = vld [vmem:[%s1010 + $0x20] sm:$0xff]
    %v1016 = vld [vmem:[%s1010 + $0x28] sm:$0xff]
    %v1017 = vld [vmem:[%s1010 + $0x30] sm:$0xff]
    %v1018 = vld [vmem:[%s1010 + $0x38] sm:$0xff]
    %v1019 = vld [vmem:[%s1010 + $0x40] sm:$0xff]
    %v1020 = vld [vmem:[%s1010 + $0x48] sm:$0xff]
    %v1021 = vld [vmem:[%s1010 + $0x50] sm:$0xff]
    %v1022 = vld [vmem:[%s1010 + $0x58] sm:$0xff]
    %v1023 = vld [vmem:[%s1010 + $0x60] sm:$0xff]
    %v1024 = vld [vmem:[%s1010 + $0x68] sm:$0xff]
    %v1025 = vld [vmem:[%s1010 + $0x70] sm:$0xff]
    %v1026 = vld [vmem:[%s1010 + $0x78] sm:$0xff]
    %1027 = vmatpush.msra.mxu0 %v1026
    %1028 = vmatpush.msra.mxu0 %v1025
    %1029 = vmatpush.msra.mxu0 %v1024
    %1030 = vmatpush.msra.mxu0 %v1023
    %1031 = vmatpush.msra.mxu0 %v1022
    %1032 = vmatpush.msra.mxu0 %v1021
    %1033 = vmatpush.msra.mxu0 %v1020
    %1034 = vmatpush.msra.mxu0 %v1019
    %1035 = vmatpush.msra.mxu0 %v1018
    %1036 = vmatpush.msra.mxu0 %v1017
    %1037 = vmatpush.msra.mxu0 %v1016
    %1038 = vmatpush.msra.mxu0 %v1015
    %1039 = vmatpush.msra.mxu0 %v1014
    %1040 = vmatpush.msra.mxu0 %v1013
    %1041 = vmatpush.msra.mxu0 %v1012
    %1042 = vmatpush.msra.mxu0 %v1011
    %1043 = vmatmul.f32.gmra.mxu0 %v1002
    %v1044 = vpop.f32.mrf.mxu0
    %v1045 = vadd.f32 0.0, %v1044
    %1046 = vmatmul.f32.gmra.mxu0 %v1003
    %v1047 = vpop.f32.mrf.mxu0
    %v1048 = vadd.f32 0.0, %v1047
    %1049 = vmatmul.f32.gmra.mxu0 %v1004
    %v1050 = vpop.f32.mrf.mxu0
    %v1051 = vadd.f32 0.0, %v1050
    %1052 = vmatmul.f32.gmra.mxu0 %v1005
    %v1053 = vpop.f32.mrf.mxu0
    %v1054 = vadd.f32 0.0, %v1053
    %1055 = vmatmul.f32.gmra.mxu0 %v1006
    %v1056 = vpop.f32.mrf.mxu0
    %v1057 = vadd.f32 0.0, %v1056
    %1058 = vmatmul.f32.gmra.mxu0 %v1007
    %v1059 = vpop.f32.mrf.mxu0
    %v1060 = vadd.f32 0.0, %v1059
    %1061 = vmatmul.f32.gmra.mxu0 %v1008
    %v1062 = vpop.f32.mrf.mxu0
    %v1063 = vadd.f32 0.0, %v1062
    %1064 = vmatmul.f32.gmra.mxu0 %v1009
    %v1065 = vpop.f32.mrf.mxu0
    %v1066 = vadd.f32 0.0, %v1065
    %1067 = vdwg.mxu0
    %v1068 = vadd.f32 %v717, %v1045
    %v1069 = vadd.f32 %v720, %v1048
    %v1070 = vadd.f32 %v723, %v1051
    %v1071 = vadd.f32 %v726, %v1054
    %v1072 = vadd.f32 %v729, %v1057
    %v1073 = vadd.f32 %v732, %v1060
    %v1074 = vadd.f32 %v735, %v1063
    %v1075 = vadd.f32 %v738, %v1066
    %s1076 = scalar_lea.vmem [#allocation5], 192
    %v1077 = vld [vmem:[%s1076] sm:$0xf]
    %v1078 = vld [vmem:[%s1076 + $0x4] sm:$0xf]
    %v1079 = vld [vmem:[%s1076 + $0x8] sm:$0xf]
    %v1080 = vld [vmem:[%s1076 + $0xc] sm:$0xf]
    %v1081 = vld [vmem:[%s1076 + $0x10] sm:$0xf]
    %v1082 = vld [vmem:[%s1076 + $0x14] sm:$0xf]
    %v1083 = vld [vmem:[%s1076 + $0x18] sm:$0xf]
    %v1084 = vld [vmem:[%s1076 + $0x1c] sm:$0xf]
    %v1085 = vld [vmem:[%s1076 + $0x20] sm:$0xf]
    %v1086 = vld [vmem:[%s1076 + $0x24] sm:$0xf]
    %v1087 = vld [vmem:[%s1076 + $0x28] sm:$0xf]
    %v1088 = vld [vmem:[%s1076 + $0x2c] sm:$0xf]
    %v1089 = vld [vmem:[%s1076 + $0x30] sm:$0xf]
    %v1090 = vld [vmem:[%s1076 + $0x34] sm:$0xf]
    %v1091 = vld [vmem:[%s1076 + $0x38] sm:$0xf]
    %v1092 = vld [vmem:[%s1076 + $0x3c] sm:$0xf]
    %v1109 = vunpack.c.l.b16 %v1077
    %v1110 = vunpack.c.l.b16 %v1078
    %v1111 = vunpack.c.l.b16 %v1079
    %v1112 = vunpack.c.l.b16 %v1080
    %v1113 = vunpack.c.l.b16 %v1081
    %v1114 = vunpack.c.l.b16 %v1082
    %v1115 = vunpack.c.l.b16 %v1083
    %v1116 = vunpack.c.l.b16 %v1084
    %v1117 = vunpack.c.l.b16 %v1085
    %v1118 = vunpack.c.l.b16 %v1086
    %v1119 = vunpack.c.l.b16 %v1087
    %v1120 = vunpack.c.l.b16 %v1088
    %v1121 = vunpack.c.l.b16 %v1089
    %v1122 = vunpack.c.l.b16 %v1090
    %v1123 = vunpack.c.l.b16 %v1091
    %v1124 = vunpack.c.l.b16 %v1092
    %v1125 = vpack.c.b16 %v1110, %v1109
    %v1126 = vpack.c.b16 %v1112, %v1111
    %v1127 = vpack.c.b16 %v1114, %v1113
    %v1128 = vpack.c.b16 %v1116, %v1115
    %v1129 = vpack.c.b16 %v1118, %v1117
    %v1130 = vpack.c.b16 %v1120, %v1119
    %v1131 = vpack.c.b16 %v1122, %v1121
    %v1132 = vpack.c.b16 %v1124, %v1123
    %1141 = vmatpush.bf16.msra.mxu0 %v1132
    %1142 = vmatpush.bf16.msra.mxu0 %v1131
    %1143 = vmatpush.bf16.msra.mxu0 %v1130
    %1144 = vmatpush.bf16.msra.mxu0 %v1129
    %1145 = vmatpush.bf16.msra.mxu0 %v1128
    %1146 = vmatpush.bf16.msra.mxu0 %v1127
    %1147 = vmatpush.bf16.msra.mxu0 %v1126
    %1148 = vmatpush.bf16.msra.mxu0 %v1125
    %1149 = vmatmul.bf16.gmra.mxu0 %v77
    %v1150 = vpop.f32.mrf.mxu0
    %v1151 = vadd.f32 0.0, %v1150
    %v1152 = vpop.f32.mrf.mxu0
    %v1153 = vadd.f32 0.0, %v1152
    %1154 = vmatmul.bf16.gmra.mxu0 %v78
    %v1155 = vpop.f32.mrf.mxu0
    %v1156 = vadd.f32 0.0, %v1155
    %v1157 = vpop.f32.mrf.mxu0
    %v1158 = vadd.f32 0.0, %v1157
    %1159 = vmatmul.bf16.gmra.mxu0 %v79
    %v1160 = vpop.f32.mrf.mxu0
    %v1161 = vadd.f32 0.0, %v1160
    %v1162 = vpop.f32.mrf.mxu0
    %v1163 = vadd.f32 0.0, %v1162
    %1164 = vmatmul.bf16.gmra.mxu0 %v80
    %v1165 = vpop.f32.mrf.mxu0
    %v1166 = vadd.f32 0.0, %v1165
    %v1167 = vpop.f32.mrf.mxu0
    %v1168 = vadd.f32 0.0, %v1167
    %1169 = vdwg.mxu0
    %v1170 = vsub.f32 %v177, %v1151
    %v1171 = vsub.f32 %v177, %v1153
    %v1172 = vsub.f32 %v177, %v1156
    %v1173 = vsub.f32 %v177, %v1158
    %v1174 = vsub.f32 %v177, %v1161
    %v1175 = vsub.f32 %v177, %v1163
    %v1176 = vsub.f32 %v177, %v1166
    %v1177 = vsub.f32 %v177, %v1168
    %1178 = vmin.xlane.f32.xlu0 %v1170
    %v1179 = vpop.xlane.xlu0 %1178
    %1180 = vmin.xlane.f32.xlu0 %v1171
    %v1181 = vpop.xlane.xlu0 %1180
    %1182 = vmin.xlane.f32.xlu0 %v1172
    %v1183 = vpop.xlane.xlu0 %1182
    %1184 = vmin.xlane.f32.xlu0 %v1173
    %v1185 = vpop.xlane.xlu0 %1184
    %1186 = vmin.xlane.f32.xlu0 %v1174
    %v1187 = vpop.xlane.xlu0 %1186
    %1188 = vmin.xlane.f32.xlu0 %v1175
    %v1189 = vpop.xlane.xlu0 %1188
    %1190 = vmin.xlane.f32.xlu0 %v1176
    %v1191 = vpop.xlane.xlu0 %1190
    %1192 = vmin.xlane.f32.xlu0 %v1177
    %v1193 = vpop.xlane.xlu0 %1192
    %vm1194 = vcmp.le.f32.partialorder %v1170, %v1179
    %vm1195 = vcmp.le.f32.partialorder %v1171, %v1181
    %vm1196 = vcmp.le.f32.partialorder %v1172, %v1183
    %vm1197 = vcmp.le.f32.partialorder %v1173, %v1185
    %vm1198 = vcmp.le.f32.partialorder %v1174, %v1187
    %vm1199 = vcmp.le.f32.partialorder %v1175, %v1189
    %vm1200 = vcmp.le.f32.partialorder %v1176, %v1191
    %vm1201 = vcmp.le.f32.partialorder %v1177, %v1193
    %v1202 = vsel %vm1194, %v82, 128
    %v1203 = vsel %vm1195, %v82, 128
    %v1204 = vsel %vm1196, %v82, 128
    %v1205 = vsel %vm1197, %v82, 128
    %v1206 = vsel %vm1198, %v82, 128
    %v1207 = vsel %vm1199, %v82, 128
    %v1208 = vsel %vm1200, %v82, 128
    %v1209 = vsel %vm1201, %v82, 128
    %v1210 = vand.u32 %v1202, 65535
    %v1211 = vshra.s32 %v1202, 16
    %v1212 = vcvt.s32.f32 %v1210
    %v1213 = vcvt.s32.f32 %v1211
    %1214 = vmin.xlane.f32.xlu0 %v1213
    %v1215 = vpop.xlane.xlu0 %1214
    %vm1216 = vcmp.eq.f32.partialorder %v1213, %v1215
    %v1217 = vsel %vm1216, %v1212, inf
    %1218 = vmin.xlane.f32.xlu0 %v1217
    %v1219 = vpop.xlane.xlu0 %1218
    %v1220 = vcvt.f32.s32 %v1219
    %v1221 = vcvt.f32.s32 %v1215
    %v1222 = vshll.u32 %v1221, 16
    %v1223 = vadd.s32 %v1222, %v1220
    %v1224 = vand.u32 %v1203, 65535
    %v1225 = vshra.s32 %v1203, 16
    %v1226 = vcvt.s32.f32 %v1224
    %v1227 = vcvt.s32.f32 %v1225
    %1228 = vmin.xlane.f32.xlu0 %v1227
    %v1229 = vpop.xlane.xlu0 %1228
    %vm1230 = vcmp.eq.f32.partialorder %v1227, %v1229
    %v1231 = vsel %vm1230, %v1226, inf
    %1232 = vmin.xlane.f32.xlu0 %v1231
    %v1233 = vpop.xlane.xlu0 %1232
    %v1234 = vcvt.f32.s32 %v1233
    %v1235 = vcvt.f32.s32 %v1229
    %v1236 = vshll.u32 %v1235, 16
    %v1237 = vadd.s32 %v1236, %v1234
    %v1238 = vand.u32 %v1204, 65535
    %v1239 = vshra.s32 %v1204, 16
    %v1240 = vcvt.s32.f32 %v1238
    %v1241 = vcvt.s32.f32 %v1239
    %1242 = vmin.xlane.f32.xlu0 %v1241
    %v1243 = vpop.xlane.xlu0 %1242
    %vm1244 = vcmp.eq.f32.partialorder %v1241, %v1243
    %v1245 = vsel %vm1244, %v1240, inf
    %1246 = vmin.xlane.f32.xlu0 %v1245
    %v1247 = vpop.xlane.xlu0 %1246
    %v1248 = vcvt.f32.s32 %v1247
    %v1249 = vcvt.f32.s32 %v1243
    %v1250 = vshll.u32 %v1249, 16
    %v1251 = vadd.s32 %v1250, %v1248
    %v1252 = vand.u32 %v1205, 65535
    %v1253 = vshra.s32 %v1205, 16
    %v1254 = vcvt.s32.f32 %v1252
    %v1255 = vcvt.s32.f32 %v1253
    %1256 = vmin.xlane.f32.xlu0 %v1255
    %v1257 = vpop.xlane.xlu0 %1256
    %vm1258 = vcmp.eq.f32.partialorder %v1255, %v1257
    %v1259 = vsel %vm1258, %v1254, inf
    %1260 = vmin.xlane.f32.xlu0 %v1259
    %v1261 = vpop.xlane.xlu0 %1260
    %v1262 = vcvt.f32.s32 %v1261
    %v1263 = vcvt.f32.s32 %v1257
    %v1264 = vshll.u32 %v1263, 16
    %v1265 = vadd.s32 %v1264, %v1262
    %v1266 = vand.u32 %v1206, 65535
    %v1267 = vshra.s32 %v1206, 16
    %v1268 = vcvt.s32.f32 %v1266
    %v1269 = vcvt.s32.f32 %v1267
    %1270 = vmin.xlane.f32.xlu0 %v1269
    %v1271 = vpop.xlane.xlu0 %1270
    %vm1272 = vcmp.eq.f32.partialorder %v1269, %v1271
    %v1273 = vsel %vm1272, %v1268, inf
    %1274 = vmin.xlane.f32.xlu0 %v1273
    %v1275 = vpop.xlane.xlu0 %1274
    %v1276 = vcvt.f32.s32 %v1275
    %v1277 = vcvt.f32.s32 %v1271
    %v1278 = vshll.u32 %v1277, 16
    %v1279 = vadd.s32 %v1278, %v1276
    %v1280 = vand.u32 %v1207, 65535
    %v1281 = vshra.s32 %v1207, 16
    %v1282 = vcvt.s32.f32 %v1280
    %v1283 = vcvt.s32.f32 %v1281
    %1284 = vmin.xlane.f32.xlu0 %v1283
    %v1285 = vpop.xlane.xlu0 %1284
    %vm1286 = vcmp.eq.f32.partialorder %v1283, %v1285
    %v1287 = vsel %vm1286, %v1282, inf
    %1288 = vmin.xlane.f32.xlu0 %v1287
    %v1289 = vpop.xlane.xlu0 %1288
    %v1290 = vcvt.f32.s32 %v1289
    %v1291 = vcvt.f32.s32 %v1285
    %v1292 = vshll.u32 %v1291, 16
    %v1293 = vadd.s32 %v1292, %v1290
    %v1294 = vand.u32 %v1208, 65535
    %v1295 = vshra.s32 %v1208, 16
    %v1296 = vcvt.s32.f32 %v1294
    %v1297 = vcvt.s32.f32 %v1295
    %1298 = vmin.xlane.f32.xlu0 %v1297
    %v1299 = vpop.xlane.xlu0 %1298
    %vm1300 = vcmp.eq.f32.partialorder %v1297, %v1299
    %v1301 = vsel %vm1300, %v1296, inf
    %1302 = vmin.xlane.f32.xlu0 %v1301
    %v1303 = vpop.xlane.xlu0 %1302
    %v1304 = vcvt.f32.s32 %v1303
    %v1305 = vcvt.f32.s32 %v1299
    %v1306 = vshll.u32 %v1305, 16
    %v1307 = vadd.s32 %v1306, %v1304
    %v1308 = vand.u32 %v1209, 65535
    %v1309 = vshra.s32 %v1209, 16
    %v1310 = vcvt.s32.f32 %v1308
    %v1311 = vcvt.s32.f32 %v1309
    %1312 = vmin.xlane.f32.xlu0 %v1311
    %v1313 = vpop.xlane.xlu0 %1312
    %vm1314 = vcmp.eq.f32.partialorder %v1311, %v1313
    %v1315 = vsel %vm1314, %v1310, inf
    %1316 = vmin.xlane.f32.xlu0 %v1315
    %v1317 = vpop.xlane.xlu0 %1316
    %v1318 = vcvt.f32.s32 %v1317
    %v1319 = vcvt.f32.s32 %v1313
    %v1320 = vshll.u32 %v1319, 16
    %v1321 = vadd.s32 %v1320, %v1318
    %vm1322 = vcmp.eq.s32.totalorder %v82, %v1223
    %vm1323 = vcmp.eq.s32.totalorder %v82, %v1237
    %vm1324 = vcmp.eq.s32.totalorder %v82, %v1251
    %vm1325 = vcmp.eq.s32.totalorder %v82, %v1265
    %vm1326 = vcmp.eq.s32.totalorder %v82, %v1279
    %vm1327 = vcmp.eq.s32.totalorder %v82, %v1293
    %vm1328 = vcmp.eq.s32.totalorder %v82, %v1307
    %vm1329 = vcmp.eq.s32.totalorder %v82, %v1321
    %v1330 = vsel %vm1322, 1, 0
    %v1331 = vsel %vm1323, 1, 0
    %v1332 = vsel %vm1324, 1, 0
    %v1333 = vsel %vm1325, 1, 0
    %v1334 = vsel %vm1326, 1, 0
    %v1335 = vsel %vm1327, 1, 0
    %v1336 = vsel %vm1328, 1, 0
    %v1337 = vsel %vm1329, 1, 0
    %v1338 = vcvt.s32.f32 %v1330
    %v1339 = vcvt.s32.f32 %v1331
    %v1340 = vcvt.s32.f32 %v1332
    %v1341 = vcvt.s32.f32 %v1333
    %v1342 = vcvt.s32.f32 %v1334
    %v1343 = vcvt.s32.f32 %v1335
    %v1344 = vcvt.s32.f32 %v1336
    %v1345 = vcvt.s32.f32 %v1337
    %s1346 = scalar_lea.vmem [#allocation7], 384
    %v1347 = vld [vmem:[%s1346] sm:$0xff]
    %v1348 = vld [vmem:[%s1346 + $0x8] sm:$0xff]
    %v1349 = vld [vmem:[%s1346 + $0x10] sm:$0xff]
    %v1350 = vld [vmem:[%s1346 + $0x18] sm:$0xff]
    %v1351 = vld [vmem:[%s1346 + $0x20] sm:$0xff]
    %v1352 = vld [vmem:[%s1346 + $0x28] sm:$0xff]
    %v1353 = vld [vmem:[%s1346 + $0x30] sm:$0xff]
    %v1354 = vld [vmem:[%s1346 + $0x38] sm:$0xff]
    %v1355 = vld [vmem:[%s1346 + $0x40] sm:$0xff]
    %v1356 = vld [vmem:[%s1346 + $0x48] sm:$0xff]
    %v1357 = vld [vmem:[%s1346 + $0x50] sm:$0xff]
    %v1358 = vld [vmem:[%s1346 + $0x58] sm:$0xff]
    %v1359 = vld [vmem:[%s1346 + $0x60] sm:$0xff]
    %v1360 = vld [vmem:[%s1346 + $0x68] sm:$0xff]
    %v1361 = vld [vmem:[%s1346 + $0x70] sm:$0xff]
    %v1362 = vld [vmem:[%s1346 + $0x78] sm:$0xff]
    %1363 = vmatpush.msra.mxu0 %v1362
    %1364 = vmatpush.msra.mxu0 %v1361
    %1365 = vmatpush.msra.mxu0 %v1360
    %1366 = vmatpush.msra.mxu0 %v1359
    %1367 = vmatpush.msra.mxu0 %v1358
    %1368 = vmatpush.msra.mxu0 %v1357
    %1369 = vmatpush.msra.mxu0 %v1356
    %1370 = vmatpush.msra.mxu0 %v1355
    %1371 = vmatpush.msra.mxu0 %v1354
    %1372 = vmatpush.msra.mxu0 %v1353
    %1373 = vmatpush.msra.mxu0 %v1352
    %1374 = vmatpush.msra.mxu0 %v1351
    %1375 = vmatpush.msra.mxu0 %v1350
    %1376 = vmatpush.msra.mxu0 %v1349
    %1377 = vmatpush.msra.mxu0 %v1348
    %1378 = vmatpush.msra.mxu0 %v1347
    %1379 = vmatmul.f32.gmra.mxu0 %v1338
    %v1380 = vpop.f32.mrf.mxu0
    %v1381 = vadd.f32 0.0, %v1380
    %1382 = vmatmul.f32.gmra.mxu0 %v1339
    %v1383 = vpop.f32.mrf.mxu0
    %v1384 = vadd.f32 0.0, %v1383
    %1385 = vmatmul.f32.gmra.mxu0 %v1340
    %v1386 = vpop.f32.mrf.mxu0
    %v1387 = vadd.f32 0.0, %v1386
    %1388 = vmatmul.f32.gmra.mxu0 %v1341
    %v1389 = vpop.f32.mrf.mxu0
    %v1390 = vadd.f32 0.0, %v1389
    %1391 = vmatmul.f32.gmra.mxu0 %v1342
    %v1392 = vpop.f32.mrf.mxu0
    %v1393 = vadd.f32 0.0, %v1392
    %1394 = vmatmul.f32.gmra.mxu0 %v1343
    %v1395 = vpop.f32.mrf.mxu0
    %v1396 = vadd.f32 0.0, %v1395
    %1397 = vmatmul.f32.gmra.mxu0 %v1344
    %v1398 = vpop.f32.mrf.mxu0
    %v1399 = vadd.f32 0.0, %v1398
    %1400 = vmatmul.f32.gmra.mxu0 %v1345
    %v1401 = vpop.f32.mrf.mxu0
    %v1402 = vadd.f32 0.0, %v1401
    %1403 = vdwg.mxu0
    %v1404 = vadd.f32 %v1068, %v1381
    %v1405 = vadd.f32 %v1069, %v1384
    %v1406 = vadd.f32 %v1070, %v1387
    %v1407 = vadd.f32 %v1071, %v1390
    %v1408 = vadd.f32 %v1072, %v1393
    %v1409 = vadd.f32 %v1073, %v1396
    %v1410 = vadd.f32 %v1074, %v1399
    %v1411 = vadd.f32 %v1075, %v1402
    %v1412 = vsub.f32 %v1404, %v69
    %v1413 = vsub.f32 %v1405, %v70
    %v1414 = vsub.f32 %v1406, %v71
    %v1415 = vsub.f32 %v1407, %v72
    %v1416 = vsub.f32 %v1408, %v73
    %v1417 = vsub.f32 %v1409, %v74
    %v1418 = vsub.f32 %v1410, %v75
    %v1419 = vsub.f32 %v1411, %v76
    %v1420 = vmul.f32 %v1412, %v1412
    %v1421 = vmul.f32 %v1413, %v1413
    %v1422 = vmul.f32 %v1414, %v1414
    %v1423 = vmul.f32 %v1415, %v1415
    %v1424 = vmul.f32 %v1416, %v1416
    %v1425 = vmul.f32 %v1417, %v1417
    %v1426 = vmul.f32 %v1418, %v1418
    %v1427 = vmul.f32 %v1419, %v1419
    %v1428 = vadd.f32 %v1420, %v1421
    %v1429 = vadd.f32 %v1428, %v1422
    %v1430 = vadd.f32 %v1429, %v1423
    %v1431 = vadd.f32 %v1430, %v1424
    %v1432 = vadd.f32 %v1431, %v1425
    %v1433 = vadd.f32 %v1432, %v1426
    %v1434 = vadd.f32 %v1433, %v1427
    %v1435 = vrot.slane %v1434, 4
    %v1436 = vadd.f32 %v1434, %v1435
    %v1437 = vrot.slane %v1436, 2
    %v1438 = vadd.f32 %v1436, %v1437
    %v1439 = vrot.slane %v1438, 1
    %v1440 = vadd.f32 %v1438, %v1439
    %1441 = vst [vmem:[#allocation8] sm:$0xff] %v1404
    %1442 = vst [vmem:[#allocation8 + $0x8] sm:$0xff] %v1405
    %1443 = vst [vmem:[#allocation8 + $0x10] sm:$0xff] %v1406
    %1444 = vst [vmem:[#allocation8 + $0x18] sm:$0xff] %v1407
    %1445 = vst [vmem:[#allocation8 + $0x20] sm:$0xff] %v1408
    %1446 = vst [vmem:[#allocation8 + $0x28] sm:$0xff] %v1409
    %1447 = vst [vmem:[#allocation8 + $0x30] sm:$0xff] %v1410
    %1448 = vst [vmem:[#allocation8 + $0x38] sm:$0xff] %v1411
    %v1449 = vadd.f32 %v1440, 0.0
    %s1450 = scalar_lea.vmem [#allocation2], 64
    %v1451 = vld [vmem:[%s1450] sm:$0xff]
    %v1452 = vld [vmem:[%s1450 + $0x8] sm:$0xff]
    %v1453 = vld [vmem:[%s1450 + $0x10] sm:$0xff]
    %v1454 = vld [vmem:[%s1450 + $0x18] sm:$0xff]
    %v1455 = vld [vmem:[%s1450 + $0x20] sm:$0xff]
    %v1456 = vld [vmem:[%s1450 + $0x28] sm:$0xff]
    %v1457 = vld [vmem:[%s1450 + $0x30] sm:$0xff]
    %v1458 = vld [vmem:[%s1450 + $0x38] sm:$0xff]
    %v1459 = vpack.c.bf16 %v1452, %v1451
    %v1460 = vpack.c.bf16 %v1454, %v1453
    %v1461 = vpack.c.bf16 %v1456, %v1455
    %v1462 = vpack.c.bf16 %v1458, %v1457
    %v1463 = vld [vmem:[#allocation5] sm:$0xf]
    %v1464 = vld [vmem:[#allocation5 + $0x4] sm:$0xf]
    %v1465 = vld [vmem:[#allocation5 + $0x8] sm:$0xf]
    %v1466 = vld [vmem:[#allocation5 + $0xc] sm:$0xf]
    %v1467 = vld [vmem:[#allocation5 + $0x10] sm:$0xf]
    %v1468 = vld [vmem:[#allocation5 + $0x14] sm:$0xf]
    %v1469 = vld [vmem:[#allocation5 + $0x18] sm:$0xf]
    %v1470 = vld [vmem:[#allocation5 + $0x1c] sm:$0xf]
    %v1471 = vld [vmem:[#allocation5 + $0x20] sm:$0xf]
    %v1472 = vld [vmem:[#allocation5 + $0x24] sm:$0xf]
    %v1473 = vld [vmem:[#allocation5 + $0x28] sm:$0xf]
    %v1474 = vld [vmem:[#allocation5 + $0x2c] sm:$0xf]
    %v1475 = vld [vmem:[#allocation5 + $0x30] sm:$0xf]
    %v1476 = vld [vmem:[#allocation5 + $0x34] sm:$0xf]
    %v1477 = vld [vmem:[#allocation5 + $0x38] sm:$0xf]
    %v1478 = vld [vmem:[#allocation5 + $0x3c] sm:$0xf]
    %v1495 = vunpack.c.l.b16 %v1463
    %v1496 = vunpack.c.l.b16 %v1464
    %v1497 = vunpack.c.l.b16 %v1465
    %v1498 = vunpack.c.l.b16 %v1466
    %v1499 = vunpack.c.l.b16 %v1467
    %v1500 = vunpack.c.l.b16 %v1468
    %v1501 = vunpack.c.l.b16 %v1469
    %v1502 = vunpack.c.l.b16 %v1470
    %v1503 = vunpack.c.l.b16 %v1471
    %v1504 = vunpack.c.l.b16 %v1472
    %v1505 = vunpack.c.l.b16 %v1473
    %v1506 = vunpack.c.l.b16 %v1474
    %v1507 = vunpack.c.l.b16 %v1475
    %v1508 = vunpack.c.l.b16 %v1476
    %v1509 = vunpack.c.l.b16 %v1477
    %v1510 = vunpack.c.l.b16 %v1478
    %v1511 = vpack.c.b16 %v1496, %v1495
    %v1512 = vpack.c.b16 %v1498, %v1497
    %v1513 = vpack.c.b16 %v1500, %v1499
    %v1514 = vpack.c.b16 %v1502, %v1501
    %v1515 = vpack.c.b16 %v1504, %v1503
    %v1516 = vpack.c.b16 %v1506, %v1505
    %v1517 = vpack.c.b16 %v1508, %v1507
    %v1518 = vpack.c.b16 %v1510, %v1509
    %1527 = vmatpush.bf16.msra.mxu0 %v1518
    %1528 = vmatpush.bf16.msra.mxu0 %v1517
    %1529 = vmatpush.bf16.msra.mxu0 %v1516
    %1530 = vmatpush.bf16.msra.mxu0 %v1515
    %1531 = vmatpush.bf16.msra.mxu0 %v1514
    %1532 = vmatpush.bf16.msra.mxu0 %v1513
    %1533 = vmatpush.bf16.msra.mxu0 %v1512
    %1534 = vmatpush.bf16.msra.mxu0 %v1511
    %1535 = vmatmul.bf16.gmra.mxu0 %v1459
    %v1536 = vpop.f32.mrf.mxu0
    %v1537 = vadd.f32 0.0, %v1536
    %v1538 = vpop.f32.mrf.mxu0
    %v1539 = vadd.f32 0.0, %v1538
    %1540 = vmatmul.bf16.gmra.mxu0 %v1460
    %v1541 = vpop.f32.mrf.mxu0
    %v1542 = vadd.f32 0.0, %v1541
    %v1543 = vpop.f32.mrf.mxu0
    %v1544 = vadd.f32 0.0, %v1543
    %1545 = vmatmul.bf16.gmra.mxu0 %v1461
    %v1546 = vpop.f32.mrf.mxu0
    %v1547 = vadd.f32 0.0, %v1546
    %v1548 = vpop.f32.mrf.mxu0
    %v1549 = vadd.f32 0.0, %v1548
    %1550 = vmatmul.bf16.gmra.mxu0 %v1462
    %v1551 = vpop.f32.mrf.mxu0
    %v1552 = vadd.f32 0.0, %v1551
    %v1553 = vpop.f32.mrf.mxu0
    %v1554 = vadd.f32 0.0, %v1553
    %1555 = vdwg.mxu0
    %v1556 = vsub.f32 %v177, %v1537
    %v1557 = vsub.f32 %v177, %v1539
    %v1558 = vsub.f32 %v177, %v1542
    %v1559 = vsub.f32 %v177, %v1544
    %v1560 = vsub.f32 %v177, %v1547
    %v1561 = vsub.f32 %v177, %v1549
    %v1562 = vsub.f32 %v177, %v1552
    %v1563 = vsub.f32 %v177, %v1554
    %1564 = vmin.xlane.f32.xlu0 %v1556
    %v1565 = vpop.xlane.xlu0 %1564
    %1566 = vmin.xlane.f32.xlu0 %v1557
    %v1567 = vpop.xlane.xlu0 %1566
    %1568 = vmin.xlane.f32.xlu0 %v1558
    %v1569 = vpop.xlane.xlu0 %1568
    %1570 = vmin.xlane.f32.xlu0 %v1559
    %v1571 = vpop.xlane.xlu0 %1570
    %1572 = vmin.xlane.f32.xlu0 %v1560
    %v1573 = vpop.xlane.xlu0 %1572
    %1574 = vmin.xlane.f32.xlu0 %v1561
    %v1575 = vpop.xlane.xlu0 %1574
    %1576 = vmin.xlane.f32.xlu0 %v1562
    %v1577 = vpop.xlane.xlu0 %1576
    %1578 = vmin.xlane.f32.xlu0 %v1563
    %v1579 = vpop.xlane.xlu0 %1578
    %vm1580 = vcmp.le.f32.partialorder %v1556, %v1565
    %vm1581 = vcmp.le.f32.partialorder %v1557, %v1567
    %vm1582 = vcmp.le.f32.partialorder %v1558, %v1569
    %vm1583 = vcmp.le.f32.partialorder %v1559, %v1571
    %vm1584 = vcmp.le.f32.partialorder %v1560, %v1573
    %vm1585 = vcmp.le.f32.partialorder %v1561, %v1575
    %vm1586 = vcmp.le.f32.partialorder %v1562, %v1577
    %vm1587 = vcmp.le.f32.partialorder %v1563, %v1579
    %v1588 = vsel %vm1580, %v82, 128
    %v1589 = vsel %vm1581, %v82, 128
    %v1590 = vsel %vm1582, %v82, 128
    %v1591 = vsel %vm1583, %v82, 128
    %v1592 = vsel %vm1584, %v82, 128
    %v1593 = vsel %vm1585, %v82, 128
    %v1594 = vsel %vm1586, %v82, 128
    %v1595 = vsel %vm1587, %v82, 128
    %v1596 = vand.u32 %v1588, 65535
    %v1597 = vshra.s32 %v1588, 16
    %v1598 = vcvt.s32.f32 %v1596
    %v1599 = vcvt.s32.f32 %v1597
    %1600 = vmin.xlane.f32.xlu0 %v1599
    %v1601 = vpop.xlane.xlu0 %1600
    %vm1602 = vcmp.eq.f32.partialorder %v1599, %v1601
    %v1603 = vsel %vm1602, %v1598, inf
    %1604 = vmin.xlane.f32.xlu0 %v1603
    %v1605 = vpop.xlane.xlu0 %1604
    %v1606 = vcvt.f32.s32 %v1605
    %v1607 = vcvt.f32.s32 %v1601
    %v1608 = vshll.u32 %v1607, 16
    %v1609 = vadd.s32 %v1608, %v1606
    %v1610 = vand.u32 %v1589, 65535
    %v1611 = vshra.s32 %v1589, 16
    %v1612 = vcvt.s32.f32 %v1610
    %v1613 = vcvt.s32.f32 %v1611
    %1614 = vmin.xlane.f32.xlu0 %v1613
    %v1615 = vpop.xlane.xlu0 %1614
    %vm1616 = vcmp.eq.f32.partialorder %v1613, %v1615
    %v1617 = vsel %vm1616, %v1612, inf
    %1618 = vmin.xlane.f32.xlu0 %v1617
    %v1619 = vpop.xlane.xlu0 %1618
    %v1620 = vcvt.f32.s32 %v1619
    %v1621 = vcvt.f32.s32 %v1615
    %v1622 = vshll.u32 %v1621, 16
    %v1623 = vadd.s32 %v1622, %v1620
    %v1624 = vand.u32 %v1590, 65535
    %v1625 = vshra.s32 %v1590, 16
    %v1626 = vcvt.s32.f32 %v1624
    %v1627 = vcvt.s32.f32 %v1625
    %1628 = vmin.xlane.f32.xlu0 %v1627
    %v1629 = vpop.xlane.xlu0 %1628
    %vm1630 = vcmp.eq.f32.partialorder %v1627, %v1629
    %v1631 = vsel %vm1630, %v1626, inf
    %1632 = vmin.xlane.f32.xlu0 %v1631
    %v1633 = vpop.xlane.xlu0 %1632
    %v1634 = vcvt.f32.s32 %v1633
    %v1635 = vcvt.f32.s32 %v1629
    %v1636 = vshll.u32 %v1635, 16
    %v1637 = vadd.s32 %v1636, %v1634
    %v1638 = vand.u32 %v1591, 65535
    %v1639 = vshra.s32 %v1591, 16
    %v1640 = vcvt.s32.f32 %v1638
    %v1641 = vcvt.s32.f32 %v1639
    %1642 = vmin.xlane.f32.xlu0 %v1641
    %v1643 = vpop.xlane.xlu0 %1642
    %vm1644 = vcmp.eq.f32.partialorder %v1641, %v1643
    %v1645 = vsel %vm1644, %v1640, inf
    %1646 = vmin.xlane.f32.xlu0 %v1645
    %v1647 = vpop.xlane.xlu0 %1646
    %v1648 = vcvt.f32.s32 %v1647
    %v1649 = vcvt.f32.s32 %v1643
    %v1650 = vshll.u32 %v1649, 16
    %v1651 = vadd.s32 %v1650, %v1648
    %v1652 = vand.u32 %v1592, 65535
    %v1653 = vshra.s32 %v1592, 16
    %v1654 = vcvt.s32.f32 %v1652
    %v1655 = vcvt.s32.f32 %v1653
    %1656 = vmin.xlane.f32.xlu0 %v1655
    %v1657 = vpop.xlane.xlu0 %1656
    %vm1658 = vcmp.eq.f32.partialorder %v1655, %v1657
    %v1659 = vsel %vm1658, %v1654, inf
    %1660 = vmin.xlane.f32.xlu0 %v1659
    %v1661 = vpop.xlane.xlu0 %1660
    %v1662 = vcvt.f32.s32 %v1661
    %v1663 = vcvt.f32.s32 %v1657
    %v1664 = vshll.u32 %v1663, 16
    %v1665 = vadd.s32 %v1664, %v1662
    %v1666 = vand.u32 %v1593, 65535
    %v1667 = vshra.s32 %v1593, 16
    %v1668 = vcvt.s32.f32 %v1666
    %v1669 = vcvt.s32.f32 %v1667
    %1670 = vmin.xlane.f32.xlu0 %v1669
    %v1671 = vpop.xlane.xlu0 %1670
    %vm1672 = vcmp.eq.f32.partialorder %v1669, %v1671
    %v1673 = vsel %vm1672, %v1668, inf
    %1674 = vmin.xlane.f32.xlu0 %v1673
    %v1675 = vpop.xlane.xlu0 %1674
    %v1676 = vcvt.f32.s32 %v1675
    %v1677 = vcvt.f32.s32 %v1671
    %v1678 = vshll.u32 %v1677, 16
    %v1679 = vadd.s32 %v1678, %v1676
    %v1680 = vand.u32 %v1594, 65535
    %v1681 = vshra.s32 %v1594, 16
    %v1682 = vcvt.s32.f32 %v1680
    %v1683 = vcvt.s32.f32 %v1681
    %1684 = vmin.xlane.f32.xlu0 %v1683
    %v1685 = vpop.xlane.xlu0 %1684
    %vm1686 = vcmp.eq.f32.partialorder %v1683, %v1685
    %v1687 = vsel %vm1686, %v1682, inf
    %1688 = vmin.xlane.f32.xlu0 %v1687
    %v1689 = vpop.xlane.xlu0 %1688
    %v1690 = vcvt.f32.s32 %v1689
    %v1691 = vcvt.f32.s32 %v1685
    %v1692 = vshll.u32 %v1691, 16
    %v1693 = vadd.s32 %v1692, %v1690
    %v1694 = vand.u32 %v1595, 65535
    %v1695 = vshra.s32 %v1595, 16
    %v1696 = vcvt.s32.f32 %v1694
    %v1697 = vcvt.s32.f32 %v1695
    %1698 = vmin.xlane.f32.xlu0 %v1697
    %v1699 = vpop.xlane.xlu0 %1698
    %vm1700 = vcmp.eq.f32.partialorder %v1697, %v1699
    %v1701 = vsel %vm1700, %v1696, inf
    %1702 = vmin.xlane.f32.xlu0 %v1701
    %v1703 = vpop.xlane.xlu0 %1702
    %v1704 = vcvt.f32.s32 %v1703
    %v1705 = vcvt.f32.s32 %v1699
    %v1706 = vshll.u32 %v1705, 16
    %v1707 = vadd.s32 %v1706, %v1704
    %vm1708 = vcmp.eq.s32.totalorder %v82, %v1609
    %vm1709 = vcmp.eq.s32.totalorder %v82, %v1623
    %vm1710 = vcmp.eq.s32.totalorder %v82, %v1637
    %vm1711 = vcmp.eq.s32.totalorder %v82, %v1651
    %vm1712 = vcmp.eq.s32.totalorder %v82, %v1665
    %vm1713 = vcmp.eq.s32.totalorder %v82, %v1679
    %vm1714 = vcmp.eq.s32.totalorder %v82, %v1693
    %vm1715 = vcmp.eq.s32.totalorder %v82, %v1707
    %v1716 = vsel %vm1708, 1, 0
    %v1717 = vsel %vm1709, 1, 0
    %v1718 = vsel %vm1710, 1, 0
    %v1719 = vsel %vm1711, 1, 0
    %v1720 = vsel %vm1712, 1, 0
    %v1721 = vsel %vm1713, 1, 0
    %v1722 = vsel %vm1714, 1, 0
    %v1723 = vsel %vm1715, 1, 0
    %v1724 = vcvt.s32.f32 %v1716
    %v1725 = vcvt.s32.f32 %v1717
    %v1726 = vcvt.s32.f32 %v1718
    %v1727 = vcvt.s32.f32 %v1719
    %v1728 = vcvt.s32.f32 %v1720
    %v1729 = vcvt.s32.f32 %v1721
    %v1730 = vcvt.s32.f32 %v1722
    %v1731 = vcvt.s32.f32 %v1723
    %v1732 = vld [vmem:[#allocation7] sm:$0xff]
    %v1733 = vld [vmem:[#allocation7 + $0x8] sm:$0xff]
    %v1734 = vld [vmem:[#allocation7 + $0x10] sm:$0xff]
    %v1735 = vld [vmem:[#allocation7 + $0x18] sm:$0xff]
    %v1736 = vld [vmem:[#allocation7 + $0x20] sm:$0xff]
    %v1737 = vld [vmem:[#allocation7 + $0x28] sm:$0xff]
    %v1738 = vld [vmem:[#allocation7 + $0x30] sm:$0xff]
    %v1739 = vld [vmem:[#allocation7 + $0x38] sm:$0xff]
    %v1740 = vld [vmem:[#allocation7 + $0x40] sm:$0xff]
    %v1741 = vld [vmem:[#allocation7 + $0x48] sm:$0xff]
    %v1742 = vld [vmem:[#allocation7 + $0x50] sm:$0xff]
    %v1743 = vld [vmem:[#allocation7 + $0x58] sm:$0xff]
    %v1744 = vld [vmem:[#allocation7 + $0x60] sm:$0xff]
    %v1745 = vld [vmem:[#allocation7 + $0x68] sm:$0xff]
    %v1746 = vld [vmem:[#allocation7 + $0x70] sm:$0xff]
    %v1747 = vld [vmem:[#allocation7 + $0x78] sm:$0xff]
    %v1748 = vld [vmem:[%s371] sm:$0xf]
    %v1749 = vld [vmem:[%s371 + $0x4] sm:$0xf]
    %v1750 = vld [vmem:[%s371 + $0x8] sm:$0xf]
    %v1751 = vld [vmem:[%s371 + $0xc] sm:$0xf]
    %v1752 = vld [vmem:[%s371 + $0x10] sm:$0xf]
    %v1753 = vld [vmem:[%s371 + $0x14] sm:$0xf]
    %v1754 = vld [vmem:[%s371 + $0x18] sm:$0xf]
    %v1755 = vld [vmem:[%s371 + $0x1c] sm:$0xf]
    %v1756 = vld [vmem:[%s371 + $0x20] sm:$0xf]
    %v1757 = vld [vmem:[%s371 + $0x24] sm:$0xf]
    %v1758 = vld [vmem:[%s371 + $0x28] sm:$0xf]
    %v1759 = vld [vmem:[%s371 + $0x2c] sm:$0xf]
    %v1760 = vld [vmem:[%s371 + $0x30] sm:$0xf]
    %v1761 = vld [vmem:[%s371 + $0x34] sm:$0xf]
    %v1762 = vld [vmem:[%s371 + $0x38] sm:$0xf]
    %v1763 = vld [vmem:[%s371 + $0x3c] sm:$0xf]
    %v1780 = vunpack.c.l.b16 %v1748
    %v1781 = vunpack.c.l.b16 %v1749
    %v1782 = vunpack.c.l.b16 %v1750
    %v1783 = vunpack.c.l.b16 %v1751
    %v1784 = vunpack.c.l.b16 %v1752
    %v1785 = vunpack.c.l.b16 %v1753
    %v1786 = vunpack.c.l.b16 %v1754
    %v1787 = vunpack.c.l.b16 %v1755
    %v1788 = vunpack.c.l.b16 %v1756
    %v1789 = vunpack.c.l.b16 %v1757
    %v1790 = vunpack.c.l.b16 %v1758
    %v1791 = vunpack.c.l.b16 %v1759
    %v1792 = vunpack.c.l.b16 %v1760
    %v1793 = vunpack.c.l.b16 %v1761
    %v1794 = vunpack.c.l.b16 %v1762
    %v1795 = vunpack.c.l.b16 %v1763
    %v1796 = vpack.c.b16 %v1781, %v1780
    %v1797 = vpack.c.b16 %v1783, %v1782
    %v1798 = vpack.c.b16 %v1785, %v1784
    %v1799 = vpack.c.b16 %v1787, %v1786
    %v1800 = vpack.c.b16 %v1789, %v1788
    %v1801 = vpack.c.b16 %v1791, %v1790
    %v1802 = vpack.c.b16 %v1793, %v1792
    %v1803 = vpack.c.b16 %v1795, %v1794
    %1812 = vmatpush.bf16.msra.mxu0 %v1803
    %1813 = vmatpush.bf16.msra.mxu0 %v1802
    %1814 = vmatpush.bf16.msra.mxu0 %v1801
    %1815 = vmatpush.bf16.msra.mxu0 %v1800
    %1816 = vmatpush.bf16.msra.mxu0 %v1799
    %1817 = vmatpush.bf16.msra.mxu0 %v1798
    %1818 = vmatpush.bf16.msra.mxu0 %v1797
    %1819 = vmatpush.bf16.msra.mxu0 %v1796
    %1820 = vmatmul.bf16.gmra.mxu0 %v1459
    %v1821 = vpop.f32.mrf.mxu0
    %v1822 = vadd.f32 0.0, %v1821
    %v1823 = vpop.f32.mrf.mxu0
    %v1824 = vadd.f32 0.0, %v1823
    %1825 = vmatmul.bf16.gmra.mxu0 %v1460
    %v1826 = vpop.f32.mrf.mxu0
    %v1827 = vadd.f32 0.0, %v1826
    %v1828 = vpop.f32.mrf.mxu0
    %v1829 = vadd.f32 0.0, %v1828
    %1830 = vmatmul.bf16.gmra.mxu0 %v1461
    %v1831 = vpop.f32.mrf.mxu0
    %v1832 = vadd.f32 0.0, %v1831
    %v1833 = vpop.f32.mrf.mxu0
    %v1834 = vadd.f32 0.0, %v1833
    %1835 = vmatmul.bf16.gmra.mxu0 %v1462
    %v1836 = vpop.f32.mrf.mxu0
    %v1837 = vadd.f32 0.0, %v1836
    %v1838 = vpop.f32.mrf.mxu0
    %v1839 = vadd.f32 0.0, %v1838
    %1840 = vdwg.mxu0
    %v1841 = vsub.f32 %v177, %v1822
    %v1842 = vsub.f32 %v177, %v1824
    %v1843 = vsub.f32 %v177, %v1827
    %v1844 = vsub.f32 %v177, %v1829
    %v1845 = vsub.f32 %v177, %v1832
    %v1846 = vsub.f32 %v177, %v1834
    %v1847 = vsub.f32 %v177, %v1837
    %v1848 = vsub.f32 %v177, %v1839
    %1849 = vmin.xlane.f32.xlu0 %v1841
    %v1850 = vpop.xlane.xlu0 %1849
    %1851 = vmin.xlane.f32.xlu0 %v1842
    %v1852 = vpop.xlane.xlu0 %1851
    %1853 = vmin.xlane.f32.xlu0 %v1843
    %v1854 = vpop.xlane.xlu0 %1853
    %1855 = vmin.xlane.f32.xlu0 %v1844
    %v1856 = vpop.xlane.xlu0 %1855
    %1857 = vmin.xlane.f32.xlu0 %v1845
    %v1858 = vpop.xlane.xlu0 %1857
    %1859 = vmin.xlane.f32.xlu0 %v1846
    %v1860 = vpop.xlane.xlu0 %1859
    %1861 = vmin.xlane.f32.xlu0 %v1847
    %v1862 = vpop.xlane.xlu0 %1861
    %1863 = vmin.xlane.f32.xlu0 %v1848
    %v1864 = vpop.xlane.xlu0 %1863
    %vm1865 = vcmp.le.f32.partialorder %v1841, %v1850
    %vm1866 = vcmp.le.f32.partialorder %v1842, %v1852
    %vm1867 = vcmp.le.f32.partialorder %v1843, %v1854
    %vm1868 = vcmp.le.f32.partialorder %v1844, %v1856
    %vm1869 = vcmp.le.f32.partialorder %v1845, %v1858
    %vm1870 = vcmp.le.f32.partialorder %v1846, %v1860
    %vm1871 = vcmp.le.f32.partialorder %v1847, %v1862
    %vm1872 = vcmp.le.f32.partialorder %v1848, %v1864
    %v1873 = vsel %vm1865, %v82, 128
    %v1874 = vsel %vm1866, %v82, 128
    %v1875 = vsel %vm1867, %v82, 128
    %v1876 = vsel %vm1868, %v82, 128
    %v1877 = vsel %vm1869, %v82, 128
    %v1878 = vsel %vm1870, %v82, 128
    %v1879 = vsel %vm1871, %v82, 128
    %v1880 = vsel %vm1872, %v82, 128
    %v1881 = vand.u32 %v1873, 65535
    %v1882 = vshra.s32 %v1873, 16
    %v1883 = vcvt.s32.f32 %v1881
    %v1884 = vcvt.s32.f32 %v1882
    %1885 = vmin.xlane.f32.xlu0 %v1884
    %v1886 = vpop.xlane.xlu0 %1885
    %vm1887 = vcmp.eq.f32.partialorder %v1884, %v1886
    %v1888 = vsel %vm1887, %v1883, inf
    %1889 = vmin.xlane.f32.xlu0 %v1888
    %v1890 = vpop.xlane.xlu0 %1889
    %v1891 = vcvt.f32.s32 %v1890
    %v1892 = vcvt.f32.s32 %v1886
    %v1893 = vshll.u32 %v1892, 16
    %v1894 = vadd.s32 %v1893, %v1891
    %v1895 = vand.u32 %v1874, 65535
    %v1896 = vshra.s32 %v1874, 16
    %v1897 = vcvt.s32.f32 %v1895
    %v1898 = vcvt.s32.f32 %v1896
    %1899 = vmin.xlane.f32.xlu0 %v1898
    %v1900 = vpop.xlane.xlu0 %1899
    %vm1901 = vcmp.eq.f32.partialorder %v1898, %v1900
    %v1902 = vsel %vm1901, %v1897, inf
    %1903 = vmin.xlane.f32.xlu0 %v1902
    %v1904 = vpop.xlane.xlu0 %1903
    %v1905 = vcvt.f32.s32 %v1904
    %v1906 = vcvt.f32.s32 %v1900
    %v1907 = vshll.u32 %v1906, 16
    %v1908 = vadd.s32 %v1907, %v1905
    %v1909 = vand.u32 %v1875, 65535
    %v1910 = vshra.s32 %v1875, 16
    %v1911 = vcvt.s32.f32 %v1909
    %v1912 = vcvt.s32.f32 %v1910
    %1913 = vmin.xlane.f32.xlu0 %v1912
    %v1914 = vpop.xlane.xlu0 %1913
    %vm1915 = vcmp.eq.f32.partialorder %v1912, %v1914
    %v1916 = vsel %vm1915, %v1911, inf
    %1917 = vmin.xlane.f32.xlu0 %v1916
    %v1918 = vpop.xlane.xlu0 %1917
    %v1919 = vcvt.f32.s32 %v1918
    %v1920 = vcvt.f32.s32 %v1914
    %v1921 = vshll.u32 %v1920, 16
    %v1922 = vadd.s32 %v1921, %v1919
    %v1923 = vand.u32 %v1876, 65535
    %v1924 = vshra.s32 %v1876, 16
    %v1925 = vcvt.s32.f32 %v1923
    %v1926 = vcvt.s32.f32 %v1924
    %1927 = vmin.xlane.f32.xlu0 %v1926
    %v1928 = vpop.xlane.xlu0 %1927
    %vm1929 = vcmp.eq.f32.partialorder %v1926, %v1928
    %v1930 = vsel %vm1929, %v1925, inf
    %1931 = vmin.xlane.f32.xlu0 %v1930
    %v1932 = vpop.xlane.xlu0 %1931
    %v1933 = vcvt.f32.s32 %v1932
    %v1934 = vcvt.f32.s32 %v1928
    %v1935 = vshll.u32 %v1934, 16
    %v1936 = vadd.s32 %v1935, %v1933
    %v1937 = vand.u32 %v1877, 65535
    %v1938 = vshra.s32 %v1877, 16
    %v1939 = vcvt.s32.f32 %v1937
    %v1940 = vcvt.s32.f32 %v1938
    %1941 = vmin.xlane.f32.xlu0 %v1940
    %v1942 = vpop.xlane.xlu0 %1941
    %vm1943 = vcmp.eq.f32.partialorder %v1940, %v1942
    %v1944 = vsel %vm1943, %v1939, inf
    %1945 = vmin.xlane.f32.xlu0 %v1944
    %v1946 = vpop.xlane.xlu0 %1945
    %v1947 = vcvt.f32.s32 %v1946
    %v1948 = vcvt.f32.s32 %v1942
    %v1949 = vshll.u32 %v1948, 16
    %v1950 = vadd.s32 %v1949, %v1947
    %v1951 = vand.u32 %v1878, 65535
    %v1952 = vshra.s32 %v1878, 16
    %v1953 = vcvt.s32.f32 %v1951
    %v1954 = vcvt.s32.f32 %v1952
    %1955 = vmin.xlane.f32.xlu0 %v1954
    %v1956 = vpop.xlane.xlu0 %1955
    %vm1957 = vcmp.eq.f32.partialorder %v1954, %v1956
    %v1958 = vsel %vm1957, %v1953, inf
    %1959 = vmin.xlane.f32.xlu0 %v1958
    %v1960 = vpop.xlane.xlu0 %1959
    %v1961 = vcvt.f32.s32 %v1960
    %v1962 = vcvt.f32.s32 %v1956
    %v1963 = vshll.u32 %v1962, 16
    %v1964 = vadd.s32 %v1963, %v1961
    %v1965 = vand.u32 %v1879, 65535
    %v1966 = vshra.s32 %v1879, 16
    %v1967 = vcvt.s32.f32 %v1965
    %v1968 = vcvt.s32.f32 %v1966
    %1969 = vmin.xlane.f32.xlu0 %v1968
    %v1970 = vpop.xlane.xlu0 %1969
    %vm1971 = vcmp.eq.f32.partialorder %v1968, %v1970
    %v1972 = vsel %vm1971, %v1967, inf
    %1973 = vmin.xlane.f32.xlu0 %v1972
    %v1974 = vpop.xlane.xlu0 %1973
    %v1975 = vcvt.f32.s32 %v1974
    %v1976 = vcvt.f32.s32 %v1970
    %v1977 = vshll.u32 %v1976, 16
    %v1978 = vadd.s32 %v1977, %v1975
    %v1979 = vand.u32 %v1880, 65535
    %v1980 = vshra.s32 %v1880, 16
    %v1981 = vcvt.s32.f32 %v1979
    %v1982 = vcvt.s32.f32 %v1980
    %1983 = vmin.xlane.f32.xlu0 %v1982
    %v1984 = vpop.xlane.xlu0 %1983
    %vm1985 = vcmp.eq.f32.partialorder %v1982, %v1984
    %v1986 = vsel %vm1985, %v1981, inf
    %1987 = vmin.xlane.f32.xlu0 %v1986
    %v1988 = vpop.xlane.xlu0 %1987
    %v1989 = vcvt.f32.s32 %v1988
    %v1990 = vcvt.f32.s32 %v1984
    %v1991 = vshll.u32 %v1990, 16
    %v1992 = vadd.s32 %v1991, %v1989
    %vm1993 = vcmp.eq.s32.totalorder %v82, %v1894
    %vm1994 = vcmp.eq.s32.totalorder %v82, %v1908
    %vm1995 = vcmp.eq.s32.totalorder %v82, %v1922
    %vm1996 = vcmp.eq.s32.totalorder %v82, %v1936
    %vm1997 = vcmp.eq.s32.totalorder %v82, %v1950
    %vm1998 = vcmp.eq.s32.totalorder %v82, %v1964
    %vm1999 = vcmp.eq.s32.totalorder %v82, %v1978
    %vm2000 = vcmp.eq.s32.totalorder %v82, %v1992
    %v2001 = vsel %vm1993, 1, 0
    %v2002 = vsel %vm1994, 1, 0
    %v2003 = vsel %vm1995, 1, 0
    %v2004 = vsel %vm1996, 1, 0
    %v2005 = vsel %vm1997, 1, 0
    %v2006 = vsel %vm1998, 1, 0
    %v2007 = vsel %vm1999, 1, 0
    %v2008 = vsel %vm2000, 1, 0
    %v2009 = vcvt.s32.f32 %v2001
    %v2010 = vcvt.s32.f32 %v2002
    %v2011 = vcvt.s32.f32 %v2003
    %v2012 = vcvt.s32.f32 %v2004
    %v2013 = vcvt.s32.f32 %v2005
    %v2014 = vcvt.s32.f32 %v2006
    %v2015 = vcvt.s32.f32 %v2007
    %v2016 = vcvt.s32.f32 %v2008
    %v2017 = vld [vmem:[%s641] sm:$0xff]
    %v2018 = vld [vmem:[%s641 + $0x8] sm:$0xff]
    %v2019 = vld [vmem:[%s641 + $0x10] sm:$0xff]
    %v2020 = vld [vmem:[%s641 + $0x18] sm:$0xff]
    %v2021 = vld [vmem:[%s641 + $0x20] sm:$0xff]
    %v2022 = vld [vmem:[%s641 + $0x28] sm:$0xff]
    %v2023 = vld [vmem:[%s641 + $0x30] sm:$0xff]
    %v2024 = vld [vmem:[%s641 + $0x38] sm:$0xff]
    %v2025 = vld [vmem:[%s641 + $0x40] sm:$0xff]
    %v2026 = vld [vmem:[%s641 + $0x48] sm:$0xff]
    %v2027 = vld [vmem:[%s641 + $0x50] sm:$0xff]
    %v2028 = vld [vmem:[%s641 + $0x58] sm:$0xff]
    %v2029 = vld [vmem:[%s641 + $0x60] sm:$0xff]
    %v2030 = vld [vmem:[%s641 + $0x68] sm:$0xff]
    %v2031 = vld [vmem:[%s641 + $0x70] sm:$0xff]
    %v2032 = vld [vmem:[%s641 + $0x78] sm:$0xff]
    %2033 = vmatpush.msra.mxu0 %v2032
    %2034 = vmatpush.msra.mxu0 %v2031
    %2035 = vmatpush.msra.mxu0 %v2030
    %2036 = vmatpush.msra.mxu0 %v2029
    %2037 = vmatpush.msra.mxu0 %v2028
    %2038 = vmatpush.msra.mxu0 %v2027
    %2039 = vmatpush.msra.mxu0 %v2026
    %2040 = vmatpush.msra.mxu0 %v2025
    %2041 = vmatpush.msra.mxu0 %v2024
    %2042 = vmatpush.msra.mxu0 %v2023
    %2043 = vmatpush.msra.mxu0 %v2022
    %2044 = vmatpush.msra.mxu0 %v2021
    %2045 = vmatpush.msra.mxu0 %v2020
    %2046 = vmatpush.msra.mxu0 %v2019
    %2047 = vmatpush.msra.mxu0 %v2018
    %2048 = vmatpush.msra.mxu0 %v2017
    %2049 = vmatmul.f32.gmra.mxu0 %v2009
    %v2050 = vpop.f32.mrf.mxu0
    %v2051 = vadd.f32 0.0, %v2050
    %2052 = vmatmul.f32.gmra.mxu0 %v2010
    %v2053 = vpop.f32.mrf.mxu0
    %v2054 = vadd.f32 0.0, %v2053
    %2055 = vmatmul.f32.gmra.mxu0 %v2011
    %v2056 = vpop.f32.mrf.mxu0
    %v2057 = vadd.f32 0.0, %v2056
    %2058 = vmatmul.f32.gmra.mxu0 %v2012
    %v2059 = vpop.f32.mrf.mxu0
    %v2060 = vadd.f32 0.0, %v2059
    %2061 = vmatmul.f32.gmra.mxu0 %v2013
    %v2062 = vpop.f32.mrf.mxu0
    %v2063 = vadd.f32 0.0, %v2062
    %2064 = vmatmul.f32.gmra.mxu0 %v2014
    %v2065 = vpop.f32.mrf.mxu0
    %v2066 = vadd.f32 0.0, %v2065
    %2067 = vmatmul.f32.gmra.mxu0 %v2015
    %v2068 = vpop.f32.mrf.mxu0
    %v2069 = vadd.f32 0.0, %v2068
    %2070 = vmatmul.f32.gmra.mxu0 %v2016
    %v2071 = vpop.f32.mrf.mxu0
    %v2072 = vadd.f32 0.0, %v2071
    %2073 = vdwg.mxu0
    %2074 = vmatpush.msra.mxu0 %v1747
    %2075 = vmatpush.msra.mxu0 %v1746
    %2076 = vmatpush.msra.mxu0 %v1745
    %2077 = vmatpush.msra.mxu0 %v1744
    %2078 = vmatpush.msra.mxu0 %v1743
    %2079 = vmatpush.msra.mxu0 %v1742
    %2080 = vmatpush.msra.mxu0 %v1741
    %2081 = vmatpush.msra.mxu0 %v1740
    %2082 = vmatpush.msra.mxu0 %v1739
    %2083 = vmatpush.msra.mxu0 %v1738
    %2084 = vmatpush.msra.mxu0 %v1737
    %2085 = vmatpush.msra.mxu0 %v1736
    %2086 = vmatpush.msra.mxu0 %v1735
    %2087 = vmatpush.msra.mxu0 %v1734
    %2088 = vmatpush.msra.mxu0 %v1733
    %2089 = vmatpush.msra.mxu0 %v1732
    %2090 = vmatmul.f32.gmra.mxu0 %v1724
    %v2091 = vpop.f32.mrf.mxu0
    %v2092 = vadd.f32 %v2051, %v2091
    %2093 = vmatmul.f32.gmra.mxu0 %v1725
    %v2094 = vpop.f32.mrf.mxu0
    %v2095 = vadd.f32 %v2054, %v2094
    %2096 = vmatmul.f32.gmra.mxu0 %v1726
    %v2097 = vpop.f32.mrf.mxu0
    %v2098 = vadd.f32 %v2057, %v2097
    %2099 = vmatmul.f32.gmra.mxu0 %v1727
    %v2100 = vpop.f32.mrf.mxu0
    %v2101 = vadd.f32 %v2060, %v2100
    %2102 = vmatmul.f32.gmra.mxu0 %v1728
    %v2103 = vpop.f32.mrf.mxu0
    %v2104 = vadd.f32 %v2063, %v2103
    %2105 = vmatmul.f32.gmra.mxu0 %v1729
    %v2106 = vpop.f32.mrf.mxu0
    %v2107 = vadd.f32 %v2066, %v2106
    %2108 = vmatmul.f32.gmra.mxu0 %v1730
    %v2109 = vpop.f32.mrf.mxu0
    %v2110 = vadd.f32 %v2069, %v2109
    %2111 = vmatmul.f32.gmra.mxu0 %v1731
    %v2112 = vpop.f32.mrf.mxu0
    %v2113 = vadd.f32 %v2072, %v2112
    %2114 = vdwg.mxu0
    %v2115 = vld [vmem:[%s740] sm:$0xf]
    %v2116 = vld [vmem:[%s740 + $0x4] sm:$0xf]
    %v2117 = vld [vmem:[%s740 + $0x8] sm:$0xf]
    %v2118 = vld [vmem:[%s740 + $0xc] sm:$0xf]
    %v2119 = vld [vmem:[%s740 + $0x10] sm:$0xf]
    %v2120 = vld [vmem:[%s740 + $0x14] sm:$0xf]
    %v2121 = vld [vmem:[%s740 + $0x18] sm:$0xf]
    %v2122 = vld [vmem:[%s740 + $0x1c] sm:$0xf]
    %v2123 = vld [vmem:[%s740 + $0x20] sm:$0xf]
    %v2124 = vld [vmem:[%s740 + $0x24] sm:$0xf]
    %v2125 = vld [vmem:[%s740 + $0x28] sm:$0xf]
    %v2126 = vld [vmem:[%s740 + $0x2c] sm:$0xf]
    %v2127 = vld [vmem:[%s740 + $0x30] sm:$0xf]
    %v2128 = vld [vmem:[%s740 + $0x34] sm:$0xf]
    %v2129 = vld [vmem:[%s740 + $0x38] sm:$0xf]
    %v2130 = vld [vmem:[%s740 + $0x3c] sm:$0xf]
    %v2147 = vunpack.c.l.b16 %v2115
    %v2148 = vunpack.c.l.b16 %v2116
    %v2149 = vunpack.c.l.b16 %v2117
    %v2150 = vunpack.c.l.b16 %v2118
    %v2151 = vunpack.c.l.b16 %v2119
    %v2152 = vunpack.c.l.b16 %v2120
    %v2153 = vunpack.c.l.b16 %v2121
    %v2154 = vunpack.c.l.b16 %v2122
    %v2155 = vunpack.c.l.b16 %v2123
    %v2156 = vunpack.c.l.b16 %v2124
    %v2157 = vunpack.c.l.b16 %v2125
    %v2158 = vunpack.c.l.b16 %v2126
    %v2159 = vunpack.c.l.b16 %v2127
    %v2160 = vunpack.c.l.b16 %v2128
    %v2161 = vunpack.c.l.b16 %v2129
    %v2162 = vunpack.c.l.b16 %v2130
    %v2163 = vpack.c.b16 %v2148, %v2147
    %v2164 = vpack.c.b16 %v2150, %v2149
    %v2165 = vpack.c.b16 %v2152, %v2151
    %v2166 = vpack.c.b16 %v2154, %v2153
    %v2167 = vpack.c.b16 %v2156, %v2155
    %v2168 = vpack.c.b16 %v2158, %v2157
    %v2169 = vpack.c.b16 %v2160, %v2159
    %v2170 = vpack.c.b16 %v2162, %v2161
    %2179 = vmatpush.bf16.msra.mxu0 %v2170
    %2180 = vmatpush.bf16.msra.mxu0 %v2169
    %2181 = vmatpush.bf16.msra.mxu0 %v2168
    %2182 = vmatpush.bf16.msra.mxu0 %v2167
    %2183 = vmatpush.bf16.msra.mxu0 %v2166
    %2184 = vmatpush.bf16.msra.mxu0 %v2165
    %2185 = vmatpush.bf16.msra.mxu0 %v2164
    %2186 = vmatpush.bf16.msra.mxu0 %v2163
    %2187 = vmatmul.bf16.gmra.mxu0 %v1459
    %v2188 = vpop.f32.mrf.mxu0
    %v2189 = vadd.f32 0.0, %v2188
    %v2190 = vpop.f32.mrf.mxu0
    %v2191 = vadd.f32 0.0, %v2190
    %2192 = vmatmul.bf16.gmra.mxu0 %v1460
    %v2193 = vpop.f32.mrf.mxu0
    %v2194 = vadd.f32 0.0, %v2193
    %v2195 = vpop.f32.mrf.mxu0
    %v2196 = vadd.f32 0.0, %v2195
    %2197 = vmatmul.bf16.gmra.mxu0 %v1461
    %v2198 = vpop.f32.mrf.mxu0
    %v2199 = vadd.f32 0.0, %v2198
    %v2200 = vpop.f32.mrf.mxu0
    %v2201 = vadd.f32 0.0, %v2200
    %2202 = vmatmul.bf16.gmra.mxu0 %v1462
    %v2203 = vpop.f32.mrf.mxu0
    %v2204 = vadd.f32 0.0, %v2203
    %v2205 = vpop.f32.mrf.mxu0
    %v2206 = vadd.f32 0.0, %v2205
    %2207 = vdwg.mxu0
    %v2208 = vsub.f32 %v177, %v2189
    %v2209 = vsub.f32 %v177, %v2191
    %v2210 = vsub.f32 %v177, %v2194
    %v2211 = vsub.f32 %v177, %v2196
    %v2212 = vsub.f32 %v177, %v2199
    %v2213 = vsub.f32 %v177, %v2201
    %v2214 = vsub.f32 %v177, %v2204
    %v2215 = vsub.f32 %v177, %v2206
    %2216 = vmin.xlane.f32.xlu0 %v2208
    %v2217 = vpop.xlane.xlu0 %2216
    %2218 = vmin.xlane.f32.xlu0 %v2209
    %v2219 = vpop.xlane.xlu0 %2218
    %2220 = vmin.xlane.f32.xlu0 %v2210
    %v2221 = vpop.xlane.xlu0 %2220
    %2222 = vmin.xlane.f32.xlu0 %v2211
    %v2223 = vpop.xlane.xlu0 %2222
    %2224 = vmin.xlane.f32.xlu0 %v2212
    %v2225 = vpop.xlane.xlu0 %2224
    %2226 = vmin.xlane.f32.xlu0 %v2213
    %v2227 = vpop.xlane.xlu0 %2226
    %2228 = vmin.xlane.f32.xlu0 %v2214
    %v2229 = vpop.xlane.xlu0 %2228
    %2230 = vmin.xlane.f32.xlu0 %v2215
    %v2231 = vpop.xlane.xlu0 %2230
    %vm2232 = vcmp.le.f32.partialorder %v2208, %v2217
    %vm2233 = vcmp.le.f32.partialorder %v2209, %v2219
    %vm2234 = vcmp.le.f32.partialorder %v2210, %v2221
    %vm2235 = vcmp.le.f32.partialorder %v2211, %v2223
    %vm2236 = vcmp.le.f32.partialorder %v2212, %v2225
    %vm2237 = vcmp.le.f32.partialorder %v2213, %v2227
    %vm2238 = vcmp.le.f32.partialorder %v2214, %v2229
    %vm2239 = vcmp.le.f32.partialorder %v2215, %v2231
    %v2240 = vsel %vm2232, %v82, 128
    %v2241 = vsel %vm2233, %v82, 128
    %v2242 = vsel %vm2234, %v82, 128
    %v2243 = vsel %vm2235, %v82, 128
    %v2244 = vsel %vm2236, %v82, 128
    %v2245 = vsel %vm2237, %v82, 128
    %v2246 = vsel %vm2238, %v82, 128
    %v2247 = vsel %vm2239, %v82, 128
    %v2248 = vand.u32 %v2240, 65535
    %v2249 = vshra.s32 %v2240, 16
    %v2250 = vcvt.s32.f32 %v2248
    %v2251 = vcvt.s32.f32 %v2249
    %2252 = vmin.xlane.f32.xlu0 %v2251
    %v2253 = vpop.xlane.xlu0 %2252
    %vm2254 = vcmp.eq.f32.partialorder %v2251, %v2253
    %v2255 = vsel %vm2254, %v2250, inf
    %2256 = vmin.xlane.f32.xlu0 %v2255
    %v2257 = vpop.xlane.xlu0 %2256
    %v2258 = vcvt.f32.s32 %v2257
    %v2259 = vcvt.f32.s32 %v2253
    %v2260 = vshll.u32 %v2259, 16
    %v2261 = vadd.s32 %v2260, %v2258
    %v2262 = vand.u32 %v2241, 65535
    %v2263 = vshra.s32 %v2241, 16
    %v2264 = vcvt.s32.f32 %v2262
    %v2265 = vcvt.s32.f32 %v2263
    %2266 = vmin.xlane.f32.xlu0 %v2265
    %v2267 = vpop.xlane.xlu0 %2266
    %vm2268 = vcmp.eq.f32.partialorder %v2265, %v2267
    %v2269 = vsel %vm2268, %v2264, inf
    %2270 = vmin.xlane.f32.xlu0 %v2269
    %v2271 = vpop.xlane.xlu0 %2270
    %v2272 = vcvt.f32.s32 %v2271
    %v2273 = vcvt.f32.s32 %v2267
    %v2274 = vshll.u32 %v2273, 16
    %v2275 = vadd.s32 %v2274, %v2272
    %v2276 = vand.u32 %v2242, 65535
    %v2277 = vshra.s32 %v2242, 16
    %v2278 = vcvt.s32.f32 %v2276
    %v2279 = vcvt.s32.f32 %v2277
    %2280 = vmin.xlane.f32.xlu0 %v2279
    %v2281 = vpop.xlane.xlu0 %2280
    %vm2282 = vcmp.eq.f32.partialorder %v2279, %v2281
    %v2283 = vsel %vm2282, %v2278, inf
    %2284 = vmin.xlane.f32.xlu0 %v2283
    %v2285 = vpop.xlane.xlu0 %2284
    %v2286 = vcvt.f32.s32 %v2285
    %v2287 = vcvt.f32.s32 %v2281
    %v2288 = vshll.u32 %v2287, 16
    %v2289 = vadd.s32 %v2288, %v2286
    %v2290 = vand.u32 %v2243, 65535
    %v2291 = vshra.s32 %v2243, 16
    %v2292 = vcvt.s32.f32 %v2290
    %v2293 = vcvt.s32.f32 %v2291
    %2294 = vmin.xlane.f32.xlu0 %v2293
    %v2295 = vpop.xlane.xlu0 %2294
    %vm2296 = vcmp.eq.f32.partialorder %v2293, %v2295
    %v2297 = vsel %vm2296, %v2292, inf
    %2298 = vmin.xlane.f32.xlu0 %v2297
    %v2299 = vpop.xlane.xlu0 %2298
    %v2300 = vcvt.f32.s32 %v2299
    %v2301 = vcvt.f32.s32 %v2295
    %v2302 = vshll.u32 %v2301, 16
    %v2303 = vadd.s32 %v2302, %v2300
    %v2304 = vand.u32 %v2244, 65535
    %v2305 = vshra.s32 %v2244, 16
    %v2306 = vcvt.s32.f32 %v2304
    %v2307 = vcvt.s32.f32 %v2305
    %2308 = vmin.xlane.f32.xlu0 %v2307
    %v2309 = vpop.xlane.xlu0 %2308
    %vm2310 = vcmp.eq.f32.partialorder %v2307, %v2309
    %v2311 = vsel %vm2310, %v2306, inf
    %2312 = vmin.xlane.f32.xlu0 %v2311
    %v2313 = vpop.xlane.xlu0 %2312
    %v2314 = vcvt.f32.s32 %v2313
    %v2315 = vcvt.f32.s32 %v2309
    %v2316 = vshll.u32 %v2315, 16
    %v2317 = vadd.s32 %v2316, %v2314
    %v2318 = vand.u32 %v2245, 65535
    %v2319 = vshra.s32 %v2245, 16
    %v2320 = vcvt.s32.f32 %v2318
    %v2321 = vcvt.s32.f32 %v2319
    %2322 = vmin.xlane.f32.xlu0 %v2321
    %v2323 = vpop.xlane.xlu0 %2322
    %vm2324 = vcmp.eq.f32.partialorder %v2321, %v2323
    %v2325 = vsel %vm2324, %v2320, inf
    %2326 = vmin.xlane.f32.xlu0 %v2325
    %v2327 = vpop.xlane.xlu0 %2326
    %v2328 = vcvt.f32.s32 %v2327
    %v2329 = vcvt.f32.s32 %v2323
    %v2330 = vshll.u32 %v2329, 16
    %v2331 = vadd.s32 %v2330, %v2328
    %v2332 = vand.u32 %v2246, 65535
    %v2333 = vshra.s32 %v2246, 16
    %v2334 = vcvt.s32.f32 %v2332
    %v2335 = vcvt.s32.f32 %v2333
    %2336 = vmin.xlane.f32.xlu0 %v2335
    %v2337 = vpop.xlane.xlu0 %2336
    %vm2338 = vcmp.eq.f32.partialorder %v2335, %v2337
    %v2339 = vsel %vm2338, %v2334, inf
    %2340 = vmin.xlane.f32.xlu0 %v2339
    %v2341 = vpop.xlane.xlu0 %2340
    %v2342 = vcvt.f32.s32 %v2341
    %v2343 = vcvt.f32.s32 %v2337
    %v2344 = vshll.u32 %v2343, 16
    %v2345 = vadd.s32 %v2344, %v2342
    %v2346 = vand.u32 %v2247, 65535
    %v2347 = vshra.s32 %v2247, 16
    %v2348 = vcvt.s32.f32 %v2346
    %v2349 = vcvt.s32.f32 %v2347
    %2350 = vmin.xlane.f32.xlu0 %v2349
    %v2351 = vpop.xlane.xlu0 %2350
    %vm2352 = vcmp.eq.f32.partialorder %v2349, %v2351
    %v2353 = vsel %vm2352, %v2348, inf
    %2354 = vmin.xlane.f32.xlu0 %v2353
    %v2355 = vpop.xlane.xlu0 %2354
    %v2356 = vcvt.f32.s32 %v2355
    %v2357 = vcvt.f32.s32 %v2351
    %v2358 = vshll.u32 %v2357, 16
    %v2359 = vadd.s32 %v2358, %v2356
    %vm2360 = vcmp.eq.s32.totalorder %v82, %v2261
    %vm2361 = vcmp.eq.s32.totalorder %v82, %v2275
    %vm2362 = vcmp.eq.s32.totalorder %v82, %v2289
    %vm2363 = vcmp.eq.s32.totalorder %v82, %v2303
    %vm2364 = vcmp.eq.s32.totalorder %v82, %v2317
    %vm2365 = vcmp.eq.s32.totalorder %v82, %v2331
    %vm2366 = vcmp.eq.s32.totalorder %v82, %v2345
    %vm2367 = vcmp.eq.s32.totalorder %v82, %v2359
    %v2368 = vsel %vm2360, 1, 0
    %v2369 = vsel %vm2361, 1, 0
    %v2370 = vsel %vm2362, 1, 0
    %v2371 = vsel %vm2363, 1, 0
    %v2372 = vsel %vm2364, 1, 0
    %v2373 = vsel %vm2365, 1, 0
    %v2374 = vsel %vm2366, 1, 0
    %v2375 = vsel %vm2367, 1, 0
    %v2376 = vcvt.s32.f32 %v2368
    %v2377 = vcvt.s32.f32 %v2369
    %v2378 = vcvt.s32.f32 %v2370
    %v2379 = vcvt.s32.f32 %v2371
    %v2380 = vcvt.s32.f32 %v2372
    %v2381 = vcvt.s32.f32 %v2373
    %v2382 = vcvt.s32.f32 %v2374
    %v2383 = vcvt.s32.f32 %v2375
    %v2384 = vld [vmem:[%s1010] sm:$0xff]
    %v2385 = vld [vmem:[%s1010 + $0x8] sm:$0xff]
    %v2386 = vld [vmem:[%s1010 + $0x10] sm:$0xff]
    %v2387 = vld [vmem:[%s1010 + $0x18] sm:$0xff]
    %v2388 = vld [vmem:[%s1010 + $0x20] sm:$0xff]
    %v2389 = vld [vmem:[%s1010 + $0x28] sm:$0xff]
    %v2390 = vld [vmem:[%s1010 + $0x30] sm:$0xff]
    %v2391 = vld [vmem:[%s1010 + $0x38] sm:$0xff]
    %v2392 = vld [vmem:[%s1010 + $0x40] sm:$0xff]
    %v2393 = vld [vmem:[%s1010 + $0x48] sm:$0xff]
    %v2394 = vld [vmem:[%s1010 + $0x50] sm:$0xff]
    %v2395 = vld [vmem:[%s1010 + $0x58] sm:$0xff]
    %v2396 = vld [vmem:[%s1010 + $0x60] sm:$0xff]
    %v2397 = vld [vmem:[%s1010 + $0x68] sm:$0xff]
    %v2398 = vld [vmem:[%s1010 + $0x70] sm:$0xff]
    %v2399 = vld [vmem:[%s1010 + $0x78] sm:$0xff]
    %2400 = vmatpush.msra.mxu0 %v2399
    %2401 = vmatpush.msra.mxu0 %v2398
    %2402 = vmatpush.msra.mxu0 %v2397
    %2403 = vmatpush.msra.mxu0 %v2396
    %2404 = vmatpush.msra.mxu0 %v2395
    %2405 = vmatpush.msra.mxu0 %v2394
    %2406 = vmatpush.msra.mxu0 %v2393
    %2407 = vmatpush.msra.mxu0 %v2392
    %2408 = vmatpush.msra.mxu0 %v2391
    %2409 = vmatpush.msra.mxu0 %v2390
    %2410 = vmatpush.msra.mxu0 %v2389
    %2411 = vmatpush.msra.mxu0 %v2388
    %2412 = vmatpush.msra.mxu0 %v2387
    %2413 = vmatpush.msra.mxu0 %v2386
    %2414 = vmatpush.msra.mxu0 %v2385
    %2415 = vmatpush.msra.mxu0 %v2384
    %2416 = vmatmul.f32.gmra.mxu0 %v2376
    %v2417 = vpop.f32.mrf.mxu0
    %v2418 = vadd.f32 0.0, %v2417
    %2419 = vmatmul.f32.gmra.mxu0 %v2377
    %v2420 = vpop.f32.mrf.mxu0
    %v2421 = vadd.f32 0.0, %v2420
    %2422 = vmatmul.f32.gmra.mxu0 %v2378
    %v2423 = vpop.f32.mrf.mxu0
    %v2424 = vadd.f32 0.0, %v2423
    %2425 = vmatmul.f32.gmra.mxu0 %v2379
    %v2426 = vpop.f32.mrf.mxu0
    %v2427 = vadd.f32 0.0, %v2426
    %2428 = vmatmul.f32.gmra.mxu0 %v2380
    %v2429 = vpop.f32.mrf.mxu0
    %v2430 = vadd.f32 0.0, %v2429
    %2431 = vmatmul.f32.gmra.mxu0 %v2381
    %v2432 = vpop.f32.mrf.mxu0
    %v2433 = vadd.f32 0.0, %v2432
    %2434 = vmatmul.f32.gmra.mxu0 %v2382
    %v2435 = vpop.f32.mrf.mxu0
    %v2436 = vadd.f32 0.0, %v2435
    %2437 = vmatmul.f32.gmra.mxu0 %v2383
    %v2438 = vpop.f32.mrf.mxu0
    %v2439 = vadd.f32 0.0, %v2438
    %2440 = vdwg.mxu0
    %v2441 = vadd.f32 %v2092, %v2418
    %v2442 = vadd.f32 %v2095, %v2421
    %v2443 = vadd.f32 %v2098, %v2424
    %v2444 = vadd.f32 %v2101, %v2427
    %v2445 = vadd.f32 %v2104, %v2430
    %v2446 = vadd.f32 %v2107, %v2433
    %v2447 = vadd.f32 %v2110, %v2436
    %v2448 = vadd.f32 %v2113, %v2439
    %v2449 = vld [vmem:[%s1076] sm:$0xf]
    %v2450 = vld [vmem:[%s1076 + $0x4] sm:$0xf]
    %v2451 = vld [vmem:[%s1076 + $0x8] sm:$0xf]
    %v2452 = vld [vmem:[%s1076 + $0xc] sm:$0xf]
    %v2453 = vld [vmem:[%s1076 + $0x10] sm:$0xf]
    %v2454 = vld [vmem:[%s1076 + $0x14] sm:$0xf]
    %v2455 = vld [vmem:[%s1076 + $0x18] sm:$0xf]
    %v2456 = vld [vmem:[%s1076 + $0x1c] sm:$0xf]
    %v2457 = vld [vmem:[%s1076 + $0x20] sm:$0xf]
    %v2458 = vld [vmem:[%s1076 + $0x24] sm:$0xf]
    %v2459 = vld [vmem:[%s1076 + $0x28] sm:$0xf]
    %v2460 = vld [vmem:[%s1076 + $0x2c] sm:$0xf]
    %v2461 = vld [vmem:[%s1076 + $0x30] sm:$0xf]
    %v2462 = vld [vmem:[%s1076 + $0x34] sm:$0xf]
    %v2463 = vld [vmem:[%s1076 + $0x38] sm:$0xf]
    %v2464 = vld [vmem:[%s1076 + $0x3c] sm:$0xf]
    %v2481 = vunpack.c.l.b16 %v2449
    %v2482 = vunpack.c.l.b16 %v2450
    %v2483 = vunpack.c.l.b16 %v2451
    %v2484 = vunpack.c.l.b16 %v2452
    %v2485 = vunpack.c.l.b16 %v2453
    %v2486 = vunpack.c.l.b16 %v2454
    %v2487 = vunpack.c.l.b16 %v2455
    %v2488 = vunpack.c.l.b16 %v2456
    %v2489 = vunpack.c.l.b16 %v2457
    %v2490 = vunpack.c.l.b16 %v2458
    %v2491 = vunpack.c.l.b16 %v2459
    %v2492 = vunpack.c.l.b16 %v2460
    %v2493 = vunpack.c.l.b16 %v2461
    %v2494 = vunpack.c.l.b16 %v2462
    %v2495 = vunpack.c.l.b16 %v2463
    %v2496 = vunpack.c.l.b16 %v2464
    %v2497 = vpack.c.b16 %v2482, %v2481
    %v2498 = vpack.c.b16 %v2484, %v2483
    %v2499 = vpack.c.b16 %v2486, %v2485
    %v2500 = vpack.c.b16 %v2488, %v2487
    %v2501 = vpack.c.b16 %v2490, %v2489
    %v2502 = vpack.c.b16 %v2492, %v2491
    %v2503 = vpack.c.b16 %v2494, %v2493
    %v2504 = vpack.c.b16 %v2496, %v2495
    %2513 = vmatpush.bf16.msra.mxu0 %v2504
    %2514 = vmatpush.bf16.msra.mxu0 %v2503
    %2515 = vmatpush.bf16.msra.mxu0 %v2502
    %2516 = vmatpush.bf16.msra.mxu0 %v2501
    %2517 = vmatpush.bf16.msra.mxu0 %v2500
    %2518 = vmatpush.bf16.msra.mxu0 %v2499
    %2519 = vmatpush.bf16.msra.mxu0 %v2498
    %2520 = vmatpush.bf16.msra.mxu0 %v2497
    %2521 = vmatmul.bf16.gmra.mxu0 %v1459
    %v2522 = vpop.f32.mrf.mxu0
    %v2523 = vadd.f32 0.0, %v2522
    %v2524 = vpop.f32.mrf.mxu0
    %v2525 = vadd.f32 0.0, %v2524
    %2526 = vmatmul.bf16.gmra.mxu0 %v1460
    %v2527 = vpop.f32.mrf.mxu0
    %v2528 = vadd.f32 0.0, %v2527
    %v2529 = vpop.f32.mrf.mxu0
    %v2530 = vadd.f32 0.0, %v2529
    %2531 = vmatmul.bf16.gmra.mxu0 %v1461
    %v2532 = vpop.f32.mrf.mxu0
    %v2533 = vadd.f32 0.0, %v2532
    %v2534 = vpop.f32.mrf.mxu0
    %v2535 = vadd.f32 0.0, %v2534
    %2536 = vmatmul.bf16.gmra.mxu0 %v1462
    %v2537 = vpop.f32.mrf.mxu0
    %v2538 = vadd.f32 0.0, %v2537
    %v2539 = vpop.f32.mrf.mxu0
    %v2540 = vadd.f32 0.0, %v2539
    %2541 = vdwg.mxu0
    %v2542 = vsub.f32 %v177, %v2523
    %v2543 = vsub.f32 %v177, %v2525
    %v2544 = vsub.f32 %v177, %v2528
    %v2545 = vsub.f32 %v177, %v2530
    %v2546 = vsub.f32 %v177, %v2533
    %v2547 = vsub.f32 %v177, %v2535
    %v2548 = vsub.f32 %v177, %v2538
    %v2549 = vsub.f32 %v177, %v2540
    %2550 = vmin.xlane.f32.xlu0 %v2542
    %v2551 = vpop.xlane.xlu0 %2550
    %2552 = vmin.xlane.f32.xlu0 %v2543
    %v2553 = vpop.xlane.xlu0 %2552
    %2554 = vmin.xlane.f32.xlu0 %v2544
    %v2555 = vpop.xlane.xlu0 %2554
    %2556 = vmin.xlane.f32.xlu0 %v2545
    %v2557 = vpop.xlane.xlu0 %2556
    %2558 = vmin.xlane.f32.xlu0 %v2546
    %v2559 = vpop.xlane.xlu0 %2558
    %2560 = vmin.xlane.f32.xlu0 %v2547
    %v2561 = vpop.xlane.xlu0 %2560
    %2562 = vmin.xlane.f32.xlu0 %v2548
    %v2563 = vpop.xlane.xlu0 %2562
    %2564 = vmin.xlane.f32.xlu0 %v2549
    %v2565 = vpop.xlane.xlu0 %2564
    %vm2566 = vcmp.le.f32.partialorder %v2542, %v2551
    %vm2567 = vcmp.le.f32.partialorder %v2543, %v2553
    %vm2568 = vcmp.le.f32.partialorder %v2544, %v2555
    %vm2569 = vcmp.le.f32.partialorder %v2545, %v2557
    %vm2570 = vcmp.le.f32.partialorder %v2546, %v2559
    %vm2571 = vcmp.le.f32.partialorder %v2547, %v2561
    %vm2572 = vcmp.le.f32.partialorder %v2548, %v2563
    %vm2573 = vcmp.le.f32.partialorder %v2549, %v2565
    %v2574 = vsel %vm2566, %v82, 128
    %v2575 = vsel %vm2567, %v82, 128
    %v2576 = vsel %vm2568, %v82, 128
    %v2577 = vsel %vm2569, %v82, 128
    %v2578 = vsel %vm2570, %v82, 128
    %v2579 = vsel %vm2571, %v82, 128
    %v2580 = vsel %vm2572, %v82, 128
    %v2581 = vsel %vm2573, %v82, 128
    %v2582 = vand.u32 %v2574, 65535
    %v2583 = vshra.s32 %v2574, 16
    %v2584 = vcvt.s32.f32 %v2582
    %v2585 = vcvt.s32.f32 %v2583
    %2586 = vmin.xlane.f32.xlu0 %v2585
    %v2587 = vpop.xlane.xlu0 %2586
    %vm2588 = vcmp.eq.f32.partialorder %v2585, %v2587
    %v2589 = vsel %vm2588, %v2584, inf
    %2590 = vmin.xlane.f32.xlu0 %v2589
    %v2591 = vpop.xlane.xlu0 %2590
    %v2592 = vcvt.f32.s32 %v2591
    %v2593 = vcvt.f32.s32 %v2587
    %v2594 = vshll.u32 %v2593, 16
    %v2595 = vadd.s32 %v2594, %v2592
    %v2596 = vand.u32 %v2575, 65535
    %v2597 = vshra.s32 %v2575, 16
    %v2598 = vcvt.s32.f32 %v2596
    %v2599 = vcvt.s32.f32 %v2597
    %2600 = vmin.xlane.f32.xlu0 %v2599
    %v2601 = vpop.xlane.xlu0 %2600
    %vm2602 = vcmp.eq.f32.partialorder %v2599, %v2601
    %v2603 = vsel %vm2602, %v2598, inf
    %2604 = vmin.xlane.f32.xlu0 %v2603
    %v2605 = vpop.xlane.xlu0 %2604
    %v2606 = vcvt.f32.s32 %v2605
    %v2607 = vcvt.f32.s32 %v2601
    %v2608 = vshll.u32 %v2607, 16
    %v2609 = vadd.s32 %v2608, %v2606
    %v2610 = vand.u32 %v2576, 65535
    %v2611 = vshra.s32 %v2576, 16
    %v2612 = vcvt.s32.f32 %v2610
    %v2613 = vcvt.s32.f32 %v2611
    %2614 = vmin.xlane.f32.xlu0 %v2613
    %v2615 = vpop.xlane.xlu0 %2614
    %vm2616 = vcmp.eq.f32.partialorder %v2613, %v2615
    %v2617 = vsel %vm2616, %v2612, inf
    %2618 = vmin.xlane.f32.xlu0 %v2617
    %v2619 = vpop.xlane.xlu0 %2618
    %v2620 = vcvt.f32.s32 %v2619
    %v2621 = vcvt.f32.s32 %v2615
    %v2622 = vshll.u32 %v2621, 16
    %v2623 = vadd.s32 %v2622, %v2620
    %v2624 = vand.u32 %v2577, 65535
    %v2625 = vshra.s32 %v2577, 16
    %v2626 = vcvt.s32.f32 %v2624
    %v2627 = vcvt.s32.f32 %v2625
    %2628 = vmin.xlane.f32.xlu0 %v2627
    %v2629 = vpop.xlane.xlu0 %2628
    %vm2630 = vcmp.eq.f32.partialorder %v2627, %v2629
    %v2631 = vsel %vm2630, %v2626, inf
    %2632 = vmin.xlane.f32.xlu0 %v2631
    %v2633 = vpop.xlane.xlu0 %2632
    %v2634 = vcvt.f32.s32 %v2633
    %v2635 = vcvt.f32.s32 %v2629
    %v2636 = vshll.u32 %v2635, 16
    %v2637 = vadd.s32 %v2636, %v2634
    %v2638 = vand.u32 %v2578, 65535
    %v2639 = vshra.s32 %v2578, 16
    %v2640 = vcvt.s32.f32 %v2638
    %v2641 = vcvt.s32.f32 %v2639
    %2642 = vmin.xlane.f32.xlu0 %v2641
    %v2643 = vpop.xlane.xlu0 %2642
    %vm2644 = vcmp.eq.f32.partialorder %v2641, %v2643
    %v2645 = vsel %vm2644, %v2640, inf
    %2646 = vmin.xlane.f32.xlu0 %v2645
    %v2647 = vpop.xlane.xlu0 %2646
    %v2648 = vcvt.f32.s32 %v2647
    %v2649 = vcvt.f32.s32 %v2643
    %v2650 = vshll.u32 %v2649, 16
    %v2651 = vadd.s32 %v2650, %v2648
    %v2652 = vand.u32 %v2579, 65535
    %v2653 = vshra.s32 %v2579, 16
    %v2654 = vcvt.s32.f32 %v2652
    %v2655 = vcvt.s32.f32 %v2653
    %2656 = vmin.xlane.f32.xlu0 %v2655
    %v2657 = vpop.xlane.xlu0 %2656
    %vm2658 = vcmp.eq.f32.partialorder %v2655, %v2657
    %v2659 = vsel %vm2658, %v2654, inf
    %2660 = vmin.xlane.f32.xlu0 %v2659
    %v2661 = vpop.xlane.xlu0 %2660
    %v2662 = vcvt.f32.s32 %v2661
    %v2663 = vcvt.f32.s32 %v2657
    %v2664 = vshll.u32 %v2663, 16
    %v2665 = vadd.s32 %v2664, %v2662
    %v2666 = vand.u32 %v2580, 65535
    %v2667 = vshra.s32 %v2580, 16
    %v2668 = vcvt.s32.f32 %v2666
    %v2669 = vcvt.s32.f32 %v2667
    %2670 = vmin.xlane.f32.xlu0 %v2669
    %v2671 = vpop.xlane.xlu0 %2670
    %vm2672 = vcmp.eq.f32.partialorder %v2669, %v2671
    %v2673 = vsel %vm2672, %v2668, inf
    %2674 = vmin.xlane.f32.xlu0 %v2673
    %v2675 = vpop.xlane.xlu0 %2674
    %v2676 = vcvt.f32.s32 %v2675
    %v2677 = vcvt.f32.s32 %v2671
    %v2678 = vshll.u32 %v2677, 16
    %v2679 = vadd.s32 %v2678, %v2676
    %v2680 = vand.u32 %v2581, 65535
    %v2681 = vshra.s32 %v2581, 16
    %v2682 = vcvt.s32.f32 %v2680
    %v2683 = vcvt.s32.f32 %v2681
    %2684 = vmin.xlane.f32.xlu0 %v2683
    %v2685 = vpop.xlane.xlu0 %2684
    %vm2686 = vcmp.eq.f32.partialorder %v2683, %v2685
    %v2687 = vsel %vm2686, %v2682, inf
    %2688 = vmin.xlane.f32.xlu0 %v2687
    %v2689 = vpop.xlane.xlu0 %2688
    %v2690 = vcvt.f32.s32 %v2689
    %v2691 = vcvt.f32.s32 %v2685
    %v2692 = vshll.u32 %v2691, 16
    %v2693 = vadd.s32 %v2692, %v2690
    %vm2694 = vcmp.eq.s32.totalorder %v82, %v2595
    %vm2695 = vcmp.eq.s32.totalorder %v82, %v2609
    %vm2696 = vcmp.eq.s32.totalorder %v82, %v2623
    %vm2697 = vcmp.eq.s32.totalorder %v82, %v2637
    %vm2698 = vcmp.eq.s32.totalorder %v82, %v2651
    %vm2699 = vcmp.eq.s32.totalorder %v82, %v2665
    %vm2700 = vcmp.eq.s32.totalorder %v82, %v2679
    %vm2701 = vcmp.eq.s32.totalorder %v82, %v2693
    %v2702 = vsel %vm2694, 1, 0
    %v2703 = vsel %vm2695, 1, 0
    %v2704 = vsel %vm2696, 1, 0
    %v2705 = vsel %vm2697, 1, 0
    %v2706 = vsel %vm2698, 1, 0
    %v2707 = vsel %vm2699, 1, 0
    %v2708 = vsel %vm2700, 1, 0
    %v2709 = vsel %vm2701, 1, 0
    %v2710 = vcvt.s32.f32 %v2702
    %v2711 = vcvt.s32.f32 %v2703
    %v2712 = vcvt.s32.f32 %v2704
    %v2713 = vcvt.s32.f32 %v2705
    %v2714 = vcvt.s32.f32 %v2706
    %v2715 = vcvt.s32.f32 %v2707
    %v2716 = vcvt.s32.f32 %v2708
    %v2717 = vcvt.s32.f32 %v2709
    %v2718 = vld [vmem:[%s1346] sm:$0xff]
    %v2719 = vld [vmem:[%s1346 + $0x8] sm:$0xff]
    %v2720 = vld [vmem:[%s1346 + $0x10] sm:$0xff]
    %v2721 = vld [vmem:[%s1346 + $0x18] sm:$0xff]
    %v2722 = vld [vmem:[%s1346 + $0x20] sm:$0xff]
    %v2723 = vld [vmem:[%s1346 + $0x28] sm:$0xff]
    %v2724 = vld [vmem:[%s1346 + $0x30] sm:$0xff]
    %v2725 = vld [vmem:[%s1346 + $0x38] sm:$0xff]
    %v2726 = vld [vmem:[%s1346 + $0x40] sm:$0xff]
    %v2727 = vld [vmem:[%s1346 + $0x48] sm:$0xff]
    %v2728 = vld [vmem:[%s1346 + $0x50] sm:$0xff]
    %v2729 = vld [vmem:[%s1346 + $0x58] sm:$0xff]
    %v2730 = vld [vmem:[%s1346 + $0x60] sm:$0xff]
    %v2731 = vld [vmem:[%s1346 + $0x68] sm:$0xff]
    %v2732 = vld [vmem:[%s1346 + $0x70] sm:$0xff]
    %v2733 = vld [vmem:[%s1346 + $0x78] sm:$0xff]
    %2734 = vmatpush.msra.mxu0 %v2733
    %2735 = vmatpush.msra.mxu0 %v2732
    %2736 = vmatpush.msra.mxu0 %v2731
    %2737 = vmatpush.msra.mxu0 %v2730
    %2738 = vmatpush.msra.mxu0 %v2729
    %2739 = vmatpush.msra.mxu0 %v2728
    %2740 = vmatpush.msra.mxu0 %v2727
    %2741 = vmatpush.msra.mxu0 %v2726
    %2742 = vmatpush.msra.mxu0 %v2725
    %2743 = vmatpush.msra.mxu0 %v2724
    %2744 = vmatpush.msra.mxu0 %v2723
    %2745 = vmatpush.msra.mxu0 %v2722
    %2746 = vmatpush.msra.mxu0 %v2721
    %2747 = vmatpush.msra.mxu0 %v2720
    %2748 = vmatpush.msra.mxu0 %v2719
    %2749 = vmatpush.msra.mxu0 %v2718
    %2750 = vmatmul.f32.gmra.mxu0 %v2710
    %v2751 = vpop.f32.mrf.mxu0
    %v2752 = vadd.f32 0.0, %v2751
    %2753 = vmatmul.f32.gmra.mxu0 %v2711
    %v2754 = vpop.f32.mrf.mxu0
    %v2755 = vadd.f32 0.0, %v2754
    %2756 = vmatmul.f32.gmra.mxu0 %v2712
    %v2757 = vpop.f32.mrf.mxu0
    %v2758 = vadd.f32 0.0, %v2757
    %2759 = vmatmul.f32.gmra.mxu0 %v2713
    %v2760 = vpop.f32.mrf.mxu0
    %v2761 = vadd.f32 0.0, %v2760
    %2762 = vmatmul.f32.gmra.mxu0 %v2714
    %v2763 = vpop.f32.mrf.mxu0
    %v2764 = vadd.f32 0.0, %v2763
    %2765 = vmatmul.f32.gmra.mxu0 %v2715
    %v2766 = vpop.f32.mrf.mxu0
    %v2767 = vadd.f32 0.0, %v2766
    %2768 = vmatmul.f32.gmra.mxu0 %v2716
    %v2769 = vpop.f32.mrf.mxu0
    %v2770 = vadd.f32 0.0, %v2769
    %2771 = vmatmul.f32.gmra.mxu0 %v2717
    %v2772 = vpop.f32.mrf.mxu0
    %v2773 = vadd.f32 0.0, %v2772
    %2774 = vdwg.mxu0
    %v2775 = vadd.f32 %v2441, %v2752
    %v2776 = vadd.f32 %v2442, %v2755
    %v2777 = vadd.f32 %v2443, %v2758
    %v2778 = vadd.f32 %v2444, %v2761
    %v2779 = vadd.f32 %v2445, %v2764
    %v2780 = vadd.f32 %v2446, %v2767
    %v2781 = vadd.f32 %v2447, %v2770
    %v2782 = vadd.f32 %v2448, %v2773
    %v2783 = vsub.f32 %v2775, %v1451
    %v2784 = vsub.f32 %v2776, %v1452
    %v2785 = vsub.f32 %v2777, %v1453
    %v2786 = vsub.f32 %v2778, %v1454
    %v2787 = vsub.f32 %v2779, %v1455
    %v2788 = vsub.f32 %v2780, %v1456
    %v2789 = vsub.f32 %v2781, %v1457
    %v2790 = vsub.f32 %v2782, %v1458
    %v2791 = vmul.f32 %v2783, %v2783
    %v2792 = vmul.f32 %v2784, %v2784
    %v2793 = vmul.f32 %v2785, %v2785
    %v2794 = vmul.f32 %v2786, %v2786
    %v2795 = vmul.f32 %v2787, %v2787
    %v2796 = vmul.f32 %v2788, %v2788
    %v2797 = vmul.f32 %v2789, %v2789
    %v2798 = vmul.f32 %v2790, %v2790
    %v2799 = vadd.f32 %v2791, %v2792
    %v2800 = vadd.f32 %v2799, %v2793
    %v2801 = vadd.f32 %v2800, %v2794
    %v2802 = vadd.f32 %v2801, %v2795
    %v2803 = vadd.f32 %v2802, %v2796
    %v2804 = vadd.f32 %v2803, %v2797
    %v2805 = vadd.f32 %v2804, %v2798
    %v2806 = vrot.slane %v2805, 4
    %v2807 = vadd.f32 %v2805, %v2806
    %v2808 = vrot.slane %v2807, 2
    %v2809 = vadd.f32 %v2807, %v2808
    %v2810 = vrot.slane %v2809, 1
    %v2811 = vadd.f32 %v2809, %v2810
    %s2812 = scalar_lea.vmem [#allocation8], 64
    %2813 = vst [vmem:[%s2812] sm:$0xff] %v2775
    %2814 = vst [vmem:[%s2812 + $0x8] sm:$0xff] %v2776
    %2815 = vst [vmem:[%s2812 + $0x10] sm:$0xff] %v2777
    %2816 = vst [vmem:[%s2812 + $0x18] sm:$0xff] %v2778
    %2817 = vst [vmem:[%s2812 + $0x20] sm:$0xff] %v2779
    %2818 = vst [vmem:[%s2812 + $0x28] sm:$0xff] %v2780
    %2819 = vst [vmem:[%s2812 + $0x30] sm:$0xff] %v2781
    %2820 = vst [vmem:[%s2812 + $0x38] sm:$0xff] %v2782
    %v2821 = vadd.f32 %v1449, %v2811
    %2822 = vst [vmem:[#allocation9] sm:$0x1] %v2821
    // Predicated region
    $region30: #{tpu_custom_call.1} parent=1 // pred_check
      _
    $region31: #{tpu_custom_call.1} parent=1 // pred_check_branch
      %2824 = sbr.rel (0) target = $region33
    $region32: #{tpu_custom_call.1} parent=1 // pred_region
      %2826 = vsyncadd [#allocation4], 0
      %s2827 = sshll.u32 [#allocation8], 4
      %s2828 = int_to_ptr.vmem [resolvable:$true] %s2827
      %s2829 = sshll.u32 %s4, 4
      %s2830 = int_to_ptr.hbm [resolvable:$true] %s2829
      %2835 = dma.vmem_to_hbm [thread:$0]  %s2828, 2048, %s2830, [#allocation4], 128, 128, 8
    $region33: #{tpu_custom_call.1} parent=1 // pred_fallthru
      _
    // Predicated region
    $region34: #{tpu_custom_call.1} parent=1 // pred_check
      _
    $region35: #{tpu_custom_call.1} parent=1 // pred_check_branch
      %2837 = sbr.rel (0) target = $region37
    $region36: #{tpu_custom_call.1} parent=1 // pred_region
      %2839 = vsyncadd [#allocation10], 0
      %s2841 = sshll.u32 [#allocation9], 4
      %s2842 = int_to_ptr.vmem [resolvable:$true] %s2841
      %s2843 = sshll.u32 %s5, 4
      %s2844 = int_to_ptr.hbm [resolvable:$true] %s2843
      %2846 = dma.vmem_to_hbm [thread:$0]  %s2842, 16, %s2844, [#allocation10]
    $region37: #{tpu_custom_call.1} parent=1 // pred_fallthru
      _
    // Predicated region
    $region38: #{tpu_custom_call.1} parent=1 // pred_check
      _
    $region39: #{tpu_custom_call.1} parent=1 // pred_check_branch
      %2848 = sbr.rel (0) target = $region41
    $region40: #{tpu_custom_call.1} parent=1 // pred_region
      %2850 = dma.done [#allocation4], 2048
    $region41: #{tpu_custom_call.1} parent=1 // pred_fallthru
      _
    // Predicated region
    $region42: #{tpu_custom_call.1} parent=1 // pred_check
      _
    $region43: #{tpu_custom_call.1} parent=1 // pred_check_branch
      %2852 = sbr.rel (0) target = $region45
    $region44: #{tpu_custom_call.1} parent=1 // pred_region
      %2854 = dma.done [#allocation10], 16
    $region45: #{tpu_custom_call.1} parent=1 // pred_fallthru
      _
    %2855 = vsyncpa [#allocation3], 1
    %2856 = vsyncpa [#allocation6], 1
    %2857 = vsyncpa [#allocation4], 1
    %2858 = vsyncpa [#allocation10], 1

</llo_original>
